<compile_context>
chip_gen: v7x
topology: tpu7x:2x2x1
jax: 0.10.0
libtpu: 0.0.40
codegen_flags: <defaults>
</compile_context>

<pallas_src>
import functools
import math

import jax
import jax.numpy as jnp
from jax.experimental import pallas as pl
from jax.experimental.pallas import tpu as pltpu

VMEM = pltpu.MemorySpace.VMEM
BF16 = jnp.bfloat16


# --------------------------- in-kernel helpers -------------------------------

def _ln(x, g, b, eps=1e-5):
    # torch.nn.LayerNorm (eps=1e-5), per-row stats, f32 math.
    mean = jnp.mean(x, axis=-1, keepdims=True)
    var = jnp.mean((x - mean) ** 2, axis=-1, keepdims=True)
    return (x - mean) * jax.lax.rsqrt(var + eps) * g + b


def _gelu(y):
    # exact (erf) GELU, matching torch.nn.GELU default.
    # TODO(synk): switch to tanh approximation (EUP slot) if VALU-bound at real size.
    return 0.5 * y * (1.0 + jax.lax.erf(y * (1.0 / math.sqrt(2.0))))


def _sigmoid(y):
    # numerically stable sigmoid via tanh (EUP), avoids exp overflow concern
    return 0.5 * (jnp.tanh(0.5 * y) + 1.0)


# --------------------------- fused whole-network kernel ----------------------

def _vitnet_kernel(
    patches_ref,                 # (B*n_pad, patch_dim) f32, patch rows at base+1..base+NP, else 0
    pe_ln1_g, pe_ln1_b,          # (1, patch_dim) f32
    pe_w, pe_b,                  # (patch_dim, dim) bf16, (1, dim) f32
    pe_ln2_g, pe_ln2_b,          # (1, dim) f32
    cls_ref,                     # (1, dim) f32
    pos_ref,                     # (n_pad, dim) f32  (zero on pad rows; broadcast over B in-kernel)
    ln1_g, ln1_b,                # (depth, 1, dim) f32
    w_qkv,                       # (depth, dim, 3*inner) bf16   (bias-free, as in to_qkv)
    w_out, b_out,                # (depth, inner, dim) bf16, (depth, 1, dim) f32
    ln2_g, ln2_b,                # (depth, 1, dim) f32
    w1, b1,                      # (depth, dim, mlp) bf16, (depth, 1, mlp) f32
    w2, b2,                      # (depth, mlp, dim) bf16, (depth, 1, dim) f32
    fn_g, fn_b,                  # (1, dim) f32
    head_w, head_b,              # (dim, nc) bf16, (1, nc) f32
    out_ref,                     # (B, nc) f32
    *, B, n_tok, n_pad, heads, dim_head, depth,
):
    dim = pe_w.shape[1]
    inner = heads * dim_head
    G = B * heads
    scale = dim_head ** -0.5

    # ---- patch embedding: LayerNorm(patch_dim) -> Linear -> LayerNorm(dim)
    # Runs on all B*n_pad rows (cls/pad rows are zero-filled and overwritten below);
    # this avoids any VMEM scratch / per-batch scatter stores.
    xp = patches_ref[...]
    xp = _ln(xp, pe_ln1_g[...], pe_ln1_b[...])
    xp = jnp.dot(xp.astype(BF16), pe_w[...],
                 preferred_element_type=jnp.float32) + pe_b[...]
    xp = _ln(xp, pe_ln2_g[...], pe_ln2_b[...])             # (B*n_pad, dim)

    # ---- assemble [cls | patches | 0-pad] per batch purely in registers
    x3 = xp.reshape(B, n_pad, dim)
    tok = jax.lax.broadcasted_iota(jnp.int32, (1, n_pad, 1), 1)
    x3 = jnp.where(tok == 0, cls_ref[...][None, :, :],
                   jnp.where(tok < n_tok, x3, 0.0))
    # + positional embedding, broadcast over batch (emb_dropout = identity at eval)
    x3 = x3 + pos_ref[...][None, :, :]
    x = x3.reshape(B * n_pad, dim)                          # (R, dim), R = B*n_pad

    # key-padding mask (True = real token), shared by all layers / heads
    key_valid = jax.lax.broadcasted_iota(jnp.int32, (1, 1, n_pad), 2) < n_tok

    def heads_major(t):
        # (R, inner) -> (B*heads, n_pad, dim_head): single relayout per tensor,
        # so attention is ONE batched contraction instead of a per-head loop.
        t = t.reshape(B, n_pad, heads, dim_head)
        return jnp.swapaxes(t, 1, 2).reshape(G, n_pad, dim_head)

    # NOTE: depth=2 toy -> static unroll is fine.  At real size (dim=1024,
    # depth=8) move depth onto the pallas grid ("arbitrary") with per-layer
    # weight BlockSpecs (bf16, double-buffered), carry x in VMEM scratch, add a
    # 'parallel' row-tile axis for v7x's 2 TensorCores and set vmem_limit_bytes.
    for l in range(depth):
        # ---------- attention block: x = W_out(softmax(q kT) v) + x ----------
        xn = _ln(x, ln1_g[l], ln1_b[l])
        qkv = jnp.dot(xn.astype(BF16), w_qkv[l],
                      preferred_element_type=jnp.float32)   # (R, 3*inner), no bias

        q = heads_major(qkv[:, 0 * inner:1 * inner]) * scale   # fold scale into q
        k = heads_major(qkv[:, 1 * inner:2 * inner])
        v = heads_major(qkv[:, 2 * inner:3 * inner])

        s = jnp.einsum("gnd,gmd->gnm", q.astype(BF16), k.astype(BF16),
                       preferred_element_type=jnp.float32)  # (G, n_pad, n_pad)
        s = jnp.where(key_valid, s, -1e30)                  # mask padded keys
        s = s - jnp.max(s, axis=-1, keepdims=True)
        p = jnp.exp(s)
        p = p * pl.reciprocal(jnp.sum(p, axis=-1, keepdims=True), approx=True)
        o = jnp.einsum("gnm,gmd->gnd", p.astype(BF16), v.astype(BF16),
                       preferred_element_type=jnp.float32)  # (G, n_pad, dim_head)

        # back to (B*n_pad, inner) with the einops 'b h n d -> b n (h d)' layout
        o = jnp.swapaxes(o.reshape(B, heads, n_pad, dim_head), 1, 2)
        o = o.reshape(B * n_pad, inner)
        o = jnp.dot(o.astype(BF16), w_out[l],
                    preferred_element_type=jnp.float32) + b_out[l]
        x = x + o                                           # residual fused in-kernel

        # ---------- feedforward block: x = W2(gelu(W1 LN(x))) + x ----------
        xn = _ln(x, ln2_g[l], ln2_b[l])
        hid = jnp.dot(xn.astype(BF16), w1[l],
                      preferred_element_type=jnp.float32) + b1[l]
        hid = _gelu(hid)
        hid = jnp.dot(hid.astype(BF16), w2[l],
                      preferred_element_type=jnp.float32) + b2[l]
        x = x + hid

    # ---- cls rows only: final LayerNorm -> head -> sigmoid*312, one dense store
    cls_rows = x.reshape(B, n_pad, dim)[:, 0, :]            # (B, dim) strided gather
    cls_rows = _ln(cls_rows, fn_g[...], fn_b[...])
    logits = jnp.dot(cls_rows.astype(BF16), head_w[...],
                     preferred_element_type=jnp.float32) + head_b[...]
    out_ref[...] = (_sigmoid(logits) * 312.0).astype(out_ref.dtype)


# --------------------------- parameters -------------------------------------

def init_params(key, cfg):
    dim, heads, dh, depth = cfg["dim"], cfg["heads"], cfg["dim_head"], cfg["depth"]
    inner = heads * dh
    patch_dim = cfg["ch"] * cfg["patch"] ** 2
    num_patches = (cfg["img"] // cfg["patch"]) ** 2
    mlp, nc = cfg["mlp_dim"], cfg["num_classes"]

    keys = iter(jax.random.split(key, 16))

    def w(shape, s=0.02):
        return s * jax.random.normal(next(keys), shape, jnp.float32)

    return dict(
        # to_patch_embedding: LayerNorm(patch_dim) -> Linear(patch_dim, dim) -> LayerNorm(dim)
        pe_ln1_g=jnp.ones((1, patch_dim), jnp.float32),
        pe_ln1_b=jnp.zeros((1, patch_dim), jnp.float32),
        pe_w=w((patch_dim, dim)),
        pe_b=jnp.zeros((1, dim), jnp.float32),
        pe_ln2_g=jnp.ones((1, dim), jnp.float32),
        pe_ln2_b=jnp.zeros((1, dim), jnp.float32),
        cls=w((1, dim)),
        pos=w((num_patches + 1, dim)),
        # transformer layers, stacked along a leading depth axis
        ln1_g=jnp.ones((depth, 1, dim), jnp.float32),
        ln1_b=jnp.zeros((depth, 1, dim), jnp.float32),
        w_qkv=w((depth, dim, 3 * inner)),                  # to_qkv (bias=False)
        w_out=w((depth, inner, dim)),
        b_out=jnp.zeros((depth, 1, dim), jnp.float32),
        ln2_g=jnp.ones((depth, 1, dim), jnp.float32),
        ln2_b=jnp.zeros((depth, 1, dim), jnp.float32),
        w1=w((depth, dim, mlp)),
        b1=jnp.zeros((depth, 1, mlp), jnp.float32),
        w2=w((depth, mlp, dim)),
        b2=jnp.zeros((depth, 1, dim), jnp.float32),
        # final LayerNorm + mlp_head Linear(dim, num_classes)
        fn_g=jnp.ones((1, dim), jnp.float32),
        fn_b=jnp.zeros((1, dim), jnp.float32),
        head_w=w((dim, nc)),
        head_b=jnp.zeros((1, nc), jnp.float32),
    )


# --------------------------- forward -----------------------------------------

def vitnet_forward(x_nchw, params, *, cfg):
    B, C, H, W = x_nchw.shape
    p = cfg["patch"]
    hh, ww = H // p, W // p
    num_patches = hh * ww
    patch_dim = C * p * p
    n_tok = num_patches + 1
    n_pad = ((n_tok + 7) // 8) * 8                          # sublane-align the sequence

    # patchify glue (host): 'b c (h p1) (w p2) -> b (h w) (p1 p2 c)', then pre-lay
    # rows so each batch's patch tokens already sit at [base+1, base+1+NP); the
    # cls / pad rows stay zero and are filled in-register inside the kernel.
    patches = x_nchw.reshape(B, C, hh, p, ww, p).transpose(0, 2, 4, 3, 5, 1)
    patches = patches.reshape(B, num_patches, patch_dim)
    padded = jnp.zeros((B, n_pad, patch_dim), jnp.float32)
    padded = padded.at[:, 1:1 + num_patches, :].set(patches)
    padded = padded.reshape(B * n_pad, patch_dim)

    # positional embedding: zero-pad to n_pad tokens; broadcast over B in-kernel
    pos = jnp.pad(params["pos"], ((0, n_pad - n_tok), (0, 0)))

    def bf16(name):
        return params[name].astype(BF16)                    # MXU operands in bf16

    args = (
        padded,
        params["pe_ln1_g"], params["pe_ln1_b"], bf16("pe_w"), params["pe_b"],
        params["pe_ln2_g"], params["pe_ln2_b"],
        params["cls"], pos,
        params["ln1_g"], params["ln1_b"], bf16("w_qkv"),
        bf16("w_out"), params["b_out"],
        params["ln2_g"], params["ln2_b"],
        bf16("w1"), params["b1"], bf16("w2"), params["b2"],
        params["fn_g"], params["fn_b"], bf16("head_w"), params["head_b"],
    )
    kernel = functools.partial(
        _vitnet_kernel,
        B=B, n_tok=n_tok, n_pad=n_pad,
        heads=cfg["heads"], dim_head=cfg["dim_head"], depth=cfg["depth"],
    )
    return pl.pallas_call(
        kernel,
        out_shape=jax.ShapeDtypeStruct((B, cfg["num_classes"]), jnp.float32),
        in_specs=[pl.BlockSpec(memory_space=VMEM)] * len(args),
        out_specs=pl.BlockSpec(memory_space=VMEM),
    )(*args)


# --------------------------- main --------------------------------------------

if __name__ == "__main__":
    # Scaled-down but structurally identical to
    # ViT(image_size=64, patch_size=8, dim=1024, depth=8, heads=8, mlp_dim=2048,
    #     num_classes=5000); dims chosen lane-dense (multiples of 128).
    # NOTE: at B=2 every matmul has only B*n_pad=16 rows; batch >=16 images per
    # call (M >= 128) to fill the MXU row dimension in production.
    cfg = dict(img=16, patch=8, ch=4, dim=128, depth=2, heads=2, dim_head=64,
               mlp_dim=256, num_classes=128)

    key = jax.random.PRNGKey(0)
    kp, kx = jax.random.split(key)
    params = init_params(kp, cfg)
    x = jax.random.normal(kx, (2, cfg["ch"], cfg["img"], cfg["img"]), jnp.float32)

    fwd = jax.jit(functools.partial(vitnet_forward, cfg=cfg))
    out = jax.block_until_ready(fwd(x, params))

    assert out.shape == (2, cfg["num_classes"]), out.shape
    assert bool(jnp.all(jnp.isfinite(out)))
    assert bool(jnp.all(out >= 0.0)) and bool(jnp.all(out <= 312.0))
    print("KERNEL_OK")
</pallas_src>

<mosaic_0001>
module attributes {stable_mosaic.version = 11 : i64} {
  func.func @_vitnet_kernel(%arg0: memref<16x256xf32, #tpu.memory_space<vmem>>, %arg1: memref<1x256xf32, #tpu.memory_space<vmem>>, %arg2: memref<1x256xf32, #tpu.memory_space<vmem>>, %arg3: memref<256x128xbf16, #tpu.memory_space<vmem>>, %arg4: memref<1x128xf32, #tpu.memory_space<vmem>>, %arg5: memref<1x128xf32, #tpu.memory_space<vmem>>, %arg6: memref<1x128xf32, #tpu.memory_space<vmem>>, %arg7: memref<1x128xf32, #tpu.memory_space<vmem>>, %arg8: memref<8x128xf32, #tpu.memory_space<vmem>>, %arg9: memref<2x1x128xf32, #tpu.memory_space<vmem>>, %arg10: memref<2x1x128xf32, #tpu.memory_space<vmem>>, %arg11: memref<2x128x384xbf16, #tpu.memory_space<vmem>>, %arg12: memref<2x128x128xbf16, #tpu.memory_space<vmem>>, %arg13: memref<2x1x128xf32, #tpu.memory_space<vmem>>, %arg14: memref<2x1x128xf32, #tpu.memory_space<vmem>>, %arg15: memref<2x1x128xf32, #tpu.memory_space<vmem>>, %arg16: memref<2x128x256xbf16, #tpu.memory_space<vmem>>, %arg17: memref<2x1x256xf32, #tpu.memory_space<vmem>>, %arg18: memref<2x256x128xbf16, #tpu.memory_space<vmem>>, %arg19: memref<2x1x128xf32, #tpu.memory_space<vmem>>, %arg20: memref<1x128xf32, #tpu.memory_space<vmem>>, %arg21: memref<1x128xf32, #tpu.memory_space<vmem>>, %arg22: memref<128x128xbf16, #tpu.memory_space<vmem>>, %arg23: memref<1x128xf32, #tpu.memory_space<vmem>>, %arg24: memref<2x128xf32, #tpu.memory_space<vmem>>) attributes {dimension_semantics = [], scalar_prefetch = 0 : i64, scratch_operands = 0 : i64, tpu.core_type = #tpu.core_type<tc>} {
    %c0 = arith.constant 0 : index
    %c0_0 = arith.constant 0 : index
    %0 = vector.load %arg0[%c0, %c0_0] : memref<16x256xf32, #tpu.memory_space<vmem>>, vector<16x256xf32>
    %c0_1 = arith.constant 0 : index
    %c0_2 = arith.constant 0 : index
    %1 = vector.load %arg1[%c0_1, %c0_2] : memref<1x256xf32, #tpu.memory_space<vmem>>, vector<1x256xf32>
    %c0_3 = arith.constant 0 : index
    %c0_4 = arith.constant 0 : index
    %2 = vector.load %arg2[%c0_3, %c0_4] : memref<1x256xf32, #tpu.memory_space<vmem>>, vector<1x256xf32>
    %cst = arith.constant dense<0.000000e+00> : vector<16xf32>
    %3 = vector.multi_reduction <add>, %0, %cst [1] : vector<16x256xf32> to vector<16xf32>
    %4 = vector.shape_cast %3 : vector<16xf32> to vector<16x1xf32>
    %cst_5 = arith.constant 2.560000e+02 : f32
    %5 = vector.broadcast %cst_5 : f32 to vector<16x1xf32>
    %6 = arith.divf %4, %5 : vector<16x1xf32>
    %7 = vector.broadcast %6 : vector<16x1xf32> to vector<16x256xf32>
    %8 = arith.subf %0, %7 : vector<16x256xf32>
    %9 = arith.mulf %8, %8 : vector<16x256xf32>
    %cst_6 = arith.constant dense<0.000000e+00> : vector<16xf32>
    %10 = vector.multi_reduction <add>, %9, %cst_6 [1] : vector<16x256xf32> to vector<16xf32>
    %11 = vector.shape_cast %10 : vector<16xf32> to vector<16x1xf32>
    %cst_7 = arith.constant 2.560000e+02 : f32
    %12 = vector.broadcast %cst_7 : f32 to vector<16x1xf32>
    %13 = arith.divf %11, %12 : vector<16x1xf32>
    %14 = vector.broadcast %6 : vector<16x1xf32> to vector<16x256xf32>
    %15 = arith.subf %0, %14 : vector<16x256xf32>
    %cst_8 = arith.constant 9.99999974E-6 : f32
    %16 = vector.broadcast %cst_8 : f32 to vector<16x1xf32>
    %17 = arith.addf %13, %16 : vector<16x1xf32>
    %18 = math.rsqrt %17 : vector<16x1xf32>
    %19 = vector.broadcast %18 : vector<16x1xf32> to vector<16x256xf32>
    %20 = arith.mulf %15, %19 : vector<16x256xf32>
    %21 = vector.broadcast %1 : vector<1x256xf32> to vector<16x256xf32>
    %22 = arith.mulf %20, %21 : vector<16x256xf32>
    %23 = vector.broadcast %2 : vector<1x256xf32> to vector<16x256xf32>
    %24 = arith.addf %22, %23 : vector<16x256xf32>
    %25 = arith.truncf %24 : vector<16x256xf32> to vector<16x256xbf16>
    %c0_9 = arith.constant 0 : index
    %c0_10 = arith.constant 0 : index
    %26 = vector.load %arg3[%c0_9, %c0_10] : memref<256x128xbf16, #tpu.memory_space<vmem>>, vector<256x128xbf16>
    %cst_11 = arith.constant dense<0.000000e+00> : vector<16x128xf32>
    %27 = tpu.matmul %25, %26, %cst_11 {dimension_numbers = #tpu.dot_dimension_numbers<[1], [0], [0], [1], [0, 0, 1, 1], [], []>} : vector<16x256xbf16>, vector<256x128xbf16>, vector<16x128xf32> -> vector<16x128xf32>
    %c0_12 = arith.constant 0 : index
    %c0_13 = arith.constant 0 : index
    %28 = vector.load %arg4[%c0_12, %c0_13] : memref<1x128xf32, #tpu.memory_space<vmem>>, vector<1x128xf32>
    %29 = vector.broadcast %28 : vector<1x128xf32> to vector<16x128xf32>
    %30 = arith.addf %27, %29 : vector<16x128xf32>
    %c0_14 = arith.constant 0 : index
    %c0_15 = arith.constant 0 : index
    %31 = vector.load %arg5[%c0_14, %c0_15] : memref<1x128xf32, #tpu.memory_space<vmem>>, vector<1x128xf32>
    %c0_16 = arith.constant 0 : index
    %c0_17 = arith.constant 0 : index
    %32 = vector.load %arg6[%c0_16, %c0_17] : memref<1x128xf32, #tpu.memory_space<vmem>>, vector<1x128xf32>
    %cst_18 = arith.constant dense<0.000000e+00> : vector<16xf32>
    %33 = vector.multi_reduction <add>, %30, %cst_18 [1] : vector<16x128xf32> to vector<16xf32>
    %34 = vector.shape_cast %33 : vector<16xf32> to vector<16x1xf32>
    %cst_19 = arith.constant 1.280000e+02 : f32
    %35 = vector.broadcast %cst_19 : f32 to vector<16x1xf32>
    %36 = arith.divf %34, %35 : vector<16x1xf32>
    %37 = vector.broadcast %36 : vector<16x1xf32> to vector<16x128xf32>
    %38 = arith.subf %30, %37 : vector<16x128xf32>
    %39 = arith.mulf %38, %38 : vector<16x128xf32>
    %cst_20 = arith.constant dense<0.000000e+00> : vector<16xf32>
    %40 = vector.multi_reduction <add>, %39, %cst_20 [1] : vector<16x128xf32> to vector<16xf32>
    %41 = vector.shape_cast %40 : vector<16xf32> to vector<16x1xf32>
    %cst_21 = arith.constant 1.280000e+02 : f32
    %42 = vector.broadcast %cst_21 : f32 to vector<16x1xf32>
    %43 = arith.divf %41, %42 : vector<16x1xf32>
    %44 = vector.broadcast %36 : vector<16x1xf32> to vector<16x128xf32>
    %45 = arith.subf %30, %44 : vector<16x128xf32>
    %cst_22 = arith.constant 9.99999974E-6 : f32
    %46 = vector.broadcast %cst_22 : f32 to vector<16x1xf32>
    %47 = arith.addf %43, %46 : vector<16x1xf32>
    %48 = math.rsqrt %47 : vector<16x1xf32>
    %49 = vector.broadcast %48 : vector<16x1xf32> to vector<16x128xf32>
    %50 = arith.mulf %45, %49 : vector<16x128xf32>
    %51 = vector.broadcast %31 : vector<1x128xf32> to vector<16x128xf32>
    %52 = arith.mulf %50, %51 : vector<16x128xf32>
    %53 = vector.broadcast %32 : vector<1x128xf32> to vector<16x128xf32>
    %54 = arith.addf %52, %53 : vector<16x128xf32>
    %55 = vector.shape_cast %54 : vector<16x128xf32> to vector<2x8x128xf32>
    %56 = tpu.iota {dimensions = array<i32: 1>} : vector<1x8x1xi32>
    %c0_i32 = arith.constant 0 : i32
    %57 = vector.broadcast %c0_i32 : i32 to vector<1x8x1xi32>
    %58 = arith.cmpi eq, %56, %57 : vector<1x8x1xi32>
    %c0_23 = arith.constant 0 : index
    %c0_24 = arith.constant 0 : index
    %59 = vector.load %arg7[%c0_23, %c0_24] : memref<1x128xf32, #tpu.memory_space<vmem>>, vector<1x128xf32>
    %60 = vector.shape_cast %59 : vector<1x128xf32> to vector<1x1x128xf32>
    %c5_i32 = arith.constant 5 : i32
    %61 = vector.broadcast %c5_i32 : i32 to vector<1x8x1xi32>
    %62 = arith.cmpi slt, %56, %61 : vector<1x8x1xi32>
    %cst_25 = arith.constant 0.000000e+00 : f32
    %63 = vector.shape_cast %62 : vector<1x8x1xi1> to vector<1x8x1xi1>
    %64 = vector.broadcast %63 : vector<1x8x1xi1> to vector<2x8x128xi1>
    %65 = vector.broadcast %cst_25 : f32 to vector<2x8x128xf32>
    %66 = arith.select %64, %55, %65 : vector<2x8x128xi1>, vector<2x8x128xf32>
    %67 = vector.shape_cast %58 : vector<1x8x1xi1> to vector<1x8x1xi1>
    %68 = vector.broadcast %67 : vector<1x8x1xi1> to vector<2x8x128xi1>
    %69 = vector.shape_cast %60 : vector<1x1x128xf32> to vector<1x1x128xf32>
    %70 = vector.broadcast %69 : vector<1x1x128xf32> to vector<2x8x128xf32>
    %71 = arith.select %68, %70, %66 : vector<2x8x128xi1>, vector<2x8x128xf32>
    %c0_26 = arith.constant 0 : index
    %c0_27 = arith.constant 0 : index
    %72 = vector.load %arg8[%c0_26, %c0_27] : memref<8x128xf32, #tpu.memory_space<vmem>>, vector<8x128xf32>
    %73 = vector.shape_cast %72 : vector<8x128xf32> to vector<1x8x128xf32>
    %74 = vector.broadcast %73 : vector<1x8x128xf32> to vector<2x8x128xf32>
    %75 = arith.addf %71, %74 : vector<2x8x128xf32>
    %76 = vector.shape_cast %75 : vector<2x8x128xf32> to vector<16x128xf32>
    %77 = tpu.iota {dimensions = array<i32: 2>} : vector<1x1x8xi32>
    %c5_i32_28 = arith.constant 5 : i32
    %78 = vector.broadcast %c5_i32_28 : i32 to vector<1x1x8xi32>
    %79 = arith.cmpi slt, %77, %78 : vector<1x1x8xi32>
    %c0_29 = arith.constant 0 : index
    %c0_30 = arith.constant 0 : index
    %c0_31 = arith.constant 0 : index
    %80 = vector.load %arg9[%c0_29, %c0_30, %c0_31] : memref<2x1x128xf32, #tpu.memory_space<vmem>>, vector<1x1x128xf32>
    %81 = vector.shape_cast %80 : vector<1x1x128xf32> to vector<1x128xf32>
    %c0_32 = arith.constant 0 : index
    %c0_33 = arith.constant 0 : index
    %c0_34 = arith.constant 0 : index
    %82 = vector.load %arg10[%c0_32, %c0_33, %c0_34] : memref<2x1x128xf32, #tpu.memory_space<vmem>>, vector<1x1x128xf32>
    %83 = vector.shape_cast %82 : vector<1x1x128xf32> to vector<1x128xf32>
    %cst_35 = arith.constant dense<0.000000e+00> : vector<16xf32>
    %84 = vector.multi_reduction <add>, %76, %cst_35 [1] : vector<16x128xf32> to vector<16xf32>
    %85 = vector.shape_cast %84 : vector<16xf32> to vector<16x1xf32>
    %cst_36 = arith.constant 1.280000e+02 : f32
    %86 = vector.broadcast %cst_36 : f32 to vector<16x1xf32>
    %87 = arith.divf %85, %86 : vector<16x1xf32>
    %88 = vector.broadcast %87 : vector<16x1xf32> to vector<16x128xf32>
    %89 = arith.subf %76, %88 : vector<16x128xf32>
    %90 = arith.mulf %89, %89 : vector<16x128xf32>
    %cst_37 = arith.constant dense<0.000000e+00> : vector<16xf32>
    %91 = vector.multi_reduction <add>, %90, %cst_37 [1] : vector<16x128xf32> to vector<16xf32>
    %92 = vector.shape_cast %91 : vector<16xf32> to vector<16x1xf32>
    %cst_38 = arith.constant 1.280000e+02 : f32
    %93 = vector.broadcast %cst_38 : f32 to vector<16x1xf32>
    %94 = arith.divf %92, %93 : vector<16x1xf32>
    %95 = vector.broadcast %87 : vector<16x1xf32> to vector<16x128xf32>
    %96 = arith.subf %76, %95 : vector<16x128xf32>
    %cst_39 = arith.constant 9.99999974E-6 : f32
    %97 = vector.broadcast %cst_39 : f32 to vector<16x1xf32>
    %98 = arith.addf %94, %97 : vector<16x1xf32>
    %99 = math.rsqrt %98 : vector<16x1xf32>
    %100 = vector.broadcast %99 : vector<16x1xf32> to vector<16x128xf32>
    %101 = arith.mulf %96, %100 : vector<16x128xf32>
    %102 = vector.broadcast %81 : vector<1x128xf32> to vector<16x128xf32>
    %103 = arith.mulf %101, %102 : vector<16x128xf32>
    %104 = vector.broadcast %83 : vector<1x128xf32> to vector<16x128xf32>
    %105 = arith.addf %103, %104 : vector<16x128xf32>
    %106 = arith.truncf %105 : vector<16x128xf32> to vector<16x128xbf16>
    %c0_40 = arith.constant 0 : index
    %c0_41 = arith.constant 0 : index
    %c0_42 = arith.constant 0 : index
    %107 = vector.load %arg11[%c0_40, %c0_41, %c0_42] : memref<2x128x384xbf16, #tpu.memory_space<vmem>>, vector<1x128x384xbf16>
    %108 = vector.shape_cast %107 : vector<1x128x384xbf16> to vector<128x384xbf16>
    %cst_43 = arith.constant dense<0.000000e+00> : vector<16x384xf32>
    %109 = tpu.matmul %106, %108, %cst_43 {dimension_numbers = #tpu.dot_dimension_numbers<[1], [0], [0], [1], [0, 0, 1, 1], [], []>} : vector<16x128xbf16>, vector<128x384xbf16>, vector<16x384xf32> -> vector<16x384xf32>
    %110 = vector.extract_strided_slice %109 {offsets = [0, 0], sizes = [16, 128], strides = [1, 1]} : vector<16x384xf32> to vector<16x128xf32>
    %111 = vector.shape_cast %110 : vector<16x128xf32> to vector<2x8x2x64xf32>
    %112 = tpu.transpose %111, [0, 2, 1, 3] : vector<2x8x2x64xf32> -> vector<2x2x8x64xf32>
    %113 = vector.shape_cast %112 : vector<2x2x8x64xf32> to vector<4x8x64xf32>
    %cst_44 = arith.constant 1.250000e-01 : f32
    %114 = vector.broadcast %cst_44 : f32 to vector<4x8x64xf32>
    %115 = arith.mulf %113, %114 : vector<4x8x64xf32>
    %116 = vector.extract_strided_slice %109 {offsets = [0, 128], sizes = [16, 128], strides = [1, 1]} : vector<16x384xf32> to vector<16x128xf32>
    %117 = vector.shape_cast %116 : vector<16x128xf32> to vector<2x8x2x64xf32>
    %118 = tpu.transpose %117, [0, 2, 1, 3] : vector<2x8x2x64xf32> -> vector<2x2x8x64xf32>
    %119 = vector.shape_cast %118 : vector<2x2x8x64xf32> to vector<4x8x64xf32>
    %120 = vector.extract_strided_slice %109 {offsets = [0, 256], sizes = [16, 128], strides = [1, 1]} : vector<16x384xf32> to vector<16x128xf32>
    %121 = vector.shape_cast %120 : vector<16x128xf32> to vector<2x8x2x64xf32>
    %122 = tpu.transpose %121, [0, 2, 1, 3] : vector<2x8x2x64xf32> -> vector<2x2x8x64xf32>
    %123 = vector.shape_cast %122 : vector<2x2x8x64xf32> to vector<4x8x64xf32>
    %124 = arith.truncf %115 : vector<4x8x64xf32> to vector<4x8x64xbf16>
    %125 = arith.truncf %119 : vector<4x8x64xf32> to vector<4x8x64xbf16>
    "tpu.trace_start"() <{level = 10 : i32, message = "gnd,gmd->gnm"}> : () -> ()
    %cst_45 = arith.constant dense<0.000000e+00> : vector<4x8x8xf32>
    %126 = tpu.matmul %124, %125, %cst_45 {dimension_numbers = #tpu.dot_dimension_numbers<[2], [2], [1], [1], [0, 0, 0, 1, 1, 1], [0], [0]>} : vector<4x8x64xbf16>, vector<4x8x64xbf16>, vector<4x8x8xf32> -> vector<4x8x8xf32>
    %cst_46 = arith.constant -1.000000e+30 : f32
    "tpu.trace_stop"() : () -> ()
    %127 = vector.shape_cast %79 : vector<1x1x8xi1> to vector<1x1x8xi1>
    %128 = vector.broadcast %127 : vector<1x1x8xi1> to vector<4x8x8xi1>
    %129 = vector.broadcast %cst_46 : f32 to vector<4x8x8xf32>
    %130 = arith.select %128, %126, %129 : vector<4x8x8xi1>, vector<4x8x8xf32>
    %cst_47 = arith.constant dense<0xFF800000> : vector<4x8xf32>
    %131 = vector.multi_reduction <maximumf>, %130, %cst_47 [2] : vector<4x8x8xf32> to vector<4x8xf32>
    %132 = vector.shape_cast %131 : vector<4x8xf32> to vector<4x8x1xf32>
    %133 = vector.broadcast %132 : vector<4x8x1xf32> to vector<4x8x8xf32>
    %134 = arith.subf %130, %133 : vector<4x8x8xf32>
    %135 = math.exp %134 : vector<4x8x8xf32>
    %cst_48 = arith.constant dense<0.000000e+00> : vector<4x8xf32>
    %136 = vector.multi_reduction <add>, %135, %cst_48 [2] : vector<4x8x8xf32> to vector<4x8xf32>
    %137 = vector.shape_cast %136 : vector<4x8xf32> to vector<4x8x1xf32>
    %138 = tpu.reciprocal %137 {approx = true} : vector<4x8x1xf32> -> vector<4x8x1xf32>
    %139 = vector.broadcast %138 : vector<4x8x1xf32> to vector<4x8x8xf32>
    %140 = arith.mulf %135, %139 : vector<4x8x8xf32>
    %141 = arith.truncf %140 : vector<4x8x8xf32> to vector<4x8x8xbf16>
    %142 = arith.truncf %123 : vector<4x8x64xf32> to vector<4x8x64xbf16>
    "tpu.trace_start"() <{level = 10 : i32, message = "gnm,gmd->gnd"}> : () -> ()
    %cst_49 = arith.constant dense<0.000000e+00> : vector<4x8x64xf32>
    %143 = tpu.matmul %141, %142, %cst_49 {dimension_numbers = #tpu.dot_dimension_numbers<[2], [1], [1], [2], [0, 0, 0, 1, 1, 2], [0], [0]>} : vector<4x8x8xbf16>, vector<4x8x64xbf16>, vector<4x8x64xf32> -> vector<4x8x64xf32>
    "tpu.trace_stop"() : () -> ()
    %144 = vector.shape_cast %143 : vector<4x8x64xf32> to vector<2x2x8x64xf32>
    %145 = tpu.transpose %144, [0, 2, 1, 3] : vector<2x2x8x64xf32> -> vector<2x8x2x64xf32>
    %146 = vector.shape_cast %145 : vector<2x8x2x64xf32> to vector<16x128xf32>
    %147 = arith.truncf %146 : vector<16x128xf32> to vector<16x128xbf16>
    %c0_50 = arith.constant 0 : index
    %c0_51 = arith.constant 0 : index
    %c0_52 = arith.constant 0 : index
    %148 = vector.load %arg12[%c0_50, %c0_51, %c0_52] : memref<2x128x128xbf16, #tpu.memory_space<vmem>>, vector<1x128x128xbf16>
    %149 = vector.shape_cast %148 : vector<1x128x128xbf16> to vector<128x128xbf16>
    %cst_53 = arith.constant dense<0.000000e+00> : vector<16x128xf32>
    %150 = tpu.matmul %147, %149, %cst_53 {dimension_numbers = #tpu.dot_dimension_numbers<[1], [0], [0], [1], [0, 0, 1, 1], [], []>} : vector<16x128xbf16>, vector<128x128xbf16>, vector<16x128xf32> -> vector<16x128xf32>
    %c0_54 = arith.constant 0 : index
    %c0_55 = arith.constant 0 : index
    %c0_56 = arith.constant 0 : index
    %151 = vector.load %arg13[%c0_54, %c0_55, %c0_56] : memref<2x1x128xf32, #tpu.memory_space<vmem>>, vector<1x1x128xf32>
    %152 = vector.shape_cast %151 : vector<1x1x128xf32> to vector<1x128xf32>
    %153 = vector.broadcast %152 : vector<1x128xf32> to vector<16x128xf32>
    %154 = arith.addf %150, %153 : vector<16x128xf32>
    %155 = arith.addf %76, %154 : vector<16x128xf32>
    %c0_57 = arith.constant 0 : index
    %c0_58 = arith.constant 0 : index
    %c0_59 = arith.constant 0 : index
    %156 = vector.load %arg14[%c0_57, %c0_58, %c0_59] : memref<2x1x128xf32, #tpu.memory_space<vmem>>, vector<1x1x128xf32>
    %157 = vector.shape_cast %156 : vector<1x1x128xf32> to vector<1x128xf32>
    %c0_60 = arith.constant 0 : index
    %c0_61 = arith.constant 0 : index
    %c0_62 = arith.constant 0 : index
    %158 = vector.load %arg15[%c0_60, %c0_61, %c0_62] : memref<2x1x128xf32, #tpu.memory_space<vmem>>, vector<1x1x128xf32>
    %159 = vector.shape_cast %158 : vector<1x1x128xf32> to vector<1x128xf32>
    %cst_63 = arith.constant dense<0.000000e+00> : vector<16xf32>
    %160 = vector.multi_reduction <add>, %155, %cst_63 [1] : vector<16x128xf32> to vector<16xf32>
    %161 = vector.shape_cast %160 : vector<16xf32> to vector<16x1xf32>
    %cst_64 = arith.constant 1.280000e+02 : f32
    %162 = vector.broadcast %cst_64 : f32 to vector<16x1xf32>
    %163 = arith.divf %161, %162 : vector<16x1xf32>
    %164 = vector.broadcast %163 : vector<16x1xf32> to vector<16x128xf32>
    %165 = arith.subf %155, %164 : vector<16x128xf32>
    %166 = arith.mulf %165, %165 : vector<16x128xf32>
    %cst_65 = arith.constant dense<0.000000e+00> : vector<16xf32>
    %167 = vector.multi_reduction <add>, %166, %cst_65 [1] : vector<16x128xf32> to vector<16xf32>
    %168 = vector.shape_cast %167 : vector<16xf32> to vector<16x1xf32>
    %cst_66 = arith.constant 1.280000e+02 : f32
    %169 = vector.broadcast %cst_66 : f32 to vector<16x1xf32>
    %170 = arith.divf %168, %169 : vector<16x1xf32>
    %171 = vector.broadcast %163 : vector<16x1xf32> to vector<16x128xf32>
    %172 = arith.subf %155, %171 : vector<16x128xf32>
    %cst_67 = arith.constant 9.99999974E-6 : f32
    %173 = vector.broadcast %cst_67 : f32 to vector<16x1xf32>
    %174 = arith.addf %170, %173 : vector<16x1xf32>
    %175 = math.rsqrt %174 : vector<16x1xf32>
    %176 = vector.broadcast %175 : vector<16x1xf32> to vector<16x128xf32>
    %177 = arith.mulf %172, %176 : vector<16x128xf32>
    %178 = vector.broadcast %157 : vector<1x128xf32> to vector<16x128xf32>
    %179 = arith.mulf %177, %178 : vector<16x128xf32>
    %180 = vector.broadcast %159 : vector<1x128xf32> to vector<16x128xf32>
    %181 = arith.addf %179, %180 : vector<16x128xf32>
    %182 = arith.truncf %181 : vector<16x128xf32> to vector<16x128xbf16>
    %c0_68 = arith.constant 0 : index
    %c0_69 = arith.constant 0 : index
    %c0_70 = arith.constant 0 : index
    %183 = vector.load %arg16[%c0_68, %c0_69, %c0_70] : memref<2x128x256xbf16, #tpu.memory_space<vmem>>, vector<1x128x256xbf16>
    %184 = vector.shape_cast %183 : vector<1x128x256xbf16> to vector<128x256xbf16>
    %cst_71 = arith.constant dense<0.000000e+00> : vector<16x256xf32>
    %185 = tpu.matmul %182, %184, %cst_71 {dimension_numbers = #tpu.dot_dimension_numbers<[1], [0], [0], [1], [0, 0, 1, 1], [], []>} : vector<16x128xbf16>, vector<128x256xbf16>, vector<16x256xf32> -> vector<16x256xf32>
    %c0_72 = arith.constant 0 : index
    %c0_73 = arith.constant 0 : index
    %c0_74 = arith.constant 0 : index
    %186 = vector.load %arg17[%c0_72, %c0_73, %c0_74] : memref<2x1x256xf32, #tpu.memory_space<vmem>>, vector<1x1x256xf32>
    %187 = vector.shape_cast %186 : vector<1x1x256xf32> to vector<1x256xf32>
    %188 = vector.broadcast %187 : vector<1x256xf32> to vector<16x256xf32>
    %189 = arith.addf %185, %188 : vector<16x256xf32>
    %cst_75 = arith.constant 5.000000e-01 : f32
    %190 = vector.broadcast %cst_75 : f32 to vector<16x256xf32>
    %191 = arith.mulf %190, %189 : vector<16x256xf32>
    %cst_76 = arith.constant 0.707106769 : f32
    %192 = vector.broadcast %cst_76 : f32 to vector<16x256xf32>
    %193 = arith.mulf %189, %192 : vector<16x256xf32>
    %194 = math.erf %193 : vector<16x256xf32>
    %cst_77 = arith.constant 1.000000e+00 : f32
    %195 = vector.broadcast %cst_77 : f32 to vector<16x256xf32>
    %196 = arith.addf %195, %194 : vector<16x256xf32>
    %197 = arith.mulf %191, %196 : vector<16x256xf32>
    %198 = arith.truncf %197 : vector<16x256xf32> to vector<16x256xbf16>
    %c0_78 = arith.constant 0 : index
    %c0_79 = arith.constant 0 : index
    %c0_80 = arith.constant 0 : index
    %199 = vector.load %arg18[%c0_78, %c0_79, %c0_80] : memref<2x256x128xbf16, #tpu.memory_space<vmem>>, vector<1x256x128xbf16>
    %200 = vector.shape_cast %199 : vector<1x256x128xbf16> to vector<256x128xbf16>
    %cst_81 = arith.constant dense<0.000000e+00> : vector<16x128xf32>
    %201 = tpu.matmul %198, %200, %cst_81 {dimension_numbers = #tpu.dot_dimension_numbers<[1], [0], [0], [1], [0, 0, 1, 1], [], []>} : vector<16x256xbf16>, vector<256x128xbf16>, vector<16x128xf32> -> vector<16x128xf32>
    %c0_82 = arith.constant 0 : index
    %c0_83 = arith.constant 0 : index
    %c0_84 = arith.constant 0 : index
    %202 = vector.load %arg19[%c0_82, %c0_83, %c0_84] : memref<2x1x128xf32, #tpu.memory_space<vmem>>, vector<1x1x128xf32>
    %203 = vector.shape_cast %202 : vector<1x1x128xf32> to vector<1x128xf32>
    %204 = vector.broadcast %203 : vector<1x128xf32> to vector<16x128xf32>
    %205 = arith.addf %201, %204 : vector<16x128xf32>
    %206 = arith.addf %155, %205 : vector<16x128xf32>
    %c1 = arith.constant 1 : index
    %c0_85 = arith.constant 0 : index
    %c0_86 = arith.constant 0 : index
    %207 = vector.load %arg9[%c1, %c0_85, %c0_86] : memref<2x1x128xf32, #tpu.memory_space<vmem>>, vector<1x1x128xf32>
    %208 = vector.shape_cast %207 : vector<1x1x128xf32> to vector<1x128xf32>
    %c1_87 = arith.constant 1 : index
    %c0_88 = arith.constant 0 : index
    %c0_89 = arith.constant 0 : index
    %209 = vector.load %arg10[%c1_87, %c0_88, %c0_89] : memref<2x1x128xf32, #tpu.memory_space<vmem>>, vector<1x1x128xf32>
    %210 = vector.shape_cast %209 : vector<1x1x128xf32> to vector<1x128xf32>
    %cst_90 = arith.constant dense<0.000000e+00> : vector<16xf32>
    %211 = vector.multi_reduction <add>, %206, %cst_90 [1] : vector<16x128xf32> to vector<16xf32>
    %212 = vector.shape_cast %211 : vector<16xf32> to vector<16x1xf32>
    %cst_91 = arith.constant 1.280000e+02 : f32
    %213 = vector.broadcast %cst_91 : f32 to vector<16x1xf32>
    %214 = arith.divf %212, %213 : vector<16x1xf32>
    %215 = vector.broadcast %214 : vector<16x1xf32> to vector<16x128xf32>
    %216 = arith.subf %206, %215 : vector<16x128xf32>
    %217 = arith.mulf %216, %216 : vector<16x128xf32>
    %cst_92 = arith.constant dense<0.000000e+00> : vector<16xf32>
    %218 = vector.multi_reduction <add>, %217, %cst_92 [1] : vector<16x128xf32> to vector<16xf32>
    %219 = vector.shape_cast %218 : vector<16xf32> to vector<16x1xf32>
    %cst_93 = arith.constant 1.280000e+02 : f32
    %220 = vector.broadcast %cst_93 : f32 to vector<16x1xf32>
    %221 = arith.divf %219, %220 : vector<16x1xf32>
    %222 = vector.broadcast %214 : vector<16x1xf32> to vector<16x128xf32>
    %223 = arith.subf %206, %222 : vector<16x128xf32>
    %cst_94 = arith.constant 9.99999974E-6 : f32
    %224 = vector.broadcast %cst_94 : f32 to vector<16x1xf32>
    %225 = arith.addf %221, %224 : vector<16x1xf32>
    %226 = math.rsqrt %225 : vector<16x1xf32>
    %227 = vector.broadcast %226 : vector<16x1xf32> to vector<16x128xf32>
    %228 = arith.mulf %223, %227 : vector<16x128xf32>
    %229 = vector.broadcast %208 : vector<1x128xf32> to vector<16x128xf32>
    %230 = arith.mulf %228, %229 : vector<16x128xf32>
    %231 = vector.broadcast %210 : vector<1x128xf32> to vector<16x128xf32>
    %232 = arith.addf %230, %231 : vector<16x128xf32>
    %233 = arith.truncf %232 : vector<16x128xf32> to vector<16x128xbf16>
    %c1_95 = arith.constant 1 : index
    %c0_96 = arith.constant 0 : index
    %c0_97 = arith.constant 0 : index
    %234 = vector.load %arg11[%c1_95, %c0_96, %c0_97] : memref<2x128x384xbf16, #tpu.memory_space<vmem>>, vector<1x128x384xbf16>
    %235 = vector.shape_cast %234 : vector<1x128x384xbf16> to vector<128x384xbf16>
    %cst_98 = arith.constant dense<0.000000e+00> : vector<16x384xf32>
    %236 = tpu.matmul %233, %235, %cst_98 {dimension_numbers = #tpu.dot_dimension_numbers<[1], [0], [0], [1], [0, 0, 1, 1], [], []>} : vector<16x128xbf16>, vector<128x384xbf16>, vector<16x384xf32> -> vector<16x384xf32>
    %237 = vector.extract_strided_slice %236 {offsets = [0, 0], sizes = [16, 128], strides = [1, 1]} : vector<16x384xf32> to vector<16x128xf32>
    %238 = vector.shape_cast %237 : vector<16x128xf32> to vector<2x8x2x64xf32>
    %239 = tpu.transpose %238, [0, 2, 1, 3] : vector<2x8x2x64xf32> -> vector<2x2x8x64xf32>
    %240 = vector.shape_cast %239 : vector<2x2x8x64xf32> to vector<4x8x64xf32>
    %cst_99 = arith.constant 1.250000e-01 : f32
    %241 = vector.broadcast %cst_99 : f32 to vector<4x8x64xf32>
    %242 = arith.mulf %240, %241 : vector<4x8x64xf32>
    %243 = vector.extract_strided_slice %236 {offsets = [0, 128], sizes = [16, 128], strides = [1, 1]} : vector<16x384xf32> to vector<16x128xf32>
    %244 = vector.shape_cast %243 : vector<16x128xf32> to vector<2x8x2x64xf32>
    %245 = tpu.transpose %244, [0, 2, 1, 3] : vector<2x8x2x64xf32> -> vector<2x2x8x64xf32>
    %246 = vector.shape_cast %245 : vector<2x2x8x64xf32> to vector<4x8x64xf32>
    %247 = vector.extract_strided_slice %236 {offsets = [0, 256], sizes = [16, 128], strides = [1, 1]} : vector<16x384xf32> to vector<16x128xf32>
    %248 = vector.shape_cast %247 : vector<16x128xf32> to vector<2x8x2x64xf32>
    %249 = tpu.transpose %248, [0, 2, 1, 3] : vector<2x8x2x64xf32> -> vector<2x2x8x64xf32>
    %250 = vector.shape_cast %249 : vector<2x2x8x64xf32> to vector<4x8x64xf32>
    %251 = arith.truncf %242 : vector<4x8x64xf32> to vector<4x8x64xbf16>
    %252 = arith.truncf %246 : vector<4x8x64xf32> to vector<4x8x64xbf16>
    "tpu.trace_start"() <{level = 10 : i32, message = "gnd,gmd->gnm"}> : () -> ()
    %cst_100 = arith.constant dense<0.000000e+00> : vector<4x8x8xf32>
    %253 = tpu.matmul %251, %252, %cst_100 {dimension_numbers = #tpu.dot_dimension_numbers<[2], [2], [1], [1], [0, 0, 0, 1, 1, 1], [0], [0]>} : vector<4x8x64xbf16>, vector<4x8x64xbf16>, vector<4x8x8xf32> -> vector<4x8x8xf32>
    %cst_101 = arith.constant -1.000000e+30 : f32
    "tpu.trace_stop"() : () -> ()
    %254 = vector.shape_cast %79 : vector<1x1x8xi1> to vector<1x1x8xi1>
    %255 = vector.broadcast %254 : vector<1x1x8xi1> to vector<4x8x8xi1>
    %256 = vector.broadcast %cst_101 : f32 to vector<4x8x8xf32>
    %257 = arith.select %255, %253, %256 : vector<4x8x8xi1>, vector<4x8x8xf32>
    %cst_102 = arith.constant dense<0xFF800000> : vector<4x8xf32>
    %258 = vector.multi_reduction <maximumf>, %257, %cst_102 [2] : vector<4x8x8xf32> to vector<4x8xf32>
    %259 = vector.shape_cast %258 : vector<4x8xf32> to vector<4x8x1xf32>
    %260 = vector.broadcast %259 : vector<4x8x1xf32> to vector<4x8x8xf32>
    %261 = arith.subf %257, %260 : vector<4x8x8xf32>
    %262 = math.exp %261 : vector<4x8x8xf32>
    %cst_103 = arith.constant dense<0.000000e+00> : vector<4x8xf32>
    %263 = vector.multi_reduction <add>, %262, %cst_103 [2] : vector<4x8x8xf32> to vector<4x8xf32>
    %264 = vector.shape_cast %263 : vector<4x8xf32> to vector<4x8x1xf32>
    %265 = tpu.reciprocal %264 {approx = true} : vector<4x8x1xf32> -> vector<4x8x1xf32>
    %266 = vector.broadcast %265 : vector<4x8x1xf32> to vector<4x8x8xf32>
    %267 = arith.mulf %262, %266 : vector<4x8x8xf32>
    %268 = arith.truncf %267 : vector<4x8x8xf32> to vector<4x8x8xbf16>
    %269 = arith.truncf %250 : vector<4x8x64xf32> to vector<4x8x64xbf16>
    "tpu.trace_start"() <{level = 10 : i32, message = "gnm,gmd->gnd"}> : () -> ()
    %cst_104 = arith.constant dense<0.000000e+00> : vector<4x8x64xf32>
    %270 = tpu.matmul %268, %269, %cst_104 {dimension_numbers = #tpu.dot_dimension_numbers<[2], [1], [1], [2], [0, 0, 0, 1, 1, 2], [0], [0]>} : vector<4x8x8xbf16>, vector<4x8x64xbf16>, vector<4x8x64xf32> -> vector<4x8x64xf32>
    "tpu.trace_stop"() : () -> ()
    %271 = vector.shape_cast %270 : vector<4x8x64xf32> to vector<2x2x8x64xf32>
    %272 = tpu.transpose %271, [0, 2, 1, 3] : vector<2x2x8x64xf32> -> vector<2x8x2x64xf32>
    %273 = vector.shape_cast %272 : vector<2x8x2x64xf32> to vector<16x128xf32>
    %274 = arith.truncf %273 : vector<16x128xf32> to vector<16x128xbf16>
    %c1_105 = arith.constant 1 : index
    %c0_106 = arith.constant 0 : index
    %c0_107 = arith.constant 0 : index
    %275 = vector.load %arg12[%c1_105, %c0_106, %c0_107] : memref<2x128x128xbf16, #tpu.memory_space<vmem>>, vector<1x128x128xbf16>
    %276 = vector.shape_cast %275 : vector<1x128x128xbf16> to vector<128x128xbf16>
    %cst_108 = arith.constant dense<0.000000e+00> : vector<16x128xf32>
    %277 = tpu.matmul %274, %276, %cst_108 {dimension_numbers = #tpu.dot_dimension_numbers<[1], [0], [0], [1], [0, 0, 1, 1], [], []>} : vector<16x128xbf16>, vector<128x128xbf16>, vector<16x128xf32> -> vector<16x128xf32>
    %c1_109 = arith.constant 1 : index
    %c0_110 = arith.constant 0 : index
    %c0_111 = arith.constant 0 : index
    %278 = vector.load %arg13[%c1_109, %c0_110, %c0_111] : memref<2x1x128xf32, #tpu.memory_space<vmem>>, vector<1x1x128xf32>
    %279 = vector.shape_cast %278 : vector<1x1x128xf32> to vector<1x128xf32>
    %280 = vector.broadcast %279 : vector<1x128xf32> to vector<16x128xf32>
    %281 = arith.addf %277, %280 : vector<16x128xf32>
    %282 = arith.addf %206, %281 : vector<16x128xf32>
    %c1_112 = arith.constant 1 : index
    %c0_113 = arith.constant 0 : index
    %c0_114 = arith.constant 0 : index
    %283 = vector.load %arg14[%c1_112, %c0_113, %c0_114] : memref<2x1x128xf32, #tpu.memory_space<vmem>>, vector<1x1x128xf32>
    %284 = vector.shape_cast %283 : vector<1x1x128xf32> to vector<1x128xf32>
    %c1_115 = arith.constant 1 : index
    %c0_116 = arith.constant 0 : index
    %c0_117 = arith.constant 0 : index
    %285 = vector.load %arg15[%c1_115, %c0_116, %c0_117] : memref<2x1x128xf32, #tpu.memory_space<vmem>>, vector<1x1x128xf32>
    %286 = vector.shape_cast %285 : vector<1x1x128xf32> to vector<1x128xf32>
    %cst_118 = arith.constant dense<0.000000e+00> : vector<16xf32>
    %287 = vector.multi_reduction <add>, %282, %cst_118 [1] : vector<16x128xf32> to vector<16xf32>
    %288 = vector.shape_cast %287 : vector<16xf32> to vector<16x1xf32>
    %cst_119 = arith.constant 1.280000e+02 : f32
    %289 = vector.broadcast %cst_119 : f32 to vector<16x1xf32>
    %290 = arith.divf %288, %289 : vector<16x1xf32>
    %291 = vector.broadcast %290 : vector<16x1xf32> to vector<16x128xf32>
    %292 = arith.subf %282, %291 : vector<16x128xf32>
    %293 = arith.mulf %292, %292 : vector<16x128xf32>
    %cst_120 = arith.constant dense<0.000000e+00> : vector<16xf32>
    %294 = vector.multi_reduction <add>, %293, %cst_120 [1] : vector<16x128xf32> to vector<16xf32>
    %295 = vector.shape_cast %294 : vector<16xf32> to vector<16x1xf32>
    %cst_121 = arith.constant 1.280000e+02 : f32
    %296 = vector.broadcast %cst_121 : f32 to vector<16x1xf32>
    %297 = arith.divf %295, %296 : vector<16x1xf32>
    %298 = vector.broadcast %290 : vector<16x1xf32> to vector<16x128xf32>
    %299 = arith.subf %282, %298 : vector<16x128xf32>
    %cst_122 = arith.constant 9.99999974E-6 : f32
    %300 = vector.broadcast %cst_122 : f32 to vector<16x1xf32>
    %301 = arith.addf %297, %300 : vector<16x1xf32>
    %302 = math.rsqrt %301 : vector<16x1xf32>
    %303 = vector.broadcast %302 : vector<16x1xf32> to vector<16x128xf32>
    %304 = arith.mulf %299, %303 : vector<16x128xf32>
    %305 = vector.broadcast %284 : vector<1x128xf32> to vector<16x128xf32>
    %306 = arith.mulf %304, %305 : vector<16x128xf32>
    %307 = vector.broadcast %286 : vector<1x128xf32> to vector<16x128xf32>
    %308 = arith.addf %306, %307 : vector<16x128xf32>
    %309 = arith.truncf %308 : vector<16x128xf32> to vector<16x128xbf16>
    %c1_123 = arith.constant 1 : index
    %c0_124 = arith.constant 0 : index
    %c0_125 = arith.constant 0 : index
    %310 = vector.load %arg16[%c1_123, %c0_124, %c0_125] : memref<2x128x256xbf16, #tpu.memory_space<vmem>>, vector<1x128x256xbf16>
    %311 = vector.shape_cast %310 : vector<1x128x256xbf16> to vector<128x256xbf16>
    %cst_126 = arith.constant dense<0.000000e+00> : vector<16x256xf32>
    %312 = tpu.matmul %309, %311, %cst_126 {dimension_numbers = #tpu.dot_dimension_numbers<[1], [0], [0], [1], [0, 0, 1, 1], [], []>} : vector<16x128xbf16>, vector<128x256xbf16>, vector<16x256xf32> -> vector<16x256xf32>
    %c1_127 = arith.constant 1 : index
    %c0_128 = arith.constant 0 : index
    %c0_129 = arith.constant 0 : index
    %313 = vector.load %arg17[%c1_127, %c0_128, %c0_129] : memref<2x1x256xf32, #tpu.memory_space<vmem>>, vector<1x1x256xf32>
    %314 = vector.shape_cast %313 : vector<1x1x256xf32> to vector<1x256xf32>
    %315 = vector.broadcast %314 : vector<1x256xf32> to vector<16x256xf32>
    %316 = arith.addf %312, %315 : vector<16x256xf32>
    %cst_130 = arith.constant 5.000000e-01 : f32
    %317 = vector.broadcast %cst_130 : f32 to vector<16x256xf32>
    %318 = arith.mulf %317, %316 : vector<16x256xf32>
    %cst_131 = arith.constant 0.707106769 : f32
    %319 = vector.broadcast %cst_131 : f32 to vector<16x256xf32>
    %320 = arith.mulf %316, %319 : vector<16x256xf32>
    %321 = math.erf %320 : vector<16x256xf32>
    %cst_132 = arith.constant 1.000000e+00 : f32
    %322 = vector.broadcast %cst_132 : f32 to vector<16x256xf32>
    %323 = arith.addf %322, %321 : vector<16x256xf32>
    %324 = arith.mulf %318, %323 : vector<16x256xf32>
    %325 = arith.truncf %324 : vector<16x256xf32> to vector<16x256xbf16>
    %c1_133 = arith.constant 1 : index
    %c0_134 = arith.constant 0 : index
    %c0_135 = arith.constant 0 : index
    %326 = vector.load %arg18[%c1_133, %c0_134, %c0_135] : memref<2x256x128xbf16, #tpu.memory_space<vmem>>, vector<1x256x128xbf16>
    %327 = vector.shape_cast %326 : vector<1x256x128xbf16> to vector<256x128xbf16>
    %cst_136 = arith.constant dense<0.000000e+00> : vector<16x128xf32>
    %328 = tpu.matmul %325, %327, %cst_136 {dimension_numbers = #tpu.dot_dimension_numbers<[1], [0], [0], [1], [0, 0, 1, 1], [], []>} : vector<16x256xbf16>, vector<256x128xbf16>, vector<16x128xf32> -> vector<16x128xf32>
    %c1_137 = arith.constant 1 : index
    %c0_138 = arith.constant 0 : index
    %c0_139 = arith.constant 0 : index
    %329 = vector.load %arg19[%c1_137, %c0_138, %c0_139] : memref<2x1x128xf32, #tpu.memory_space<vmem>>, vector<1x1x128xf32>
    %330 = vector.shape_cast %329 : vector<1x1x128xf32> to vector<1x128xf32>
    %331 = vector.broadcast %330 : vector<1x128xf32> to vector<16x128xf32>
    %332 = arith.addf %328, %331 : vector<16x128xf32>
    %333 = arith.addf %282, %332 : vector<16x128xf32>
    %334 = vector.shape_cast %333 : vector<16x128xf32> to vector<2x8x128xf32>
    %335 = vector.extract_strided_slice %334 {offsets = [0, 0, 0], sizes = [2, 1, 128], strides = [1, 1, 1]} : vector<2x8x128xf32> to vector<2x1x128xf32>
    %336 = vector.shape_cast %335 : vector<2x1x128xf32> to vector<2x128xf32>
    %c0_140 = arith.constant 0 : index
    %c0_141 = arith.constant 0 : index
    %337 = vector.load %arg20[%c0_140, %c0_141] : memref<1x128xf32, #tpu.memory_space<vmem>>, vector<1x128xf32>
    %c0_142 = arith.constant 0 : index
    %c0_143 = arith.constant 0 : index
    %338 = vector.load %arg21[%c0_142, %c0_143] : memref<1x128xf32, #tpu.memory_space<vmem>>, vector<1x128xf32>
    %cst_144 = arith.constant dense<0.000000e+00> : vector<2xf32>
    %339 = vector.multi_reduction <add>, %336, %cst_144 [1] : vector<2x128xf32> to vector<2xf32>
    %340 = vector.shape_cast %339 : vector<2xf32> to vector<2x1xf32>
    %cst_145 = arith.constant 1.280000e+02 : f32
    %341 = vector.broadcast %cst_145 : f32 to vector<2x1xf32>
    %342 = arith.divf %340, %341 : vector<2x1xf32>
    %343 = vector.broadcast %342 : vector<2x1xf32> to vector<2x128xf32>
    %344 = arith.subf %336, %343 : vector<2x128xf32>
    %345 = arith.mulf %344, %344 : vector<2x128xf32>
    %cst_146 = arith.constant dense<0.000000e+00> : vector<2xf32>
    %346 = vector.multi_reduction <add>, %345, %cst_146 [1] : vector<2x128xf32> to vector<2xf32>
    %347 = vector.shape_cast %346 : vector<2xf32> to vector<2x1xf32>
    %cst_147 = arith.constant 1.280000e+02 : f32
    %348 = vector.broadcast %cst_147 : f32 to vector<2x1xf32>
    %349 = arith.divf %347, %348 : vector<2x1xf32>
    %350 = vector.broadcast %342 : vector<2x1xf32> to vector<2x128xf32>
    %351 = arith.subf %336, %350 : vector<2x128xf32>
    %cst_148 = arith.constant 9.99999974E-6 : f32
    %352 = vector.broadcast %cst_148 : f32 to vector<2x1xf32>
    %353 = arith.addf %349, %352 : vector<2x1xf32>
    %354 = math.rsqrt %353 : vector<2x1xf32>
    %355 = vector.broadcast %354 : vector<2x1xf32> to vector<2x128xf32>
    %356 = arith.mulf %351, %355 : vector<2x128xf32>
    %357 = vector.broadcast %337 : vector<1x128xf32> to vector<2x128xf32>
    %358 = arith.mulf %356, %357 : vector<2x128xf32>
    %359 = vector.broadcast %338 : vector<1x128xf32> to vector<2x128xf32>
    %360 = arith.addf %358, %359 : vector<2x128xf32>
    %361 = arith.truncf %360 : vector<2x128xf32> to vector<2x128xbf16>
    %c0_149 = arith.constant 0 : index
    %c0_150 = arith.constant 0 : index
    %362 = vector.load %arg22[%c0_149, %c0_150] : memref<128x128xbf16, #tpu.memory_space<vmem>>, vector<128x128xbf16>
    %cst_151 = arith.constant dense<0.000000e+00> : vector<2x128xf32>
    %363 = tpu.matmul %361, %362, %cst_151 {dimension_numbers = #tpu.dot_dimension_numbers<[1], [0], [0], [1], [0, 0, 1, 1], [], []>} : vector<2x128xbf16>, vector<128x128xbf16>, vector<2x128xf32> -> vector<2x128xf32>
    %c0_152 = arith.constant 0 : index
    %c0_153 = arith.constant 0 : index
    %364 = vector.load %arg23[%c0_152, %c0_153] : memref<1x128xf32, #tpu.memory_space<vmem>>, vector<1x128xf32>
    %365 = vector.broadcast %364 : vector<1x128xf32> to vector<2x128xf32>
    %366 = arith.addf %363, %365 : vector<2x128xf32>
    %cst_154 = arith.constant 5.000000e-01 : f32
    %367 = vector.broadcast %cst_154 : f32 to vector<2x128xf32>
    %368 = arith.mulf %367, %366 : vector<2x128xf32>
    %369 = math.tanh %368 : vector<2x128xf32>
    %cst_155 = arith.constant 1.000000e+00 : f32
    %370 = vector.broadcast %cst_155 : f32 to vector<2x128xf32>
    %371 = arith.addf %369, %370 : vector<2x128xf32>
    %cst_156 = arith.constant 5.000000e-01 : f32
    %372 = vector.broadcast %cst_156 : f32 to vector<2x128xf32>
    %373 = arith.mulf %372, %371 : vector<2x128xf32>
    %cst_157 = arith.constant 3.120000e+02 : f32
    %374 = vector.broadcast %cst_157 : f32 to vector<2x128xf32>
    %375 = arith.mulf %373, %374 : vector<2x128xf32>
    %c0_158 = arith.constant 0 : index
    %c0_159 = arith.constant 0 : index
    %376 = vector.load %arg24[%c0_158, %c0_159] : memref<2x128xf32, #tpu.memory_space<vmem>>, vector<2x128xf32>
    tpu.vector_store %arg24[%c0_158, %c0_159], %375 {strides = array<i32>} : memref<2x128xf32, #tpu.memory_space<vmem>>, vector<2x128xf32>,
    return
  }
}

</mosaic_0001>

<llo_original>
// kernel: vitnet_forward.1
$region0: #{vitnet_forward.1}
  #allocation0 [shape = 'u32[]', space=smem, size = 0x4, offset = 0x4, fixed_abs, tag = 'smem constant byte address 0x4 - core index']
  #allocation1 [shape = 'u32[144,128]{1,0:T(1,128)}', space=vmem, size = 0x12000, scoped, tag = 'internal scratch']
  %s0 = inlined_call_operand.vmem [shape: f32[16,256], index: 0, kind: input, shape index: {}]
  %s1 = inlined_call_operand.vmem [shape: f32[1,256], index: 1, kind: input, shape index: {}]
  %s2 = inlined_call_operand.vmem [shape: f32[1,256], index: 2, kind: input, shape index: {}]
  %s3 = inlined_call_operand.vmem [shape: bf16[256,128], index: 3, kind: input, shape index: {}]
  %s4 = inlined_call_operand.vmem [shape: f32[1,128], index: 4, kind: input, shape index: {}]
  %s5 = inlined_call_operand.vmem [shape: f32[1,128], index: 5, kind: input, shape index: {}]
  %s6 = inlined_call_operand.vmem [shape: f32[1,128], index: 6, kind: input, shape index: {}]
  %s7 = inlined_call_operand.vmem [shape: f32[1,128], index: 7, kind: input, shape index: {}]
  %s8 = inlined_call_operand.vmem [shape: f32[8,128], index: 8, kind: input, shape index: {}]
  %s9 = inlined_call_operand.vmem [shape: f32[2,1,128], index: 9, kind: input, shape index: {}]
  %s10 = inlined_call_operand.vmem [shape: f32[2,1,128], index: 10, kind: input, shape index: {}]
  %s11 = inlined_call_operand.vmem [shape: bf16[2,128,384], index: 11, kind: input, shape index: {}]
  %s12 = inlined_call_operand.vmem [shape: bf16[2,128,128], index: 12, kind: input, shape index: {}]
  %s13 = inlined_call_operand.vmem [shape: f32[2,1,128], index: 13, kind: input, shape index: {}]
  %s14 = inlined_call_operand.vmem [shape: f32[2,1,128], index: 14, kind: input, shape index: {}]
  %s15 = inlined_call_operand.vmem [shape: f32[2,1,128], index: 15, kind: input, shape index: {}]
  %s16 = inlined_call_operand.vmem [shape: bf16[2,128,256], index: 16, kind: input, shape index: {}]
  %s17 = inlined_call_operand.vmem [shape: f32[2,1,256], index: 17, kind: input, shape index: {}]
  %s18 = inlined_call_operand.vmem [shape: bf16[2,256,128], index: 18, kind: input, shape index: {}]
  %s19 = inlined_call_operand.vmem [shape: f32[2,1,128], index: 19, kind: input, shape index: {}]
  %s20 = inlined_call_operand.vmem [shape: f32[1,128], index: 20, kind: input, shape index: {}]
  %s21 = inlined_call_operand.vmem [shape: f32[1,128], index: 21, kind: input, shape index: {}]
  %s22 = inlined_call_operand.vmem [shape: bf16[128,128], index: 22, kind: input, shape index: {}]
  %s23 = inlined_call_operand.vmem [shape: f32[1,128], index: 23, kind: input, shape index: {}]
  %s24 = inlined_call_operand.hbm [shape: f32[2,128], index: 24, kind: output, shape index: {}]
  %s25 = sld [smem:[#allocation0]]
  $region106: #{vitnet_forward.1} parent=0
    _
  %s27 = ssub.s32 1, %s25
  %s28 = scalar_select 0, %s27, %s25
  $region1: #{vitnet_forward.1} parent=0
    #allocation2 [shape = 'u8[1024]{0}', space=vmem, size = 0x400, scoped, tag = 'output window, operand 0, single buffered']
    #allocation3 [shape = 's32[1]{0}', space=sflag, size = 0x4, scoped, tag = 'scoped memory for vitnet_forward.1']
    %29 = vsyncpa [#allocation3], 0
    // Predicated region
    $region2: #{vitnet_forward.1} parent=1 // pred_check
      _
    $region3: #{vitnet_forward.1} parent=1 // pred_check_branch
      %31 = sbr.rel (0) target = $region5
    $region4: #{vitnet_forward.1} parent=1 // pred_region
      _
    $region5: #{vitnet_forward.1} parent=1 // pred_fallthru
      _
    // Predicated region
    $region6: #{vitnet_forward.1} parent=1 // pred_check
      _
    $region7: #{vitnet_forward.1} parent=1 // pred_check_branch
      %33 = sbr.rel (0) target = $region9
    $region8: #{vitnet_forward.1} parent=1 // pred_region
      _
    $region9: #{vitnet_forward.1} parent=1 // pred_fallthru
      _
    // Predicated region
    $region10: #{vitnet_forward.1} parent=1 // pred_check
      _
    $region11: #{vitnet_forward.1} parent=1 // pred_check_branch
      %35 = sbr.rel (0) target = $region13
    $region12: #{vitnet_forward.1} parent=1 // pred_region
      _
    $region13: #{vitnet_forward.1} parent=1 // pred_fallthru
      _
    // Predicated region
    $region14: #{vitnet_forward.1} parent=1 // pred_check
      _
    $region15: #{vitnet_forward.1} parent=1 // pred_check_branch
      %37 = sbr.rel (0) target = $region17
    $region16: #{vitnet_forward.1} parent=1 // pred_region
      _
    $region17: #{vitnet_forward.1} parent=1 // pred_fallthru
      _
    // Predicated region
    $region18: #{vitnet_forward.1} parent=1 // pred_check
      _
    $region19: #{vitnet_forward.1} parent=1 // pred_check_branch
      %39 = sbr.rel (0) target = $region21
    $region20: #{vitnet_forward.1} parent=1 // pred_region
      _
    $region21: #{vitnet_forward.1} parent=1 // pred_fallthru
      _
    // Predicated region
    $region22: #{vitnet_forward.1} parent=1 // pred_check
      _
    $region23: #{vitnet_forward.1} parent=1 // pred_check_branch
      %41 = sbr.rel (0) target = $region25
    $region24: #{vitnet_forward.1} parent=1 // pred_region
      _
    $region25: #{vitnet_forward.1} parent=1 // pred_fallthru
      _
    // Predicated region
    $region26: #{vitnet_forward.1} parent=1 // pred_check
      _
    $region27: #{vitnet_forward.1} parent=1 // pred_check_branch
      %43 = sbr.rel (0) target = $region29
    $region28: #{vitnet_forward.1} parent=1 // pred_region
      _
    $region29: #{vitnet_forward.1} parent=1 // pred_fallthru
      _
    // Predicated region
    $region30: #{vitnet_forward.1} parent=1 // pred_check
      _
    $region31: #{vitnet_forward.1} parent=1 // pred_check_branch
      %45 = sbr.rel (0) target = $region33
    $region32: #{vitnet_forward.1} parent=1 // pred_region
      _
    $region33: #{vitnet_forward.1} parent=1 // pred_fallthru
      _
    // Predicated region
    $region34: #{vitnet_forward.1} parent=1 // pred_check
      _
    $region35: #{vitnet_forward.1} parent=1 // pred_check_branch
      %47 = sbr.rel (0) target = $region37
    $region36: #{vitnet_forward.1} parent=1 // pred_region
      _
    $region37: #{vitnet_forward.1} parent=1 // pred_fallthru
      _
    // Predicated region
    $region38: #{vitnet_forward.1} parent=1 // pred_check
      _
    $region39: #{vitnet_forward.1} parent=1 // pred_check_branch
      %49 = sbr.rel (0) target = $region41
    $region40: #{vitnet_forward.1} parent=1 // pred_region
      _
    $region41: #{vitnet_forward.1} parent=1 // pred_fallthru
      _
    // Predicated region
    $region42: #{vitnet_forward.1} parent=1 // pred_check
      _
    $region43: #{vitnet_forward.1} parent=1 // pred_check_branch
      %51 = sbr.rel (0) target = $region45
    $region44: #{vitnet_forward.1} parent=1 // pred_region
      _
    $region45: #{vitnet_forward.1} parent=1 // pred_fallthru
      _
    // Predicated region
    $region46: #{vitnet_forward.1} parent=1 // pred_check
      _
    $region47: #{vitnet_forward.1} parent=1 // pred_check_branch
      %53 = sbr.rel (0) target = $region49
    $region48: #{vitnet_forward.1} parent=1 // pred_region
      _
    $region49: #{vitnet_forward.1} parent=1 // pred_fallthru
      _
    // Predicated region
    $region50: #{vitnet_forward.1} parent=1 // pred_check
      _
    $region51: #{vitnet_forward.1} parent=1 // pred_check_branch
      %55 = sbr.rel (0) target = $region53
    $region52: #{vitnet_forward.1} parent=1 // pred_region
      _
    $region53: #{vitnet_forward.1} parent=1 // pred_fallthru
      _
    // Predicated region
    $region54: #{vitnet_forward.1} parent=1 // pred_check
      _
    $region55: #{vitnet_forward.1} parent=1 // pred_check_branch
      %57 = sbr.rel (0) target = $region57
    $region56: #{vitnet_forward.1} parent=1 // pred_region
      _
    $region57: #{vitnet_forward.1} parent=1 // pred_fallthru
      _
    // Predicated region
    $region58: #{vitnet_forward.1} parent=1 // pred_check
      _
    $region59: #{vitnet_forward.1} parent=1 // pred_check_branch
      %59 = sbr.rel (0) target = $region61
    $region60: #{vitnet_forward.1} parent=1 // pred_region
      _
    $region61: #{vitnet_forward.1} parent=1 // pred_fallthru
      _
    // Predicated region
    $region62: #{vitnet_forward.1} parent=1 // pred_check
      _
    $region63: #{vitnet_forward.1} parent=1 // pred_check_branch
      %61 = sbr.rel (0) target = $region65
    $region64: #{vitnet_forward.1} parent=1 // pred_region
      _
    $region65: #{vitnet_forward.1} parent=1 // pred_fallthru
      _
    // Predicated region
    $region66: #{vitnet_forward.1} parent=1 // pred_check
      _
    $region67: #{vitnet_forward.1} parent=1 // pred_check_branch
      %63 = sbr.rel (0) target = $region69
    $region68: #{vitnet_forward.1} parent=1 // pred_region
      _
    $region69: #{vitnet_forward.1} parent=1 // pred_fallthru
      _
    // Predicated region
    $region70: #{vitnet_forward.1} parent=1 // pred_check
      _
    $region71: #{vitnet_forward.1} parent=1 // pred_check_branch
      %65 = sbr.rel (0) target = $region73
    $region72: #{vitnet_forward.1} parent=1 // pred_region
      _
    $region73: #{vitnet_forward.1} parent=1 // pred_fallthru
      _
    // Predicated region
    $region74: #{vitnet_forward.1} parent=1 // pred_check
      _
    $region75: #{vitnet_forward.1} parent=1 // pred_check_branch
      %67 = sbr.rel (0) target = $region77
    $region76: #{vitnet_forward.1} parent=1 // pred_region
      _
    $region77: #{vitnet_forward.1} parent=1 // pred_fallthru
      _
    // Predicated region
    $region78: #{vitnet_forward.1} parent=1 // pred_check
      _
    $region79: #{vitnet_forward.1} parent=1 // pred_check_branch
      %69 = sbr.rel (0) target = $region81
    $region80: #{vitnet_forward.1} parent=1 // pred_region
      _
    $region81: #{vitnet_forward.1} parent=1 // pred_fallthru
      _
    // Predicated region
    $region82: #{vitnet_forward.1} parent=1 // pred_check
      _
    $region83: #{vitnet_forward.1} parent=1 // pred_check_branch
      %71 = sbr.rel (0) target = $region85
    $region84: #{vitnet_forward.1} parent=1 // pred_region
      _
    $region85: #{vitnet_forward.1} parent=1 // pred_fallthru
      _
    // Predicated region
    $region86: #{vitnet_forward.1} parent=1 // pred_check
      _
    $region87: #{vitnet_forward.1} parent=1 // pred_check_branch
      %73 = sbr.rel (0) target = $region89
    $region88: #{vitnet_forward.1} parent=1 // pred_region
      _
    $region89: #{vitnet_forward.1} parent=1 // pred_fallthru
      _
    // Predicated region
    $region90: #{vitnet_forward.1} parent=1 // pred_check
      _
    $region91: #{vitnet_forward.1} parent=1 // pred_check_branch
      %75 = sbr.rel (0) target = $region93
    $region92: #{vitnet_forward.1} parent=1 // pred_region
      _
    $region93: #{vitnet_forward.1} parent=1 // pred_fallthru
      _
    // Predicated region
    $region94: #{vitnet_forward.1} parent=1 // pred_check
      _
    $region95: #{vitnet_forward.1} parent=1 // pred_check_branch
      %77 = sbr.rel (0) target = $region97
    $region96: #{vitnet_forward.1} parent=1 // pred_region
      _
    $region97: #{vitnet_forward.1} parent=1 // pred_fallthru
      _
    %v79 = vld [vmem:[%s0] sm:$0xff]
    %v80 = vld [vmem:[%s0 + $0x8] sm:$0xff]
    %v81 = vld [vmem:[%s0 + $0x10] sm:$0xff]
    %v82 = vld [vmem:[%s0 + $0x18] sm:$0xff]
    %v83 = vld [vmem:[%s1] sm:$0x3]
    %v84 = vld [vmem:[%s2] sm:$0x3]
    %v85 = vadd.f32 %v79, %v80
    %86 = vadd.xlane.f32.xlu0 %v85
    %v87 = vpop.xlane.xlu0 %86
    %v88 = vadd.f32 %v81, %v82
    %89 = vadd.xlane.f32.xlu0 %v88
    %v90 = vpop.xlane.xlu0 %89
    %v91 = vrcp.pop 256.0
    %v92 = vmul.f32 %v87, %v91
    %v93 = vmul.f32 %v90, %v91
    %v94 = vsub.f32 %v79, %v92
    %v95 = vsub.f32 %v80, %v92
    %v96 = vsub.f32 %v81, %v93
    %v97 = vsub.f32 %v82, %v93
    %v98 = vmul.f32 %v94, %v94
    %v99 = vmul.f32 %v95, %v95
    %v100 = vmul.f32 %v96, %v96
    %v101 = vmul.f32 %v97, %v97
    %v102 = vadd.f32 %v98, %v99
    %103 = vadd.xlane.f32.xlu0 %v102
    %v104 = vpop.xlane.xlu0 %103
    %v105 = vadd.f32 %v100, %v101
    %106 = vadd.xlane.f32.xlu0 %v105
    %v107 = vpop.xlane.xlu0 %106
    %v108 = vmul.f32 %v104, %v91
    %v109 = vmul.f32 %v107, %v91
    %v110 = vadd.f32 %v108, 1e-05
    %v111 = vadd.f32 %v109, 1e-05
    %v112 = vrsqrt.pop %v110
    %v113 = vrsqrt.pop %v111
    %v114 = vmul.f32 %v94, %v112
    %v115 = vmul.f32 %v95, %v112
    %v116 = vmul.f32 %v96, %v113
    %v117 = vmul.f32 %v97, %v113
    %v119 = vlaneseq
    %v120 = vshrl.u32 %v119, 7
    %v121 = vsub.s32 0, %v120
    %v122 = vrot.slane %v83, %v121
    %v123 = vlaneseq
    %v124 = vshrl.u32 %v123, 7
    %v125 = vsub.s32 1, %v124
    %v126 = vrot.slane %v83, %v125
    %v129 = vmul.f32 %v114, %v122
    %v130 = vmul.f32 %v115, %v126
    %v131 = vmul.f32 %v116, %v122
    %v132 = vmul.f32 %v117, %v126
    %v134 = vlaneseq
    %v135 = vshrl.u32 %v134, 7
    %v136 = vsub.s32 0, %v135
    %v137 = vrot.slane %v84, %v136
    %v138 = vlaneseq
    %v139 = vshrl.u32 %v138, 7
    %v140 = vsub.s32 1, %v139
    %v141 = vrot.slane %v84, %v140
    %v144 = vadd.f32 %v129, %v137
    %v145 = vadd.f32 %v130, %v141
    %v146 = vadd.f32 %v131, %v137
    %v147 = vadd.f32 %v132, %v141
    %v148 = vpack.c.bf16 %v146, %v144
    %v149 = vpack.c.bf16 %v147, %v145
    %v150 = vld [vmem:[%s3] sm:$0xf]
    %v151 = vld [vmem:[%s3 + $0x4] sm:$0xf]
    %v152 = vld [vmem:[%s3 + $0x8] sm:$0xf]
    %v153 = vld [vmem:[%s3 + $0xc] sm:$0xf]
    %v154 = vld [vmem:[%s3 + $0x10] sm:$0xf]
    %v155 = vld [vmem:[%s3 + $0x14] sm:$0xf]
    %v156 = vld [vmem:[%s3 + $0x18] sm:$0xf]
    %v157 = vld [vmem:[%s3 + $0x1c] sm:$0xf]
    %v158 = vld [vmem:[%s3 + $0x20] sm:$0xf]
    %v159 = vld [vmem:[%s3 + $0x24] sm:$0xf]
    %v160 = vld [vmem:[%s3 + $0x28] sm:$0xf]
    %v161 = vld [vmem:[%s3 + $0x2c] sm:$0xf]
    %v162 = vld [vmem:[%s3 + $0x30] sm:$0xf]
    %v163 = vld [vmem:[%s3 + $0x34] sm:$0xf]
    %v164 = vld [vmem:[%s3 + $0x38] sm:$0xf]
    %v165 = vld [vmem:[%s3 + $0x3c] sm:$0xf]
    %v166 = vld [vmem:[%s3 + $0x40] sm:$0xf]
    %v167 = vld [vmem:[%s3 + $0x44] sm:$0xf]
    %v168 = vld [vmem:[%s3 + $0x48] sm:$0xf]
    %v169 = vld [vmem:[%s3 + $0x4c] sm:$0xf]
    %v170 = vld [vmem:[%s3 + $0x50] sm:$0xf]
    %v171 = vld [vmem:[%s3 + $0x54] sm:$0xf]
    %v172 = vld [vmem:[%s3 + $0x58] sm:$0xf]
    %v173 = vld [vmem:[%s3 + $0x5c] sm:$0xf]
    %v174 = vld [vmem:[%s3 + $0x60] sm:$0xf]
    %v175 = vld [vmem:[%s3 + $0x64] sm:$0xf]
    %v176 = vld [vmem:[%s3 + $0x68] sm:$0xf]
    %v177 = vld [vmem:[%s3 + $0x6c] sm:$0xf]
    %v178 = vld [vmem:[%s3 + $0x70] sm:$0xf]
    %v179 = vld [vmem:[%s3 + $0x74] sm:$0xf]
    %v180 = vld [vmem:[%s3 + $0x78] sm:$0xf]
    %v181 = vld [vmem:[%s3 + $0x7c] sm:$0xf]
    %v182 = vld [vmem:[%s4] sm:$0x1]
    %v184 = vlaneseq
    %v185 = vshrl.u32 %v184, 7
    %v186 = vsub.s32 0, %v185
    %v187 = vrot.slane %v182, %v186
    %v221 = vunpack.c.l.b16 %v150
    %v222 = vunpack.c.l.b16 %v151
    %v223 = vunpack.c.l.b16 %v152
    %v224 = vunpack.c.l.b16 %v153
    %v225 = vunpack.c.l.b16 %v154
    %v226 = vunpack.c.l.b16 %v155
    %v227 = vunpack.c.l.b16 %v156
    %v228 = vunpack.c.l.b16 %v157
    %v229 = vunpack.c.l.b16 %v158
    %v230 = vunpack.c.l.b16 %v159
    %v231 = vunpack.c.l.b16 %v160
    %v232 = vunpack.c.l.b16 %v161
    %v233 = vunpack.c.l.b16 %v162
    %v234 = vunpack.c.l.b16 %v163
    %v235 = vunpack.c.l.b16 %v164
    %v236 = vunpack.c.l.b16 %v165
    %v237 = vunpack.c.l.b16 %v166
    %v238 = vunpack.c.l.b16 %v167
    %v239 = vunpack.c.l.b16 %v168
    %v240 = vunpack.c.l.b16 %v169
    %v241 = vunpack.c.l.b16 %v170
    %v242 = vunpack.c.l.b16 %v171
    %v243 = vunpack.c.l.b16 %v172
    %v244 = vunpack.c.l.b16 %v173
    %v245 = vunpack.c.l.b16 %v174
    %v246 = vunpack.c.l.b16 %v175
    %v247 = vunpack.c.l.b16 %v176
    %v248 = vunpack.c.l.b16 %v177
    %v249 = vunpack.c.l.b16 %v178
    %v250 = vunpack.c.l.b16 %v179
    %v251 = vunpack.c.l.b16 %v180
    %v252 = vunpack.c.l.b16 %v181
    %v253 = vpack.c.b16 %v222, %v221
    %v254 = vpack.c.b16 %v224, %v223
    %v255 = vpack.c.b16 %v226, %v225
    %v256 = vpack.c.b16 %v228, %v227
    %v257 = vpack.c.b16 %v230, %v229
    %v258 = vpack.c.b16 %v232, %v231
    %v259 = vpack.c.b16 %v234, %v233
    %v260 = vpack.c.b16 %v236, %v235
    %v261 = vpack.c.b16 %v238, %v237
    %v262 = vpack.c.b16 %v240, %v239
    %v263 = vpack.c.b16 %v242, %v241
    %v264 = vpack.c.b16 %v244, %v243
    %v265 = vpack.c.b16 %v246, %v245
    %v266 = vpack.c.b16 %v248, %v247
    %v267 = vpack.c.b16 %v250, %v249
    %v268 = vpack.c.b16 %v252, %v251
    %285 = vmatprep.subr.bf16.mxu0 0
    %286 = vmatpush1.bf16.msra.mxu0 %v253
    %287 = vmatprep.subr.bf16.mxu0 0
    %288 = vmatpush1.bf16.msra.mxu0 %v254
    %289 = vmatprep.subr.bf16.mxu0 0
    %290 = vmatpush1.bf16.msra.mxu0 %v255
    %291 = vmatprep.subr.bf16.mxu0 0
    %292 = vmatpush1.bf16.msra.mxu0 %v256
    %293 = vmatprep.subr.bf16.mxu0 0
    %294 = vmatpush1.bf16.msra.mxu0 %v257
    %295 = vmatprep.subr.bf16.mxu0 0
    %296 = vmatpush1.bf16.msra.mxu0 %v258
    %297 = vmatprep.subr.bf16.mxu0 0
    %298 = vmatpush1.bf16.msra.mxu0 %v259
    %299 = vmatprep.subr.bf16.mxu0 0
    %300 = vmatpush1.bf16.msra.mxu0 %v260
    %301 = vmatprep.subr.bf16.mxu0 0
    %302 = vmatpush1.bf16.msra.mxu0 %v261
    %303 = vmatprep.subr.bf16.mxu0 0
    %304 = vmatpush1.bf16.msra.mxu0 %v262
    %305 = vmatprep.subr.bf16.mxu0 0
    %306 = vmatpush1.bf16.msra.mxu0 %v263
    %307 = vmatprep.subr.bf16.mxu0 0
    %308 = vmatpush1.bf16.msra.mxu0 %v264
    %309 = vmatprep.subr.bf16.mxu0 0
    %310 = vmatpush1.bf16.msra.mxu0 %v265
    %311 = vmatprep.subr.bf16.mxu0 0
    %312 = vmatpush1.bf16.msra.mxu0 %v266
    %313 = vmatprep.subr.bf16.mxu0 0
    %314 = vmatpush1.bf16.msra.mxu0 %v267
    %315 = vmatprep.subr.bf16.mxu0 0
    %316 = vmatpush1.bf16.msra.mxu0 %v268
    %317 = vmatprep.mubr.bf16.mxu0 %v149
    %318 = vmatmul.mubr.bf16.gmra.mrb[0].mxu0 %v148
    %v319 = vpop.f32.mrb[0].mxu0
    %v320 = vadd.f32 %v187, %v319
    %v321 = vpop.f32.mrb[0].mxu0
    %v322 = vpop.f32.mrb[0].mxu0
    %v323 = vadd.f32 %v187, %v322
    %v324 = vpop.f32.mrb[0].mxu0
    %325 = vdwg.mxu0
    %v326 = vld [vmem:[%s5] sm:$0x1]
    %v327 = vld [vmem:[%s6] sm:$0x1]
    %328 = vadd.xlane.f32.xlu0 %v320
    %v329 = vpop.xlane.xlu0 %328
    %330 = vadd.xlane.f32.xlu0 %v323
    %v331 = vpop.xlane.xlu0 %330
    %v332 = vrcp.pop 128.0
    %v333 = vmul.f32 %v329, %v332
    %v334 = vmul.f32 %v331, %v332
    %v335 = vsub.f32 %v320, %v333
    %v336 = vsub.f32 %v323, %v334
    %v337 = vmul.f32 %v335, %v335
    %v338 = vmul.f32 %v336, %v336
    %339 = vadd.xlane.f32.xlu0 %v337
    %v340 = vpop.xlane.xlu0 %339
    %341 = vadd.xlane.f32.xlu0 %v338
    %v342 = vpop.xlane.xlu0 %341
    %v343 = vmul.f32 %v340, %v332
    %v344 = vmul.f32 %v342, %v332
    %v345 = vadd.f32 %v343, 1e-05
    %v346 = vadd.f32 %v344, 1e-05
    %v347 = vrsqrt.pop %v345
    %v348 = vrsqrt.pop %v346
    %v349 = vmul.f32 %v335, %v347
    %v350 = vmul.f32 %v336, %v348
    %v352 = vlaneseq
    %v353 = vshrl.u32 %v352, 7
    %v354 = vsub.s32 0, %v353
    %v355 = vrot.slane %v326, %v354
    %v357 = vmul.f32 %v349, %v355
    %v358 = vmul.f32 %v350, %v355
    %v360 = vlaneseq
    %v361 = vshrl.u32 %v360, 7
    %v362 = vsub.s32 0, %v361
    %v363 = vrot.slane %v327, %v362
    %v365 = vadd.f32 %v357, %v363
    %v366 = vadd.f32 %v358, %v363
    %v367 = vlaneseq
    %v368 = vshrl.u32 %v367, 7
    %vm369 = vcmp.eq.s32.totalorder %v368, 0
    %v370 = vld [vmem:[%s7] sm:$0x1]
    %vm371 = vcmp.lt.s32.totalorder %v368, 5
    %v372 = vsel %vm371, 1, 0
    %vm373 = vcmp.eq.s32.totalorder %v372, 1
    %v374 = vsel %vm373, %v365, 0.0
    %v375 = vsel %vm373, %v366, 0.0
    %v376 = vsel %vm369, 1, 0
    %vm377 = vcmp.eq.s32.totalorder %v376, 1
    %v379 = vlaneseq
    %v380 = vshrl.u32 %v379, 7
    %v381 = vsub.s32 0, %v380
    %v382 = vrot.slane %v370, %v381
    %v384 = vsel %vm377, %v382, %v374
    %v385 = vsel %vm377, %v382, %v375
    %v386 = vld [vmem:[%s8] sm:$0xff]
    %v387 = vadd.f32 %v384, %v386
    %v388 = vadd.f32 %v385, %v386
    %v389 = vlaneseq
    %v390 = vand.u32 %v389, 127
    %vm391 = vcmp.lt.s32.totalorder %v390, 5
    %v392 = vld [vmem:[%s9] sm:$0x1]
    %v393 = vld [vmem:[%s10] sm:$0x1]
    %394 = vadd.xlane.f32.xlu0 %v387
    %v395 = vpop.xlane.xlu0 %394
    %396 = vadd.xlane.f32.xlu0 %v388
    %v397 = vpop.xlane.xlu0 %396
    %v398 = vmul.f32 %v395, %v332
    %v399 = vmul.f32 %v397, %v332
    %v400 = vsub.f32 %v387, %v398
    %v401 = vsub.f32 %v388, %v399
    %v402 = vmul.f32 %v400, %v400
    %v403 = vmul.f32 %v401, %v401
    %404 = vadd.xlane.f32.xlu0 %v402
    %v405 = vpop.xlane.xlu0 %404
    %406 = vadd.xlane.f32.xlu0 %v403
    %v407 = vpop.xlane.xlu0 %406
    %v408 = vmul.f32 %v405, %v332
    %v409 = vmul.f32 %v407, %v332
    %v410 = vadd.f32 %v408, 1e-05
    %v411 = vadd.f32 %v409, 1e-05
    %v412 = vrsqrt.pop %v410
    %v413 = vrsqrt.pop %v411
    %v414 = vmul.f32 %v400, %v412
    %v415 = vmul.f32 %v401, %v413
    %v417 = vlaneseq
    %v418 = vshrl.u32 %v417, 7
    %v419 = vsub.s32 0, %v418
    %v420 = vrot.slane %v392, %v419
    %v422 = vmul.f32 %v414, %v420
    %v423 = vmul.f32 %v415, %v420
    %v425 = vlaneseq
    %v426 = vshrl.u32 %v425, 7
    %v427 = vsub.s32 0, %v426
    %v428 = vrot.slane %v393, %v427
    %v430 = vadd.f32 %v422, %v428
    %v431 = vadd.f32 %v423, %v428
    %v432 = vpack.c.bf16 %v431, %v430
    %v433 = vld [vmem:[%s11] sm:$0xff]
    %v434 = vld [vmem:[%s11 + $0x8] sm:$0xf]
    %v435 = vld [vmem:[%s11 + $0xc] sm:$0xff]
    %v436 = vld [vmem:[%s11 + $0x14] sm:$0xf]
    %v437 = vld [vmem:[%s11 + $0x18] sm:$0xff]
    %v438 = vld [vmem:[%s11 + $0x20] sm:$0xf]
    %v439 = vld [vmem:[%s11 + $0x24] sm:$0xff]
    %v440 = vld [vmem:[%s11 + $0x2c] sm:$0xf]
    %v441 = vld [vmem:[%s11 + $0x30] sm:$0xff]
    %v442 = vld [vmem:[%s11 + $0x38] sm:$0xf]
    %v443 = vld [vmem:[%s11 + $0x3c] sm:$0xff]
    %v444 = vld [vmem:[%s11 + $0x44] sm:$0xf]
    %v445 = vld [vmem:[%s11 + $0x48] sm:$0xff]
    %v446 = vld [vmem:[%s11 + $0x50] sm:$0xf]
    %v447 = vld [vmem:[%s11 + $0x54] sm:$0xff]
    %v448 = vld [vmem:[%s11 + $0x5c] sm:$0xf]
    %v449 = vld [vmem:[%s11 + $0x60] sm:$0xff]
    %v450 = vld [vmem:[%s11 + $0x68] sm:$0xf]
    %v451 = vld [vmem:[%s11 + $0x6c] sm:$0xff]
    %v452 = vld [vmem:[%s11 + $0x74] sm:$0xf]
    %v453 = vld [vmem:[%s11 + $0x78] sm:$0xff]
    %v454 = vld [vmem:[%s11 + $0x80] sm:$0xf]
    %v455 = vld [vmem:[%s11 + $0x84] sm:$0xff]
    %v456 = vld [vmem:[%s11 + $0x8c] sm:$0xf]
    %v457 = vld [vmem:[%s11 + $0x90] sm:$0xff]
    %v458 = vld [vmem:[%s11 + $0x98] sm:$0xf]
    %v459 = vld [vmem:[%s11 + $0x9c] sm:$0xff]
    %v460 = vld [vmem:[%s11 + $0xa4] sm:$0xf]
    %v461 = vld [vmem:[%s11 + $0xa8] sm:$0xff]
    %v462 = vld [vmem:[%s11 + $0xb0] sm:$0xf]
    %v463 = vld [vmem:[%s11 + $0xb4] sm:$0xff]
    %v464 = vld [vmem:[%s11 + $0xbc] sm:$0xf]
    %v497 = vunpack.c.l.b16 %v433
    %v498 = vunpack.c.h.b16 %v433
    %v499 = vunpack.c.l.b16 %v434
    %v500 = vunpack.c.l.b16 %v435
    %v501 = vunpack.c.h.b16 %v435
    %v502 = vunpack.c.l.b16 %v436
    %v503 = vunpack.c.l.b16 %v437
    %v504 = vunpack.c.h.b16 %v437
    %v505 = vunpack.c.l.b16 %v438
    %v506 = vunpack.c.l.b16 %v439
    %v507 = vunpack.c.h.b16 %v439
    %v508 = vunpack.c.l.b16 %v440
    %v509 = vunpack.c.l.b16 %v441
    %v510 = vunpack.c.h.b16 %v441
    %v511 = vunpack.c.l.b16 %v442
    %v512 = vunpack.c.l.b16 %v443
    %v513 = vunpack.c.h.b16 %v443
    %v514 = vunpack.c.l.b16 %v444
    %v515 = vunpack.c.l.b16 %v445
    %v516 = vunpack.c.h.b16 %v445
    %v517 = vunpack.c.l.b16 %v446
    %v518 = vunpack.c.l.b16 %v447
    %v519 = vunpack.c.h.b16 %v447
    %v520 = vunpack.c.l.b16 %v448
    %v521 = vunpack.c.l.b16 %v449
    %v522 = vunpack.c.h.b16 %v449
    %v523 = vunpack.c.l.b16 %v450
    %v524 = vunpack.c.l.b16 %v451
    %v525 = vunpack.c.h.b16 %v451
    %v526 = vunpack.c.l.b16 %v452
    %v527 = vunpack.c.l.b16 %v453
    %v528 = vunpack.c.h.b16 %v453
    %v529 = vunpack.c.l.b16 %v454
    %v530 = vunpack.c.l.b16 %v455
    %v531 = vunpack.c.h.b16 %v455
    %v532 = vunpack.c.l.b16 %v456
    %v533 = vunpack.c.l.b16 %v457
    %v534 = vunpack.c.h.b16 %v457
    %v535 = vunpack.c.l.b16 %v458
    %v536 = vunpack.c.l.b16 %v459
    %v537 = vunpack.c.h.b16 %v459
    %v538 = vunpack.c.l.b16 %v460
    %v539 = vunpack.c.l.b16 %v461
    %v540 = vunpack.c.h.b16 %v461
    %v541 = vunpack.c.l.b16 %v462
    %v542 = vunpack.c.l.b16 %v463
    %v543 = vunpack.c.h.b16 %v463
    %v544 = vunpack.c.l.b16 %v464
    %v545 = vpack.c.b16 %v500, %v497
    %v546 = vpack.c.b16 %v501, %v498
    %v547 = vpack.c.b16 %v502, %v499
    %v548 = vpack.c.b16 %v506, %v503
    %v549 = vpack.c.b16 %v507, %v504
    %v550 = vpack.c.b16 %v508, %v505
    %v551 = vpack.c.b16 %v512, %v509
    %v552 = vpack.c.b16 %v513, %v510
    %v553 = vpack.c.b16 %v514, %v511
    %v554 = vpack.c.b16 %v518, %v515
    %v555 = vpack.c.b16 %v519, %v516
    %v556 = vpack.c.b16 %v520, %v517
    %v557 = vpack.c.b16 %v524, %v521
    %v558 = vpack.c.b16 %v525, %v522
    %v559 = vpack.c.b16 %v526, %v523
    %v560 = vpack.c.b16 %v530, %v527
    %v561 = vpack.c.b16 %v531, %v528
    %v562 = vpack.c.b16 %v532, %v529
    %v563 = vpack.c.b16 %v536, %v533
    %v564 = vpack.c.b16 %v537, %v534
    %v565 = vpack.c.b16 %v538, %v535
    %v566 = vpack.c.b16 %v542, %v539
    %v567 = vpack.c.b16 %v543, %v540
    %v568 = vpack.c.b16 %v544, %v541
    %593 = vmatprep.subr.bf16.mxu0 %v546
    %594 = vmatpush1.bf16.msra.mxu0 %v545
    %595 = vmatprep.subr.bf16.mxu0 %v549
    %596 = vmatpush1.bf16.msra.mxu0 %v548
    %597 = vmatprep.subr.bf16.mxu0 %v552
    %598 = vmatpush1.bf16.msra.mxu0 %v551
    %599 = vmatprep.subr.bf16.mxu0 %v555
    %600 = vmatpush1.bf16.msra.mxu0 %v554
    %601 = vmatprep.subr.bf16.mxu0 %v558
    %602 = vmatpush1.bf16.msra.mxu0 %v557
    %603 = vmatprep.subr.bf16.mxu0 %v561
    %604 = vmatpush1.bf16.msra.mxu0 %v560
    %605 = vmatprep.subr.bf16.mxu0 %v564
    %606 = vmatpush1.bf16.msra.mxu0 %v563
    %607 = vmatprep.subr.bf16.mxu0 %v567
    %608 = vmatpush1.bf16.msra.mxu0 %v566
    %609 = vmatprep.subr.bf16.mxu0 0
    %610 = vmatpush1.bf16.msra.mxu0 0
    %611 = vmatprep.subr.bf16.mxu0 0
    %612 = vmatpush1.bf16.msra.mxu0 0
    %613 = vmatprep.subr.bf16.mxu0 0
    %614 = vmatpush1.bf16.msra.mxu0 0
    %615 = vmatprep.subr.bf16.mxu0 0
    %616 = vmatpush1.bf16.msra.mxu0 0
    %617 = vmatprep.subr.bf16.mxu0 0
    %618 = vmatpush1.bf16.msra.mxu0 0
    %619 = vmatprep.subr.bf16.mxu0 0
    %620 = vmatpush1.bf16.msra.mxu0 0
    %621 = vmatprep.subr.bf16.mxu0 0
    %622 = vmatpush1.bf16.msra.mxu0 0
    %623 = vmatprep.subr.bf16.mxu0 0
    %624 = vmatpush1.bf16.msra.mxu0 0
    %625 = vmatprep.mubr.bf16.mxu0 0
    %626 = vmatmul.mubr.bf16.gmra.mrb[0].mxu0 %v432
    %v627 = vpop.f32.mrb[0].mxu0
    %v628 = vadd.f32 0.0, %v627
    %v629 = vpop.f32.mrb[0].mxu0
    %v630 = vadd.f32 0.0, %v629
    %v631 = vpop.f32.mrb[0].mxu0
    %v632 = vadd.f32 0.0, %v631
    %v633 = vpop.f32.mrb[0].mxu0
    %v634 = vadd.f32 0.0, %v633
    %635 = vdwg.mxu0
    %636 = vmatprep.subr.bf16.mxu0 0
    %637 = vmatpush1.bf16.msra.mxu0 %v547
    %638 = vmatprep.subr.bf16.mxu0 0
    %639 = vmatpush1.bf16.msra.mxu0 %v550
    %640 = vmatprep.subr.bf16.mxu0 0
    %641 = vmatpush1.bf16.msra.mxu0 %v553
    %642 = vmatprep.subr.bf16.mxu0 0
    %643 = vmatpush1.bf16.msra.mxu0 %v556
    %644 = vmatprep.subr.bf16.mxu0 0
    %645 = vmatpush1.bf16.msra.mxu0 %v559
    %646 = vmatprep.subr.bf16.mxu0 0
    %647 = vmatpush1.bf16.msra.mxu0 %v562
    %648 = vmatprep.subr.bf16.mxu0 0
    %649 = vmatpush1.bf16.msra.mxu0 %v565
    %650 = vmatprep.subr.bf16.mxu0 0
    %651 = vmatpush1.bf16.msra.mxu0 %v568
    %652 = vmatprep.subr.bf16.mxu0 0
    %653 = vmatpush1.bf16.msra.mxu0 0
    %654 = vmatprep.subr.bf16.mxu0 0
    %655 = vmatpush1.bf16.msra.mxu0 0
    %656 = vmatprep.subr.bf16.mxu0 0
    %657 = vmatpush1.bf16.msra.mxu0 0
    %658 = vmatprep.subr.bf16.mxu0 0
    %659 = vmatpush1.bf16.msra.mxu0 0
    %660 = vmatprep.subr.bf16.mxu0 0
    %661 = vmatpush1.bf16.msra.mxu0 0
    %662 = vmatprep.subr.bf16.mxu0 0
    %663 = vmatpush1.bf16.msra.mxu0 0
    %664 = vmatprep.subr.bf16.mxu0 0
    %665 = vmatpush1.bf16.msra.mxu0 0
    %666 = vmatprep.subr.bf16.mxu0 0
    %667 = vmatpush1.bf16.msra.mxu0 0
    %668 = vmatprep.mubr.bf16.mxu0 0
    %669 = vmatmul.mubr.bf16.gmra.mrb[0].mxu0 %v432
    %v670 = vpop.f32.mrb[0].mxu0
    %v671 = vadd.f32 0.0, %v670
    %v672 = vpop.f32.mrb[0].mxu0
    %v673 = vpop.f32.mrb[0].mxu0
    %v674 = vadd.f32 0.0, %v673
    %v675 = vpop.f32.mrb[0].mxu0
    %676 = vdwg.mxu0
    %679 = vrot.lane.b32.xlu0 %v628, 64
    %v680 = vpop.permute.xlu0 %679
    %681 = vrot.lane.b32.xlu0 %v632, 64
    %v682 = vpop.permute.xlu0 %681
    %v685 = vcombine.high %v628, 0.0
    %v687 = vunpack.c.l.s4 1983009808
    %v688 = vunpack.c.0.s8 %v687
    %v689 = vlaneseq
    %v690 = vshrl.u32 %v689, 7
    %v691 = vsub.s32 %v688, %v690
    %v692 = vrot.slane %v628, %v691
    %v694 = vunpack.c.l.s4 1983009808
    %v695 = vunpack.c.0.s8 %v694
    %v696 = vlaneseq
    %v697 = vshrl.u32 %v696, 7
    %v698 = vsub.s32 %v695, %v697
    %v699 = vrot.slane %v685, %v698
    %v700 = vcombine.high %v680, 0.0
    %v702 = vunpack.c.l.s4 1983009808
    %v703 = vunpack.c.0.s8 %v702
    %v704 = vlaneseq
    %v705 = vshrl.u32 %v704, 7
    %v706 = vsub.s32 %v703, %v705
    %v707 = vrot.slane %v680, %v706
    %v709 = vunpack.c.l.s4 1983009808
    %v710 = vunpack.c.0.s8 %v709
    %v711 = vlaneseq
    %v712 = vshrl.u32 %v711, 7
    %v713 = vsub.s32 %v710, %v712
    %v714 = vrot.slane %v700, %v713
    %v715 = vcombine.low %v692, %v707
    %v716 = vcombine.high %v692, %v707
    %v718 = vunpack.c.l.s4 1934713408
    %v719 = vunpack.c.0.s8 %v718
    %v720 = vlaneseq
    %v721 = vshrl.u32 %v720, 7
    %v722 = vsub.s32 %v719, %v721
    %v723 = vrot.slane %v715, %v722
    %v725 = vunpack.c.l.s4 1934713408
    %v726 = vunpack.c.0.s8 %v725
    %v727 = vlaneseq
    %v728 = vshrl.u32 %v727, 7
    %v729 = vsub.s32 %v726, %v728
    %v730 = vrot.slane %v716, %v729
    %v731 = vcombine.low %v699, %v714
    %v732 = vcombine.high %v699, %v714
    %v734 = vunpack.c.l.s4 1934713408
    %v735 = vunpack.c.0.s8 %v734
    %v736 = vlaneseq
    %v737 = vshrl.u32 %v736, 7
    %v738 = vsub.s32 %v735, %v737
    %v739 = vrot.slane %v731, %v738
    %v741 = vunpack.c.l.s4 1934713408
    %v742 = vunpack.c.0.s8 %v741
    %v743 = vlaneseq
    %v744 = vshrl.u32 %v743, 7
    %v745 = vsub.s32 %v742, %v744
    %v746 = vrot.slane %v732, %v745
    %v747 = vcombine.high %v723, 0.0
    %v748 = vcombine.high %v730, 0.0
    %v749 = vcombine.high %v739, 0.0
    %v750 = vcombine.high %v746, 0.0
    %v751 = vcombine.high %v632, 0.0
    %v753 = vunpack.c.l.s4 1983009808
    %v754 = vunpack.c.0.s8 %v753
    %v755 = vlaneseq
    %v756 = vshrl.u32 %v755, 7
    %v757 = vsub.s32 %v754, %v756
    %v758 = vrot.slane %v632, %v757
    %v760 = vunpack.c.l.s4 1983009808
    %v761 = vunpack.c.0.s8 %v760
    %v762 = vlaneseq
    %v763 = vshrl.u32 %v762, 7
    %v764 = vsub.s32 %v761, %v763
    %v765 = vrot.slane %v751, %v764
    %v766 = vcombine.high %v682, 0.0
    %v768 = vunpack.c.l.s4 1983009808
    %v769 = vunpack.c.0.s8 %v768
    %v770 = vlaneseq
    %v771 = vshrl.u32 %v770, 7
    %v772 = vsub.s32 %v769, %v771
    %v773 = vrot.slane %v682, %v772
    %v775 = vunpack.c.l.s4 1983009808
    %v776 = vunpack.c.0.s8 %v775
    %v777 = vlaneseq
    %v778 = vshrl.u32 %v777, 7
    %v779 = vsub.s32 %v776, %v778
    %v780 = vrot.slane %v766, %v779
    %v781 = vcombine.low %v758, %v773
    %v782 = vcombine.high %v758, %v773
    %v784 = vunpack.c.l.s4 1934713408
    %v785 = vunpack.c.0.s8 %v784
    %v786 = vlaneseq
    %v787 = vshrl.u32 %v786, 7
    %v788 = vsub.s32 %v785, %v787
    %v789 = vrot.slane %v781, %v788
    %v791 = vunpack.c.l.s4 1934713408
    %v792 = vunpack.c.0.s8 %v791
    %v793 = vlaneseq
    %v794 = vshrl.u32 %v793, 7
    %v795 = vsub.s32 %v792, %v794
    %v796 = vrot.slane %v782, %v795
    %v797 = vcombine.low %v765, %v780
    %v798 = vcombine.high %v765, %v780
    %v800 = vunpack.c.l.s4 1934713408
    %v801 = vunpack.c.0.s8 %v800
    %v802 = vlaneseq
    %v803 = vshrl.u32 %v802, 7
    %v804 = vsub.s32 %v801, %v803
    %v805 = vrot.slane %v797, %v804
    %v807 = vunpack.c.l.s4 1934713408
    %v808 = vunpack.c.0.s8 %v807
    %v809 = vlaneseq
    %v810 = vshrl.u32 %v809, 7
    %v811 = vsub.s32 %v808, %v810
    %v812 = vrot.slane %v798, %v811
    %v813 = vcombine.high %v789, 0.0
    %v814 = vcombine.high %v796, 0.0
    %v815 = vcombine.high %v805, 0.0
    %v816 = vcombine.high %v812, 0.0
    %v817 = vcombine.low %v723, %v730
    %v819 = vunpack.c.l.s4 1983009808
    %v820 = vunpack.c.0.s8 %v819
    %v821 = vlaneseq
    %v822 = vshrl.u32 %v821, 7
    %v823 = vsub.s32 %v820, %v822
    %v824 = vrot.slane %v817, %v823
    %v825 = vcombine.low %v747, %v748
    %v827 = vunpack.c.l.s4 1983009808
    %v828 = vunpack.c.0.s8 %v827
    %v829 = vlaneseq
    %v830 = vshrl.u32 %v829, 7
    %v831 = vsub.s32 %v828, %v830
    %v832 = vrot.slane %v825, %v831
    %v833 = vcombine.low %v739, %v746
    %v835 = vunpack.c.l.s4 1983009808
    %v836 = vunpack.c.0.s8 %v835
    %v837 = vlaneseq
    %v838 = vshrl.u32 %v837, 7
    %v839 = vsub.s32 %v836, %v838
    %v840 = vrot.slane %v833, %v839
    %v841 = vcombine.low %v749, %v750
    %v843 = vunpack.c.l.s4 1983009808
    %v844 = vunpack.c.0.s8 %v843
    %v845 = vlaneseq
    %v846 = vshrl.u32 %v845, 7
    %v847 = vsub.s32 %v844, %v846
    %v848 = vrot.slane %v841, %v847
    %v849 = vcombine.low %v824, %v832
    %v851 = vunpack.c.l.s4 1934713408
    %v852 = vunpack.c.0.s8 %v851
    %v853 = vlaneseq
    %v854 = vshrl.u32 %v853, 7
    %v855 = vsub.s32 %v852, %v854
    %v856 = vrot.slane %v849, %v855
    %v857 = vcombine.low %v840, %v848
    %v859 = vunpack.c.l.s4 1934713408
    %v860 = vunpack.c.0.s8 %v859
    %v861 = vlaneseq
    %v862 = vshrl.u32 %v861, 7
    %v863 = vsub.s32 %v860, %v862
    %v864 = vrot.slane %v857, %v863
    %v865 = vcombine.low %v856, %v864
    %v866 = vcombine.high %v856, %v864
    %v867 = vcombine.low %v789, %v796
    %v869 = vunpack.c.l.s4 1983009808
    %v870 = vunpack.c.0.s8 %v869
    %v871 = vlaneseq
    %v872 = vshrl.u32 %v871, 7
    %v873 = vsub.s32 %v870, %v872
    %v874 = vrot.slane %v867, %v873
    %v875 = vcombine.low %v813, %v814
    %v877 = vunpack.c.l.s4 1983009808
    %v878 = vunpack.c.0.s8 %v877
    %v879 = vlaneseq
    %v880 = vshrl.u32 %v879, 7
    %v881 = vsub.s32 %v878, %v880
    %v882 = vrot.slane %v875, %v881
    %v883 = vcombine.low %v805, %v812
    %v885 = vunpack.c.l.s4 1983009808
    %v886 = vunpack.c.0.s8 %v885
    %v887 = vlaneseq
    %v888 = vshrl.u32 %v887, 7
    %v889 = vsub.s32 %v886, %v888
    %v890 = vrot.slane %v883, %v889
    %v891 = vcombine.low %v815, %v816
    %v893 = vunpack.c.l.s4 1983009808
    %v894 = vunpack.c.0.s8 %v893
    %v895 = vlaneseq
    %v896 = vshrl.u32 %v895, 7
    %v897 = vsub.s32 %v894, %v896
    %v898 = vrot.slane %v891, %v897
    %v899 = vcombine.low %v874, %v882
    %v901 = vunpack.c.l.s4 1934713408
    %v902 = vunpack.c.0.s8 %v901
    %v903 = vlaneseq
    %v904 = vshrl.u32 %v903, 7
    %v905 = vsub.s32 %v902, %v904
    %v906 = vrot.slane %v899, %v905
    %v907 = vcombine.low %v890, %v898
    %v909 = vunpack.c.l.s4 1934713408
    %v910 = vunpack.c.0.s8 %v909
    %v911 = vlaneseq
    %v912 = vshrl.u32 %v911, 7
    %v913 = vsub.s32 %v910, %v912
    %v914 = vrot.slane %v907, %v913
    %v915 = vcombine.low %v906, %v914
    %v916 = vcombine.high %v906, %v914
    %v917 = vmul.f32 %v865, 0.125
    %v918 = vmul.f32 %v866, 0.125
    %v919 = vmul.f32 %v915, 0.125
    %v920 = vmul.f32 %v916, 0.125
    %923 = vrot.lane.b32.xlu0 %v630, 64
    %v924 = vpop.permute.xlu0 %923
    %925 = vrot.lane.b32.xlu0 %v634, 64
    %v926 = vpop.permute.xlu0 %925
    %v929 = vcombine.high %v630, 0.0
    %v931 = vunpack.c.l.s4 1983009808
    %v932 = vunpack.c.0.s8 %v931
    %v933 = vlaneseq
    %v934 = vshrl.u32 %v933, 7
    %v935 = vsub.s32 %v932, %v934
    %v936 = vrot.slane %v630, %v935
    %v938 = vunpack.c.l.s4 1983009808
    %v939 = vunpack.c.0.s8 %v938
    %v940 = vlaneseq
    %v941 = vshrl.u32 %v940, 7
    %v942 = vsub.s32 %v939, %v941
    %v943 = vrot.slane %v929, %v942
    %v944 = vcombine.high %v924, 0.0
    %v946 = vunpack.c.l.s4 1983009808
    %v947 = vunpack.c.0.s8 %v946
    %v948 = vlaneseq
    %v949 = vshrl.u32 %v948, 7
    %v950 = vsub.s32 %v947, %v949
    %v951 = vrot.slane %v924, %v950
    %v953 = vunpack.c.l.s4 1983009808
    %v954 = vunpack.c.0.s8 %v953
    %v955 = vlaneseq
    %v956 = vshrl.u32 %v955, 7
    %v957 = vsub.s32 %v954, %v956
    %v958 = vrot.slane %v944, %v957
    %v959 = vcombine.low %v936, %v951
    %v960 = vcombine.high %v936, %v951
    %v962 = vunpack.c.l.s4 1934713408
    %v963 = vunpack.c.0.s8 %v962
    %v964 = vlaneseq
    %v965 = vshrl.u32 %v964, 7
    %v966 = vsub.s32 %v963, %v965
    %v967 = vrot.slane %v959, %v966
    %v969 = vunpack.c.l.s4 1934713408
    %v970 = vunpack.c.0.s8 %v969
    %v971 = vlaneseq
    %v972 = vshrl.u32 %v971, 7
    %v973 = vsub.s32 %v970, %v972
    %v974 = vrot.slane %v960, %v973
    %v975 = vcombine.low %v943, %v958
    %v976 = vcombine.high %v943, %v958
    %v978 = vunpack.c.l.s4 1934713408
    %v979 = vunpack.c.0.s8 %v978
    %v980 = vlaneseq
    %v981 = vshrl.u32 %v980, 7
    %v982 = vsub.s32 %v979, %v981
    %v983 = vrot.slane %v975, %v982
    %v985 = vunpack.c.l.s4 1934713408
    %v986 = vunpack.c.0.s8 %v985
    %v987 = vlaneseq
    %v988 = vshrl.u32 %v987, 7
    %v989 = vsub.s32 %v986, %v988
    %v990 = vrot.slane %v976, %v989
    %v991 = vcombine.high %v967, 0.0
    %v992 = vcombine.high %v974, 0.0
    %v993 = vcombine.high %v983, 0.0
    %v994 = vcombine.high %v990, 0.0
    %v995 = vcombine.high %v634, 0.0
    %v997 = vunpack.c.l.s4 1983009808
    %v998 = vunpack.c.0.s8 %v997
    %v999 = vlaneseq
    %v1000 = vshrl.u32 %v999, 7
    %v1001 = vsub.s32 %v998, %v1000
    %v1002 = vrot.slane %v634, %v1001
    %v1004 = vunpack.c.l.s4 1983009808
    %v1005 = vunpack.c.0.s8 %v1004
    %v1006 = vlaneseq
    %v1007 = vshrl.u32 %v1006, 7
    %v1008 = vsub.s32 %v1005, %v1007
    %v1009 = vrot.slane %v995, %v1008
    %v1010 = vcombine.high %v926, 0.0
    %v1012 = vunpack.c.l.s4 1983009808
    %v1013 = vunpack.c.0.s8 %v1012
    %v1014 = vlaneseq
    %v1015 = vshrl.u32 %v1014, 7
    %v1016 = vsub.s32 %v1013, %v1015
    %v1017 = vrot.slane %v926, %v1016
    %v1019 = vunpack.c.l.s4 1983009808
    %v1020 = vunpack.c.0.s8 %v1019
    %v1021 = vlaneseq
    %v1022 = vshrl.u32 %v1021, 7
    %v1023 = vsub.s32 %v1020, %v1022
    %v1024 = vrot.slane %v1010, %v1023
    %v1025 = vcombine.low %v1002, %v1017
    %v1026 = vcombine.high %v1002, %v1017
    %v1028 = vunpack.c.l.s4 1934713408
    %v1029 = vunpack.c.0.s8 %v1028
    %v1030 = vlaneseq
    %v1031 = vshrl.u32 %v1030, 7
    %v1032 = vsub.s32 %v1029, %v1031
    %v1033 = vrot.slane %v1025, %v1032
    %v1035 = vunpack.c.l.s4 1934713408
    %v1036 = vunpack.c.0.s8 %v1035
    %v1037 = vlaneseq
    %v1038 = vshrl.u32 %v1037, 7
    %v1039 = vsub.s32 %v1036, %v1038
    %v1040 = vrot.slane %v1026, %v1039
    %v1041 = vcombine.low %v1009, %v1024
    %v1042 = vcombine.high %v1009, %v1024
    %v1044 = vunpack.c.l.s4 1934713408
    %v1045 = vunpack.c.0.s8 %v1044
    %v1046 = vlaneseq
    %v1047 = vshrl.u32 %v1046, 7
    %v1048 = vsub.s32 %v1045, %v1047
    %v1049 = vrot.slane %v1041, %v1048
    %v1051 = vunpack.c.l.s4 1934713408
    %v1052 = vunpack.c.0.s8 %v1051
    %v1053 = vlaneseq
    %v1054 = vshrl.u32 %v1053, 7
    %v1055 = vsub.s32 %v1052, %v1054
    %v1056 = vrot.slane %v1042, %v1055
    %v1057 = vcombine.high %v1033, 0.0
    %v1058 = vcombine.high %v1040, 0.0
    %v1059 = vcombine.high %v1049, 0.0
    %v1060 = vcombine.high %v1056, 0.0
    %v1061 = vcombine.low %v967, %v974
    %v1063 = vunpack.c.l.s4 1983009808
    %v1064 = vunpack.c.0.s8 %v1063
    %v1065 = vlaneseq
    %v1066 = vshrl.u32 %v1065, 7
    %v1067 = vsub.s32 %v1064, %v1066
    %v1068 = vrot.slane %v1061, %v1067
    %v1069 = vcombine.low %v991, %v992
    %v1071 = vunpack.c.l.s4 1983009808
    %v1072 = vunpack.c.0.s8 %v1071
    %v1073 = vlaneseq
    %v1074 = vshrl.u32 %v1073, 7
    %v1075 = vsub.s32 %v1072, %v1074
    %v1076 = vrot.slane %v1069, %v1075
    %v1077 = vcombine.low %v983, %v990
    %v1079 = vunpack.c.l.s4 1983009808
    %v1080 = vunpack.c.0.s8 %v1079
    %v1081 = vlaneseq
    %v1082 = vshrl.u32 %v1081, 7
    %v1083 = vsub.s32 %v1080, %v1082
    %v1084 = vrot.slane %v1077, %v1083
    %v1085 = vcombine.low %v993, %v994
    %v1087 = vunpack.c.l.s4 1983009808
    %v1088 = vunpack.c.0.s8 %v1087
    %v1089 = vlaneseq
    %v1090 = vshrl.u32 %v1089, 7
    %v1091 = vsub.s32 %v1088, %v1090
    %v1092 = vrot.slane %v1085, %v1091
    %v1093 = vcombine.low %v1068, %v1076
    %v1095 = vunpack.c.l.s4 1934713408
    %v1096 = vunpack.c.0.s8 %v1095
    %v1097 = vlaneseq
    %v1098 = vshrl.u32 %v1097, 7
    %v1099 = vsub.s32 %v1096, %v1098
    %v1100 = vrot.slane %v1093, %v1099
    %v1101 = vcombine.low %v1084, %v1092
    %v1103 = vunpack.c.l.s4 1934713408
    %v1104 = vunpack.c.0.s8 %v1103
    %v1105 = vlaneseq
    %v1106 = vshrl.u32 %v1105, 7
    %v1107 = vsub.s32 %v1104, %v1106
    %v1108 = vrot.slane %v1101, %v1107
    %v1109 = vcombine.low %v1100, %v1108
    %v1110 = vcombine.high %v1100, %v1108
    %v1111 = vcombine.low %v1033, %v1040
    %v1113 = vunpack.c.l.s4 1983009808
    %v1114 = vunpack.c.0.s8 %v1113
    %v1115 = vlaneseq
    %v1116 = vshrl.u32 %v1115, 7
    %v1117 = vsub.s32 %v1114, %v1116
    %v1118 = vrot.slane %v1111, %v1117
    %v1119 = vcombine.low %v1057, %v1058
    %v1121 = vunpack.c.l.s4 1983009808
    %v1122 = vunpack.c.0.s8 %v1121
    %v1123 = vlaneseq
    %v1124 = vshrl.u32 %v1123, 7
    %v1125 = vsub.s32 %v1122, %v1124
    %v1126 = vrot.slane %v1119, %v1125
    %v1127 = vcombine.low %v1049, %v1056
    %v1129 = vunpack.c.l.s4 1983009808
    %v1130 = vunpack.c.0.s8 %v1129
    %v1131 = vlaneseq
    %v1132 = vshrl.u32 %v1131, 7
    %v1133 = vsub.s32 %v1130, %v1132
    %v1134 = vrot.slane %v1127, %v1133
    %v1135 = vcombine.low %v1059, %v1060
    %v1137 = vunpack.c.l.s4 1983009808
    %v1138 = vunpack.c.0.s8 %v1137
    %v1139 = vlaneseq
    %v1140 = vshrl.u32 %v1139, 7
    %v1141 = vsub.s32 %v1138, %v1140
    %v1142 = vrot.slane %v1135, %v1141
    %v1143 = vcombine.low %v1118, %v1126
    %v1145 = vunpack.c.l.s4 1934713408
    %v1146 = vunpack.c.0.s8 %v1145
    %v1147 = vlaneseq
    %v1148 = vshrl.u32 %v1147, 7
    %v1149 = vsub.s32 %v1146, %v1148
    %v1150 = vrot.slane %v1143, %v1149
    %v1151 = vcombine.low %v1134, %v1142
    %v1153 = vunpack.c.l.s4 1934713408
    %v1154 = vunpack.c.0.s8 %v1153
    %v1155 = vlaneseq
    %v1156 = vshrl.u32 %v1155, 7
    %v1157 = vsub.s32 %v1154, %v1156
    %v1158 = vrot.slane %v1151, %v1157
    %v1159 = vcombine.low %v1150, %v1158
    %v1160 = vcombine.high %v1150, %v1158
    %1163 = vrot.lane.b32.xlu0 %v671, 64
    %v1164 = vpop.permute.xlu0 %1163
    %1165 = vrot.lane.b32.xlu0 %v674, 64
    %v1166 = vpop.permute.xlu0 %1165
    %v1169 = vcombine.high %v671, 0.0
    %v1171 = vunpack.c.l.s4 1983009808
    %v1172 = vunpack.c.0.s8 %v1171
    %v1173 = vlaneseq
    %v1174 = vshrl.u32 %v1173, 7
    %v1175 = vsub.s32 %v1172, %v1174
    %v1176 = vrot.slane %v671, %v1175
    %v1178 = vunpack.c.l.s4 1983009808
    %v1179 = vunpack.c.0.s8 %v1178
    %v1180 = vlaneseq
    %v1181 = vshrl.u32 %v1180, 7
    %v1182 = vsub.s32 %v1179, %v1181
    %v1183 = vrot.slane %v1169, %v1182
    %v1184 = vcombine.high %v1164, 0.0
    %v1186 = vunpack.c.l.s4 1983009808
    %v1187 = vunpack.c.0.s8 %v1186
    %v1188 = vlaneseq
    %v1189 = vshrl.u32 %v1188, 7
    %v1190 = vsub.s32 %v1187, %v1189
    %v1191 = vrot.slane %v1164, %v1190
    %v1193 = vunpack.c.l.s4 1983009808
    %v1194 = vunpack.c.0.s8 %v1193
    %v1195 = vlaneseq
    %v1196 = vshrl.u32 %v1195, 7
    %v1197 = vsub.s32 %v1194, %v1196
    %v1198 = vrot.slane %v1184, %v1197
    %v1199 = vcombine.low %v1176, %v1191
    %v1200 = vcombine.high %v1176, %v1191
    %v1202 = vunpack.c.l.s4 1934713408
    %v1203 = vunpack.c.0.s8 %v1202
    %v1204 = vlaneseq
    %v1205 = vshrl.u32 %v1204, 7
    %v1206 = vsub.s32 %v1203, %v1205
    %v1207 = vrot.slane %v1199, %v1206
    %v1209 = vunpack.c.l.s4 1934713408
    %v1210 = vunpack.c.0.s8 %v1209
    %v1211 = vlaneseq
    %v1212 = vshrl.u32 %v1211, 7
    %v1213 = vsub.s32 %v1210, %v1212
    %v1214 = vrot.slane %v1200, %v1213
    %v1215 = vcombine.low %v1183, %v1198
    %v1216 = vcombine.high %v1183, %v1198
    %v1218 = vunpack.c.l.s4 1934713408
    %v1219 = vunpack.c.0.s8 %v1218
    %v1220 = vlaneseq
    %v1221 = vshrl.u32 %v1220, 7
    %v1222 = vsub.s32 %v1219, %v1221
    %v1223 = vrot.slane %v1215, %v1222
    %v1225 = vunpack.c.l.s4 1934713408
    %v1226 = vunpack.c.0.s8 %v1225
    %v1227 = vlaneseq
    %v1228 = vshrl.u32 %v1227, 7
    %v1229 = vsub.s32 %v1226, %v1228
    %v1230 = vrot.slane %v1216, %v1229
    %v1231 = vcombine.high %v1207, 0.0
    %v1232 = vcombine.high %v1214, 0.0
    %v1233 = vcombine.high %v1223, 0.0
    %v1234 = vcombine.high %v1230, 0.0
    %v1235 = vcombine.high %v674, 0.0
    %v1237 = vunpack.c.l.s4 1983009808
    %v1238 = vunpack.c.0.s8 %v1237
    %v1239 = vlaneseq
    %v1240 = vshrl.u32 %v1239, 7
    %v1241 = vsub.s32 %v1238, %v1240
    %v1242 = vrot.slane %v674, %v1241
    %v1244 = vunpack.c.l.s4 1983009808
    %v1245 = vunpack.c.0.s8 %v1244
    %v1246 = vlaneseq
    %v1247 = vshrl.u32 %v1246, 7
    %v1248 = vsub.s32 %v1245, %v1247
    %v1249 = vrot.slane %v1235, %v1248
    %v1250 = vcombine.high %v1166, 0.0
    %v1252 = vunpack.c.l.s4 1983009808
    %v1253 = vunpack.c.0.s8 %v1252
    %v1254 = vlaneseq
    %v1255 = vshrl.u32 %v1254, 7
    %v1256 = vsub.s32 %v1253, %v1255
    %v1257 = vrot.slane %v1166, %v1256
    %v1259 = vunpack.c.l.s4 1983009808
    %v1260 = vunpack.c.0.s8 %v1259
    %v1261 = vlaneseq
    %v1262 = vshrl.u32 %v1261, 7
    %v1263 = vsub.s32 %v1260, %v1262
    %v1264 = vrot.slane %v1250, %v1263
    %v1265 = vcombine.low %v1242, %v1257
    %v1266 = vcombine.high %v1242, %v1257
    %v1268 = vunpack.c.l.s4 1934713408
    %v1269 = vunpack.c.0.s8 %v1268
    %v1270 = vlaneseq
    %v1271 = vshrl.u32 %v1270, 7
    %v1272 = vsub.s32 %v1269, %v1271
    %v1273 = vrot.slane %v1265, %v1272
    %v1275 = vunpack.c.l.s4 1934713408
    %v1276 = vunpack.c.0.s8 %v1275
    %v1277 = vlaneseq
    %v1278 = vshrl.u32 %v1277, 7
    %v1279 = vsub.s32 %v1276, %v1278
    %v1280 = vrot.slane %v1266, %v1279
    %v1281 = vcombine.low %v1249, %v1264
    %v1282 = vcombine.high %v1249, %v1264
    %v1284 = vunpack.c.l.s4 1934713408
    %v1285 = vunpack.c.0.s8 %v1284
    %v1286 = vlaneseq
    %v1287 = vshrl.u32 %v1286, 7
    %v1288 = vsub.s32 %v1285, %v1287
    %v1289 = vrot.slane %v1281, %v1288
    %v1291 = vunpack.c.l.s4 1934713408
    %v1292 = vunpack.c.0.s8 %v1291
    %v1293 = vlaneseq
    %v1294 = vshrl.u32 %v1293, 7
    %v1295 = vsub.s32 %v1292, %v1294
    %v1296 = vrot.slane %v1282, %v1295
    %v1297 = vcombine.high %v1273, 0.0
    %v1298 = vcombine.high %v1280, 0.0
    %v1299 = vcombine.high %v1289, 0.0
    %v1300 = vcombine.high %v1296, 0.0
    %v1301 = vcombine.low %v1207, %v1214
    %v1303 = vunpack.c.l.s4 1983009808
    %v1304 = vunpack.c.0.s8 %v1303
    %v1305 = vlaneseq
    %v1306 = vshrl.u32 %v1305, 7
    %v1307 = vsub.s32 %v1304, %v1306
    %v1308 = vrot.slane %v1301, %v1307
    %v1309 = vcombine.low %v1231, %v1232
    %v1311 = vunpack.c.l.s4 1983009808
    %v1312 = vunpack.c.0.s8 %v1311
    %v1313 = vlaneseq
    %v1314 = vshrl.u32 %v1313, 7
    %v1315 = vsub.s32 %v1312, %v1314
    %v1316 = vrot.slane %v1309, %v1315
    %v1317 = vcombine.low %v1223, %v1230
    %v1319 = vunpack.c.l.s4 1983009808
    %v1320 = vunpack.c.0.s8 %v1319
    %v1321 = vlaneseq
    %v1322 = vshrl.u32 %v1321, 7
    %v1323 = vsub.s32 %v1320, %v1322
    %v1324 = vrot.slane %v1317, %v1323
    %v1325 = vcombine.low %v1233, %v1234
    %v1327 = vunpack.c.l.s4 1983009808
    %v1328 = vunpack.c.0.s8 %v1327
    %v1329 = vlaneseq
    %v1330 = vshrl.u32 %v1329, 7
    %v1331 = vsub.s32 %v1328, %v1330
    %v1332 = vrot.slane %v1325, %v1331
    %v1333 = vcombine.low %v1308, %v1316
    %v1335 = vunpack.c.l.s4 1934713408
    %v1336 = vunpack.c.0.s8 %v1335
    %v1337 = vlaneseq
    %v1338 = vshrl.u32 %v1337, 7
    %v1339 = vsub.s32 %v1336, %v1338
    %v1340 = vrot.slane %v1333, %v1339
    %v1341 = vcombine.low %v1324, %v1332
    %v1343 = vunpack.c.l.s4 1934713408
    %v1344 = vunpack.c.0.s8 %v1343
    %v1345 = vlaneseq
    %v1346 = vshrl.u32 %v1345, 7
    %v1347 = vsub.s32 %v1344, %v1346
    %v1348 = vrot.slane %v1341, %v1347
    %v1349 = vcombine.low %v1340, %v1348
    %v1350 = vcombine.high %v1340, %v1348
    %v1351 = vcombine.low %v1273, %v1280
    %v1353 = vunpack.c.l.s4 1983009808
    %v1354 = vunpack.c.0.s8 %v1353
    %v1355 = vlaneseq
    %v1356 = vshrl.u32 %v1355, 7
    %v1357 = vsub.s32 %v1354, %v1356
    %v1358 = vrot.slane %v1351, %v1357
    %v1359 = vcombine.low %v1297, %v1298
    %v1361 = vunpack.c.l.s4 1983009808
    %v1362 = vunpack.c.0.s8 %v1361
    %v1363 = vlaneseq
    %v1364 = vshrl.u32 %v1363, 7
    %v1365 = vsub.s32 %v1362, %v1364
    %v1366 = vrot.slane %v1359, %v1365
    %v1367 = vcombine.low %v1289, %v1296
    %v1369 = vunpack.c.l.s4 1983009808
    %v1370 = vunpack.c.0.s8 %v1369
    %v1371 = vlaneseq
    %v1372 = vshrl.u32 %v1371, 7
    %v1373 = vsub.s32 %v1370, %v1372
    %v1374 = vrot.slane %v1367, %v1373
    %v1375 = vcombine.low %v1299, %v1300
    %v1377 = vunpack.c.l.s4 1983009808
    %v1378 = vunpack.c.0.s8 %v1377
    %v1379 = vlaneseq
    %v1380 = vshrl.u32 %v1379, 7
    %v1381 = vsub.s32 %v1378, %v1380
    %v1382 = vrot.slane %v1375, %v1381
    %v1383 = vcombine.low %v1358, %v1366
    %v1385 = vunpack.c.l.s4 1934713408
    %v1386 = vunpack.c.0.s8 %v1385
    %v1387 = vlaneseq
    %v1388 = vshrl.u32 %v1387, 7
    %v1389 = vsub.s32 %v1386, %v1388
    %v1390 = vrot.slane %v1383, %v1389
    %v1391 = vcombine.low %v1374, %v1382
    %v1393 = vunpack.c.l.s4 1934713408
    %v1394 = vunpack.c.0.s8 %v1393
    %v1395 = vlaneseq
    %v1396 = vshrl.u32 %v1395, 7
    %v1397 = vsub.s32 %v1394, %v1396
    %v1398 = vrot.slane %v1391, %v1397
    %v1399 = vcombine.low %v1390, %v1398
    %v1400 = vcombine.high %v1390, %v1398
    %v1401 = vpack.c.bf16 %v917, %v917
    %v1402 = vpack.c.bf16 %v918, %v918
    %v1403 = vpack.c.bf16 %v919, %v919
    %v1404 = vpack.c.bf16 %v920, %v920
    %v1405 = vpack.c.bf16 %v1109, %v1109
    %v1406 = vpack.c.bf16 %v1110, %v1110
    %v1407 = vpack.c.bf16 %v1159, %v1159
    %v1408 = vpack.c.bf16 %v1160, %v1160
    %vm1409 = vcmask 523264
    %v1411 = vsel %vm1409, %v1401, 0
    %v1414 = vsel %vm1409, %v1405, 0
    %1416 = vmatprep.subr.bf16.mxu0 0
    %1417 = vmatpush1.bf16.xpose.msra.mxu0 %v1414
    %1418 = vmatprep.subr.bf16.mxu0 0
    %1419 = vmatpush1.bf16.xpose.msra.mxu0 0
    %1420 = vmatprep.subr.bf16.mxu0 0
    %1421 = vmatpush1.bf16.xpose.msra.mxu0 0
    %1422 = vmatprep.subr.bf16.mxu0 0
    %1423 = vmatpush1.bf16.xpose.msra.mxu0 0
    %1424 = vmatprep.subr.bf16.mxu0 0
    %1425 = vmatpush1.bf16.xpose.msra.mxu0 0
    %1426 = vmatprep.subr.bf16.mxu0 0
    %1427 = vmatpush1.bf16.xpose.msra.mxu0 0
    %1428 = vmatprep.subr.bf16.mxu0 0
    %1429 = vmatpush1.bf16.xpose.msra.mxu0 0
    %1430 = vmatprep.subr.bf16.mxu0 0
    %1431 = vmatpush1.bf16.xpose.msra.mxu0 0
    %1432 = vmatprep.subr.bf16.mxu0 0
    %1433 = vmatpush1.bf16.xpose.msra.mxu0 0
    %1434 = vmatprep.subr.bf16.mxu0 0
    %1435 = vmatpush1.bf16.xpose.msra.mxu0 0
    %1436 = vmatprep.subr.bf16.mxu0 0
    %1437 = vmatpush1.bf16.xpose.msra.mxu0 0
    %1438 = vmatprep.subr.bf16.mxu0 0
    %1439 = vmatpush1.bf16.xpose.msra.mxu0 0
    %1440 = vmatprep.subr.bf16.mxu0 0
    %1441 = vmatpush1.bf16.xpose.msra.mxu0 0
    %1442 = vmatprep.subr.bf16.mxu0 0
    %1443 = vmatpush1.bf16.xpose.msra.mxu0 0
    %1444 = vmatprep.subr.bf16.mxu0 0
    %1445 = vmatpush1.bf16.xpose.msra.mxu0 0
    %1446 = vmatprep.subr.bf16.mxu0 0
    %1447 = vmatpush1.bf16.xpose.msra.mxu0 0
    %1448 = vmatprep.mubr.bf16.mxu0 0
    %1449 = vmatmul.mubr.bf16.gmra.mrb[0].mxu0 %v1411
    %v1450 = vpop.f32.mrb[0].mxu0
    %v1451 = vadd.f32 0.0, %v1450
    %v1452 = vpop.f32.mrb[0].mxu0
    %v1453 = vpop.f32.mrb[0].mxu0
    %v1454 = vpop.f32.mrb[0].mxu0
    %1455 = vdwg.mxu0
    %v1457 = vsel %vm1409, %v1402, 0
    %v1460 = vsel %vm1409, %v1406, 0
    %1462 = vmatprep.subr.bf16.mxu0 0
    %1463 = vmatpush1.bf16.xpose.msra.mxu0 %v1460
    %1464 = vmatprep.subr.bf16.mxu0 0
    %1465 = vmatpush1.bf16.xpose.msra.mxu0 0
    %1466 = vmatprep.subr.bf16.mxu0 0
    %1467 = vmatpush1.bf16.xpose.msra.mxu0 0
    %1468 = vmatprep.subr.bf16.mxu0 0
    %1469 = vmatpush1.bf16.xpose.msra.mxu0 0
    %1470 = vmatprep.subr.bf16.mxu0 0
    %1471 = vmatpush1.bf16.xpose.msra.mxu0 0
    %1472 = vmatprep.subr.bf16.mxu0 0
    %1473 = vmatpush1.bf16.xpose.msra.mxu0 0
    %1474 = vmatprep.subr.bf16.mxu0 0
    %1475 = vmatpush1.bf16.xpose.msra.mxu0 0
    %1476 = vmatprep.subr.bf16.mxu0 0
    %1477 = vmatpush1.bf16.xpose.msra.mxu0 0
    %1478 = vmatprep.subr.bf16.mxu0 0
    %1479 = vmatpush1.bf16.xpose.msra.mxu0 0
    %1480 = vmatprep.subr.bf16.mxu0 0
    %1481 = vmatpush1.bf16.xpose.msra.mxu0 0
    %1482 = vmatprep.subr.bf16.mxu0 0
    %1483 = vmatpush1.bf16.xpose.msra.mxu0 0
    %1484 = vmatprep.subr.bf16.mxu0 0
    %1485 = vmatpush1.bf16.xpose.msra.mxu0 0
    %1486 = vmatprep.subr.bf16.mxu0 0
    %1487 = vmatpush1.bf16.xpose.msra.mxu0 0
    %1488 = vmatprep.subr.bf16.mxu0 0
    %1489 = vmatpush1.bf16.xpose.msra.mxu0 0
    %1490 = vmatprep.subr.bf16.mxu0 0
    %1491 = vmatpush1.bf16.xpose.msra.mxu0 0
    %1492 = vmatprep.subr.bf16.mxu0 0
    %1493 = vmatpush1.bf16.xpose.msra.mxu0 0
    %1494 = vmatprep.mubr.bf16.mxu0 0
    %1495 = vmatmul.mubr.bf16.gmra.mrb[0].mxu0 %v1457
    %v1496 = vpop.f32.mrb[0].mxu0
    %v1497 = vadd.f32 0.0, %v1496
    %v1498 = vpop.f32.mrb[0].mxu0
    %v1499 = vpop.f32.mrb[0].mxu0
    %v1500 = vpop.f32.mrb[0].mxu0
    %1501 = vdwg.mxu0
    %v1503 = vsel %vm1409, %v1403, 0
    %v1506 = vsel %vm1409, %v1407, 0
    %1508 = vmatprep.subr.bf16.mxu0 0
    %1509 = vmatpush1.bf16.xpose.msra.mxu0 %v1506
    %1510 = vmatprep.subr.bf16.mxu0 0
    %1511 = vmatpush1.bf16.xpose.msra.mxu0 0
    %1512 = vmatprep.subr.bf16.mxu0 0
    %1513 = vmatpush1.bf16.xpose.msra.mxu0 0
    %1514 = vmatprep.subr.bf16.mxu0 0
    %1515 = vmatpush1.bf16.xpose.msra.mxu0 0
    %1516 = vmatprep.subr.bf16.mxu0 0
    %1517 = vmatpush1.bf16.xpose.msra.mxu0 0
    %1518 = vmatprep.subr.bf16.mxu0 0
    %1519 = vmatpush1.bf16.xpose.msra.mxu0 0
    %1520 = vmatprep.subr.bf16.mxu0 0
    %1521 = vmatpush1.bf16.xpose.msra.mxu0 0
    %1522 = vmatprep.subr.bf16.mxu0 0
    %1523 = vmatpush1.bf16.xpose.msra.mxu0 0
    %1524 = vmatprep.subr.bf16.mxu0 0
    %1525 = vmatpush1.bf16.xpose.msra.mxu0 0
    %1526 = vmatprep.subr.bf16.mxu0 0
    %1527 = vmatpush1.bf16.xpose.msra.mxu0 0
    %1528 = vmatprep.subr.bf16.mxu0 0
    %1529 = vmatpush1.bf16.xpose.msra.mxu0 0
    %1530 = vmatprep.subr.bf16.mxu0 0
    %1531 = vmatpush1.bf16.xpose.msra.mxu0 0
    %1532 = vmatprep.subr.bf16.mxu0 0
    %1533 = vmatpush1.bf16.xpose.msra.mxu0 0
    %1534 = vmatprep.subr.bf16.mxu0 0
    %1535 = vmatpush1.bf16.xpose.msra.mxu0 0
    %1536 = vmatprep.subr.bf16.mxu0 0
    %1537 = vmatpush1.bf16.xpose.msra.mxu0 0
    %1538 = vmatprep.subr.bf16.mxu0 0
    %1539 = vmatpush1.bf16.xpose.msra.mxu0 0
    %1540 = vmatprep.mubr.bf16.mxu0 0
    %1541 = vmatmul.mubr.bf16.gmra.mrb[0].mxu0 %v1503
    %v1542 = vpop.f32.mrb[0].mxu0
    %v1543 = vadd.f32 0.0, %v1542
    %v1544 = vpop.f32.mrb[0].mxu0
    %v1545 = vpop.f32.mrb[0].mxu0
    %v1546 = vpop.f32.mrb[0].mxu0
    %1547 = vdwg.mxu0
    %v1549 = vsel %vm1409, %v1404, 0
    %v1552 = vsel %vm1409, %v1408, 0
    %1554 = vmatprep.subr.bf16.mxu0 0
    %1555 = vmatpush1.bf16.xpose.msra.mxu0 %v1552
    %1556 = vmatprep.subr.bf16.mxu0 0
    %1557 = vmatpush1.bf16.xpose.msra.mxu0 0
    %1558 = vmatprep.subr.bf16.mxu0 0
    %1559 = vmatpush1.bf16.xpose.msra.mxu0 0
    %1560 = vmatprep.subr.bf16.mxu0 0
    %1561 = vmatpush1.bf16.xpose.msra.mxu0 0
    %1562 = vmatprep.subr.bf16.mxu0 0
    %1563 = vmatpush1.bf16.xpose.msra.mxu0 0
    %1564 = vmatprep.subr.bf16.mxu0 0
    %1565 = vmatpush1.bf16.xpose.msra.mxu0 0
    %1566 = vmatprep.subr.bf16.mxu0 0
    %1567 = vmatpush1.bf16.xpose.msra.mxu0 0
    %1568 = vmatprep.subr.bf16.mxu0 0
    %1569 = vmatpush1.bf16.xpose.msra.mxu0 0
    %1570 = vmatprep.subr.bf16.mxu0 0
    %1571 = vmatpush1.bf16.xpose.msra.mxu0 0
    %1572 = vmatprep.subr.bf16.mxu0 0
    %1573 = vmatpush1.bf16.xpose.msra.mxu0 0
    %1574 = vmatprep.subr.bf16.mxu0 0
    %1575 = vmatpush1.bf16.xpose.msra.mxu0 0
    %1576 = vmatprep.subr.bf16.mxu0 0
    %1577 = vmatpush1.bf16.xpose.msra.mxu0 0
    %1578 = vmatprep.subr.bf16.mxu0 0
    %1579 = vmatpush1.bf16.xpose.msra.mxu0 0
    %1580 = vmatprep.subr.bf16.mxu0 0
    %1581 = vmatpush1.bf16.xpose.msra.mxu0 0
    %1582 = vmatprep.subr.bf16.mxu0 0
    %1583 = vmatpush1.bf16.xpose.msra.mxu0 0
    %1584 = vmatprep.subr.bf16.mxu0 0
    %1585 = vmatpush1.bf16.xpose.msra.mxu0 0
    %1586 = vmatprep.mubr.bf16.mxu0 0
    %1587 = vmatmul.mubr.bf16.gmra.mrb[0].mxu0 %v1549
    %v1588 = vpop.f32.mrb[0].mxu0
    %v1589 = vadd.f32 0.0, %v1588
    %v1590 = vpop.f32.mrb[0].mxu0
    %v1591 = vpop.f32.mrb[0].mxu0
    %v1592 = vpop.f32.mrb[0].mxu0
    %1593 = vdwg.mxu0
    %v1594 = vsel %vm391, 1, 0
    %vm1595 = vcmp.eq.s32.totalorder %v1594, 1
    %v1596 = vsel %vm1595, %v1451, -1e+30
    %v1597 = vsel %vm1595, %v1497, -1e+30
    %v1598 = vsel %vm1595, %v1543, -1e+30
    %v1599 = vsel %vm1595, %v1589, -1e+30
    %vm1600 = vcmask 64512
    %v1601 = vsel %vm1600, %v1596, -inf
    %1602 = vmax.xlane.f32.xlu0 %v1601
    %v1603 = vpop.xlane.xlu0 %1602
    %v1604 = vsel %vm1600, %v1597, -inf
    %1605 = vmax.xlane.f32.xlu0 %v1604
    %v1606 = vpop.xlane.xlu0 %1605
    %v1607 = vsel %vm1600, %v1598, -inf
    %1608 = vmax.xlane.f32.xlu0 %v1607
    %v1609 = vpop.xlane.xlu0 %1608
    %v1610 = vsel %vm1600, %v1599, -inf
    %1611 = vmax.xlane.f32.xlu0 %v1610
    %v1612 = vpop.xlane.xlu0 %1611
    %v1613 = vsub.f32 %v1596, %v1603
    %v1614 = vsub.f32 %v1597, %v1606
    %v1615 = vsub.f32 %v1598, %v1609
    %v1616 = vsub.f32 %v1599, %v1612
    %v1617 = vmul.f32 %v1613, 1.442695
    %v1618 = vpow.pop %v1617
    %v1619 = vmul.f32 %v1614, 1.442695
    %v1620 = vpow.pop %v1619
    %v1621 = vmul.f32 %v1615, 1.442695
    %v1622 = vpow.pop %v1621
    %v1623 = vmul.f32 %v1616, 1.442695
    %v1624 = vpow.pop %v1623
    %v1625 = vsel %vm1600, %v1618, 0.0
    %1626 = vadd.xlane.f32.xlu0 %v1625
    %v1627 = vpop.xlane.xlu0 %1626
    %v1628 = vsel %vm1600, %v1620, 0.0
    %1629 = vadd.xlane.f32.xlu0 %v1628
    %v1630 = vpop.xlane.xlu0 %1629
    %v1631 = vsel %vm1600, %v1622, 0.0
    %1632 = vadd.xlane.f32.xlu0 %v1631
    %v1633 = vpop.xlane.xlu0 %1632
    %v1634 = vsel %vm1600, %v1624, 0.0
    %1635 = vadd.xlane.f32.xlu0 %v1634
    %v1636 = vpop.xlane.xlu0 %1635
    %v1637 = vrcp.pop %v1627
    %v1638 = vrcp.pop %v1630
    %v1639 = vrcp.pop %v1633
    %v1640 = vrcp.pop %v1636
    %v1641 = vmul.f32 %v1618, %v1637
    %v1642 = vmul.f32 %v1620, %v1638
    %v1643 = vmul.f32 %v1622, %v1639
    %v1644 = vmul.f32 %v1624, %v1640
    %v1645 = vpack.c.bf16 %v1641, %v1641
    %v1646 = vpack.c.bf16 %v1642, %v1642
    %v1647 = vpack.c.bf16 %v1643, %v1643
    %v1648 = vpack.c.bf16 %v1644, %v1644
    %v1649 = vpack.c.bf16 %v1349, %v1349
    %v1650 = vpack.c.bf16 %v1350, %v1350
    %v1651 = vpack.c.bf16 %v1399, %v1399
    %v1652 = vpack.c.bf16 %v1400, %v1400
    %v1654 = vsel %vm1600, %v1645, 0
    %vm1656 = vcmask 1043456
    %v1658 = vsel %vm1656, %v1649, 0
    %1660 = vmatprep.subr.bf16.mxu0 0
    %1661 = vmatpush1.bf16.msra.mxu0 %v1658
    %1662 = vmatprep.subr.bf16.mxu0 0
    %1663 = vmatpush1.bf16.msra.mxu0 0
    %1664 = vmatprep.subr.bf16.mxu0 0
    %1665 = vmatpush1.bf16.msra.mxu0 0
    %1666 = vmatprep.subr.bf16.mxu0 0
    %1667 = vmatpush1.bf16.msra.mxu0 0
    %1668 = vmatprep.subr.bf16.mxu0 0
    %1669 = vmatpush1.bf16.msra.mxu0 0
    %1670 = vmatprep.subr.bf16.mxu0 0
    %1671 = vmatpush1.bf16.msra.mxu0 0
    %1672 = vmatprep.subr.bf16.mxu0 0
    %1673 = vmatpush1.bf16.msra.mxu0 0
    %1674 = vmatprep.subr.bf16.mxu0 0
    %1675 = vmatpush1.bf16.msra.mxu0 0
    %1676 = vmatprep.subr.bf16.mxu0 0
    %1677 = vmatpush1.bf16.msra.mxu0 0
    %1678 = vmatprep.subr.bf16.mxu0 0
    %1679 = vmatpush1.bf16.msra.mxu0 0
    %1680 = vmatprep.subr.bf16.mxu0 0
    %1681 = vmatpush1.bf16.msra.mxu0 0
    %1682 = vmatprep.subr.bf16.mxu0 0
    %1683 = vmatpush1.bf16.msra.mxu0 0
    %1684 = vmatprep.subr.bf16.mxu0 0
    %1685 = vmatpush1.bf16.msra.mxu0 0
    %1686 = vmatprep.subr.bf16.mxu0 0
    %1687 = vmatpush1.bf16.msra.mxu0 0
    %1688 = vmatprep.subr.bf16.mxu0 0
    %1689 = vmatpush1.bf16.msra.mxu0 0
    %1690 = vmatprep.subr.bf16.mxu0 0
    %1691 = vmatpush1.bf16.msra.mxu0 0
    %1692 = vmatprep.mubr.bf16.mxu0 0
    %1693 = vmatmul.mubr.bf16.gmra.mrb[0].mxu0 %v1654
    %v1694 = vpop.f32.mrb[0].mxu0
    %v1695 = vadd.f32 0.0, %v1694
    %v1696 = vpop.f32.mrb[0].mxu0
    %v1697 = vpop.f32.mrb[0].mxu0
    %v1698 = vpop.f32.mrb[0].mxu0
    %1699 = vdwg.mxu0
    %v1701 = vsel %vm1600, %v1646, 0
    %v1704 = vsel %vm1656, %v1650, 0
    %1706 = vmatprep.subr.bf16.mxu0 0
    %1707 = vmatpush1.bf16.msra.mxu0 %v1704
    %1708 = vmatprep.subr.bf16.mxu0 0
    %1709 = vmatpush1.bf16.msra.mxu0 0
    %1710 = vmatprep.subr.bf16.mxu0 0
    %1711 = vmatpush1.bf16.msra.mxu0 0
    %1712 = vmatprep.subr.bf16.mxu0 0
    %1713 = vmatpush1.bf16.msra.mxu0 0
    %1714 = vmatprep.subr.bf16.mxu0 0
    %1715 = vmatpush1.bf16.msra.mxu0 0
    %1716 = vmatprep.subr.bf16.mxu0 0
    %1717 = vmatpush1.bf16.msra.mxu0 0
    %1718 = vmatprep.subr.bf16.mxu0 0
    %1719 = vmatpush1.bf16.msra.mxu0 0
    %1720 = vmatprep.subr.bf16.mxu0 0
    %1721 = vmatpush1.bf16.msra.mxu0 0
    %1722 = vmatprep.subr.bf16.mxu0 0
    %1723 = vmatpush1.bf16.msra.mxu0 0
    %1724 = vmatprep.subr.bf16.mxu0 0
    %1725 = vmatpush1.bf16.msra.mxu0 0
    %1726 = vmatprep.subr.bf16.mxu0 0
    %1727 = vmatpush1.bf16.msra.mxu0 0
    %1728 = vmatprep.subr.bf16.mxu0 0
    %1729 = vmatpush1.bf16.msra.mxu0 0
    %1730 = vmatprep.subr.bf16.mxu0 0
    %1731 = vmatpush1.bf16.msra.mxu0 0
    %1732 = vmatprep.subr.bf16.mxu0 0
    %1733 = vmatpush1.bf16.msra.mxu0 0
    %1734 = vmatprep.subr.bf16.mxu0 0
    %1735 = vmatpush1.bf16.msra.mxu0 0
    %1736 = vmatprep.subr.bf16.mxu0 0
    %1737 = vmatpush1.bf16.msra.mxu0 0
    %1738 = vmatprep.mubr.bf16.mxu0 0
    %1739 = vmatmul.mubr.bf16.gmra.mrb[0].mxu0 %v1701
    %v1740 = vpop.f32.mrb[0].mxu0
    %v1741 = vadd.f32 0.0, %v1740
    %v1742 = vpop.f32.mrb[0].mxu0
    %v1743 = vpop.f32.mrb[0].mxu0
    %v1744 = vpop.f32.mrb[0].mxu0
    %1745 = vdwg.mxu0
    %v1747 = vsel %vm1600, %v1647, 0
    %v1750 = vsel %vm1656, %v1651, 0
    %1752 = vmatprep.subr.bf16.mxu0 0
    %1753 = vmatpush1.bf16.msra.mxu0 %v1750
    %1754 = vmatprep.subr.bf16.mxu0 0
    %1755 = vmatpush1.bf16.msra.mxu0 0
    %1756 = vmatprep.subr.bf16.mxu0 0
    %1757 = vmatpush1.bf16.msra.mxu0 0
    %1758 = vmatprep.subr.bf16.mxu0 0
    %1759 = vmatpush1.bf16.msra.mxu0 0
    %1760 = vmatprep.subr.bf16.mxu0 0
    %1761 = vmatpush1.bf16.msra.mxu0 0
    %1762 = vmatprep.subr.bf16.mxu0 0
    %1763 = vmatpush1.bf16.msra.mxu0 0
    %1764 = vmatprep.subr.bf16.mxu0 0
    %1765 = vmatpush1.bf16.msra.mxu0 0
    %1766 = vmatprep.subr.bf16.mxu0 0
    %1767 = vmatpush1.bf16.msra.mxu0 0
    %1768 = vmatprep.subr.bf16.mxu0 0
    %1769 = vmatpush1.bf16.msra.mxu0 0
    %1770 = vmatprep.subr.bf16.mxu0 0
    %1771 = vmatpush1.bf16.msra.mxu0 0
    %1772 = vmatprep.subr.bf16.mxu0 0
    %1773 = vmatpush1.bf16.msra.mxu0 0
    %1774 = vmatprep.subr.bf16.mxu0 0
    %1775 = vmatpush1.bf16.msra.mxu0 0
    %1776 = vmatprep.subr.bf16.mxu0 0
    %1777 = vmatpush1.bf16.msra.mxu0 0
    %1778 = vmatprep.subr.bf16.mxu0 0
    %1779 = vmatpush1.bf16.msra.mxu0 0
    %1780 = vmatprep.subr.bf16.mxu0 0
    %1781 = vmatpush1.bf16.msra.mxu0 0
    %1782 = vmatprep.subr.bf16.mxu0 0
    %1783 = vmatpush1.bf16.msra.mxu0 0
    %1784 = vmatprep.mubr.bf16.mxu0 0
    %1785 = vmatmul.mubr.bf16.gmra.mrb[0].mxu0 %v1747
    %v1786 = vpop.f32.mrb[0].mxu0
    %v1787 = vadd.f32 0.0, %v1786
    %v1788 = vpop.f32.mrb[0].mxu0
    %v1789 = vpop.f32.mrb[0].mxu0
    %v1790 = vpop.f32.mrb[0].mxu0
    %1791 = vdwg.mxu0
    %v1793 = vsel %vm1600, %v1648, 0
    %v1796 = vsel %vm1656, %v1652, 0
    %1798 = vmatprep.subr.bf16.mxu0 0
    %1799 = vmatpush1.bf16.msra.mxu0 %v1796
    %1800 = vmatprep.subr.bf16.mxu0 0
    %1801 = vmatpush1.bf16.msra.mxu0 0
    %1802 = vmatprep.subr.bf16.mxu0 0
    %1803 = vmatpush1.bf16.msra.mxu0 0
    %1804 = vmatprep.subr.bf16.mxu0 0
    %1805 = vmatpush1.bf16.msra.mxu0 0
    %1806 = vmatprep.subr.bf16.mxu0 0
    %1807 = vmatpush1.bf16.msra.mxu0 0
    %1808 = vmatprep.subr.bf16.mxu0 0
    %1809 = vmatpush1.bf16.msra.mxu0 0
    %1810 = vmatprep.subr.bf16.mxu0 0
    %1811 = vmatpush1.bf16.msra.mxu0 0
    %1812 = vmatprep.subr.bf16.mxu0 0
    %1813 = vmatpush1.bf16.msra.mxu0 0
    %1814 = vmatprep.subr.bf16.mxu0 0
    %1815 = vmatpush1.bf16.msra.mxu0 0
    %1816 = vmatprep.subr.bf16.mxu0 0
    %1817 = vmatpush1.bf16.msra.mxu0 0
    %1818 = vmatprep.subr.bf16.mxu0 0
    %1819 = vmatpush1.bf16.msra.mxu0 0
    %1820 = vmatprep.subr.bf16.mxu0 0
    %1821 = vmatpush1.bf16.msra.mxu0 0
    %1822 = vmatprep.subr.bf16.mxu0 0
    %1823 = vmatpush1.bf16.msra.mxu0 0
    %1824 = vmatprep.subr.bf16.mxu0 0
    %1825 = vmatpush1.bf16.msra.mxu0 0
    %1826 = vmatprep.subr.bf16.mxu0 0
    %1827 = vmatpush1.bf16.msra.mxu0 0
    %1828 = vmatprep.subr.bf16.mxu0 0
    %1829 = vmatpush1.bf16.msra.mxu0 0
    %1830 = vmatprep.mubr.bf16.mxu0 0
    %1831 = vmatmul.mubr.bf16.gmra.mrb[0].mxu0 %v1793
    %v1832 = vpop.f32.mrb[0].mxu0
    %v1833 = vadd.f32 0.0, %v1832
    %v1834 = vpop.f32.mrb[0].mxu0
    %v1835 = vpop.f32.mrb[0].mxu0
    %v1836 = vpop.f32.mrb[0].mxu0
    %1837 = vdwg.mxu0
    %v1838 = vcombine.high %v1695, 0.0
    %v1840 = vunpack.c.l.s4 1983009808
    %v1841 = vunpack.c.0.s8 %v1840
    %v1842 = vlaneseq
    %v1843 = vshrl.u32 %v1842, 7
    %v1844 = vsub.s32 %v1841, %v1843
    %v1845 = vrot.slane %v1695, %v1844
    %v1847 = vunpack.c.l.s4 1983009808
    %v1848 = vunpack.c.0.s8 %v1847
    %v1849 = vlaneseq
    %v1850 = vshrl.u32 %v1849, 7
    %v1851 = vsub.s32 %v1848, %v1850
    %v1852 = vrot.slane %v1838, %v1851
    %v1853 = vcombine.high %v1741, 0.0
    %v1855 = vunpack.c.l.s4 1983009808
    %v1856 = vunpack.c.0.s8 %v1855
    %v1857 = vlaneseq
    %v1858 = vshrl.u32 %v1857, 7
    %v1859 = vsub.s32 %v1856, %v1858
    %v1860 = vrot.slane %v1741, %v1859
    %v1862 = vunpack.c.l.s4 1983009808
    %v1863 = vunpack.c.0.s8 %v1862
    %v1864 = vlaneseq
    %v1865 = vshrl.u32 %v1864, 7
    %v1866 = vsub.s32 %v1863, %v1865
    %v1867 = vrot.slane %v1853, %v1866
    %v1868 = vcombine.low %v1845, %v1860
    %v1869 = vcombine.high %v1845, %v1860
    %v1871 = vunpack.c.l.s4 1934713408
    %v1872 = vunpack.c.0.s8 %v1871
    %v1873 = vlaneseq
    %v1874 = vshrl.u32 %v1873, 7
    %v1875 = vsub.s32 %v1872, %v1874
    %v1876 = vrot.slane %v1868, %v1875
    %v1878 = vunpack.c.l.s4 1934713408
    %v1879 = vunpack.c.0.s8 %v1878
    %v1880 = vlaneseq
    %v1881 = vshrl.u32 %v1880, 7
    %v1882 = vsub.s32 %v1879, %v1881
    %v1883 = vrot.slane %v1869, %v1882
    %v1884 = vcombine.low %v1852, %v1867
    %v1885 = vcombine.high %v1852, %v1867
    %v1887 = vunpack.c.l.s4 1934713408
    %v1888 = vunpack.c.0.s8 %v1887
    %v1889 = vlaneseq
    %v1890 = vshrl.u32 %v1889, 7
    %v1891 = vsub.s32 %v1888, %v1890
    %v1892 = vrot.slane %v1884, %v1891
    %v1894 = vunpack.c.l.s4 1934713408
    %v1895 = vunpack.c.0.s8 %v1894
    %v1896 = vlaneseq
    %v1897 = vshrl.u32 %v1896, 7
    %v1898 = vsub.s32 %v1895, %v1897
    %v1899 = vrot.slane %v1885, %v1898
    %v1900 = vcombine.high %v1876, 0.0
    %v1901 = vcombine.high %v1883, 0.0
    %v1902 = vcombine.high %v1892, 0.0
    %v1903 = vcombine.high %v1899, 0.0
    %v1904 = vcombine.high %v1787, 0.0
    %v1906 = vunpack.c.l.s4 1983009808
    %v1907 = vunpack.c.0.s8 %v1906
    %v1908 = vlaneseq
    %v1909 = vshrl.u32 %v1908, 7
    %v1910 = vsub.s32 %v1907, %v1909
    %v1911 = vrot.slane %v1787, %v1910
    %v1913 = vunpack.c.l.s4 1983009808
    %v1914 = vunpack.c.0.s8 %v1913
    %v1915 = vlaneseq
    %v1916 = vshrl.u32 %v1915, 7
    %v1917 = vsub.s32 %v1914, %v1916
    %v1918 = vrot.slane %v1904, %v1917
    %v1919 = vcombine.high %v1833, 0.0
    %v1921 = vunpack.c.l.s4 1983009808
    %v1922 = vunpack.c.0.s8 %v1921
    %v1923 = vlaneseq
    %v1924 = vshrl.u32 %v1923, 7
    %v1925 = vsub.s32 %v1922, %v1924
    %v1926 = vrot.slane %v1833, %v1925
    %v1928 = vunpack.c.l.s4 1983009808
    %v1929 = vunpack.c.0.s8 %v1928
    %v1930 = vlaneseq
    %v1931 = vshrl.u32 %v1930, 7
    %v1932 = vsub.s32 %v1929, %v1931
    %v1933 = vrot.slane %v1919, %v1932
    %v1934 = vcombine.low %v1911, %v1926
    %v1935 = vcombine.high %v1911, %v1926
    %v1937 = vunpack.c.l.s4 1934713408
    %v1938 = vunpack.c.0.s8 %v1937
    %v1939 = vlaneseq
    %v1940 = vshrl.u32 %v1939, 7
    %v1941 = vsub.s32 %v1938, %v1940
    %v1942 = vrot.slane %v1934, %v1941
    %v1944 = vunpack.c.l.s4 1934713408
    %v1945 = vunpack.c.0.s8 %v1944
    %v1946 = vlaneseq
    %v1947 = vshrl.u32 %v1946, 7
    %v1948 = vsub.s32 %v1945, %v1947
    %v1949 = vrot.slane %v1935, %v1948
    %v1950 = vcombine.low %v1918, %v1933
    %v1951 = vcombine.high %v1918, %v1933
    %v1953 = vunpack.c.l.s4 1934713408
    %v1954 = vunpack.c.0.s8 %v1953
    %v1955 = vlaneseq
    %v1956 = vshrl.u32 %v1955, 7
    %v1957 = vsub.s32 %v1954, %v1956
    %v1958 = vrot.slane %v1950, %v1957
    %v1960 = vunpack.c.l.s4 1934713408
    %v1961 = vunpack.c.0.s8 %v1960
    %v1962 = vlaneseq
    %v1963 = vshrl.u32 %v1962, 7
    %v1964 = vsub.s32 %v1961, %v1963
    %v1965 = vrot.slane %v1951, %v1964
    %v1966 = vcombine.high %v1942, 0.0
    %v1967 = vcombine.high %v1949, 0.0
    %v1968 = vcombine.high %v1958, 0.0
    %v1969 = vcombine.high %v1965, 0.0
    %v1970 = vcombine.low %v1876, %v1883
    %v1972 = vunpack.c.l.s4 1983009808
    %v1973 = vunpack.c.0.s8 %v1972
    %v1974 = vlaneseq
    %v1975 = vshrl.u32 %v1974, 7
    %v1976 = vsub.s32 %v1973, %v1975
    %v1977 = vrot.slane %v1970, %v1976
    %v1978 = vcombine.low %v1900, %v1901
    %v1980 = vunpack.c.l.s4 1983009808
    %v1981 = vunpack.c.0.s8 %v1980
    %v1982 = vlaneseq
    %v1983 = vshrl.u32 %v1982, 7
    %v1984 = vsub.s32 %v1981, %v1983
    %v1985 = vrot.slane %v1978, %v1984
    %v1986 = vcombine.low %v1892, %v1899
    %v1988 = vunpack.c.l.s4 1983009808
    %v1989 = vunpack.c.0.s8 %v1988
    %v1990 = vlaneseq
    %v1991 = vshrl.u32 %v1990, 7
    %v1992 = vsub.s32 %v1989, %v1991
    %v1993 = vrot.slane %v1986, %v1992
    %v1994 = vcombine.low %v1902, %v1903
    %v1996 = vunpack.c.l.s4 1983009808
    %v1997 = vunpack.c.0.s8 %v1996
    %v1998 = vlaneseq
    %v1999 = vshrl.u32 %v1998, 7
    %v2000 = vsub.s32 %v1997, %v1999
    %v2001 = vrot.slane %v1994, %v2000
    %v2002 = vcombine.low %v1977, %v1985
    %v2004 = vunpack.c.l.s4 1934713408
    %v2005 = vunpack.c.0.s8 %v2004
    %v2006 = vlaneseq
    %v2007 = vshrl.u32 %v2006, 7
    %v2008 = vsub.s32 %v2005, %v2007
    %v2009 = vrot.slane %v2002, %v2008
    %v2010 = vcombine.low %v1993, %v2001
    %v2012 = vunpack.c.l.s4 1934713408
    %v2013 = vunpack.c.0.s8 %v2012
    %v2014 = vlaneseq
    %v2015 = vshrl.u32 %v2014, 7
    %v2016 = vsub.s32 %v2013, %v2015
    %v2017 = vrot.slane %v2010, %v2016
    %v2018 = vcombine.low %v2009, %v2017
    %v2019 = vcombine.high %v2009, %v2017
    %v2020 = vcombine.low %v1942, %v1949
    %v2022 = vunpack.c.l.s4 1983009808
    %v2023 = vunpack.c.0.s8 %v2022
    %v2024 = vlaneseq
    %v2025 = vshrl.u32 %v2024, 7
    %v2026 = vsub.s32 %v2023, %v2025
    %v2027 = vrot.slane %v2020, %v2026
    %v2028 = vcombine.low %v1966, %v1967
    %v2030 = vunpack.c.l.s4 1983009808
    %v2031 = vunpack.c.0.s8 %v2030
    %v2032 = vlaneseq
    %v2033 = vshrl.u32 %v2032, 7
    %v2034 = vsub.s32 %v2031, %v2033
    %v2035 = vrot.slane %v2028, %v2034
    %v2036 = vcombine.low %v1958, %v1965
    %v2038 = vunpack.c.l.s4 1983009808
    %v2039 = vunpack.c.0.s8 %v2038
    %v2040 = vlaneseq
    %v2041 = vshrl.u32 %v2040, 7
    %v2042 = vsub.s32 %v2039, %v2041
    %v2043 = vrot.slane %v2036, %v2042
    %v2044 = vcombine.low %v1968, %v1969
    %v2046 = vunpack.c.l.s4 1983009808
    %v2047 = vunpack.c.0.s8 %v2046
    %v2048 = vlaneseq
    %v2049 = vshrl.u32 %v2048, 7
    %v2050 = vsub.s32 %v2047, %v2049
    %v2051 = vrot.slane %v2044, %v2050
    %v2052 = vcombine.low %v2027, %v2035
    %v2054 = vunpack.c.l.s4 1934713408
    %v2055 = vunpack.c.0.s8 %v2054
    %v2056 = vlaneseq
    %v2057 = vshrl.u32 %v2056, 7
    %v2058 = vsub.s32 %v2055, %v2057
    %v2059 = vrot.slane %v2052, %v2058
    %v2060 = vcombine.low %v2043, %v2051
    %v2062 = vunpack.c.l.s4 1934713408
    %v2063 = vunpack.c.0.s8 %v2062
    %v2064 = vlaneseq
    %v2065 = vshrl.u32 %v2064, 7
    %v2066 = vsub.s32 %v2063, %v2065
    %v2067 = vrot.slane %v2060, %v2066
    %v2068 = vcombine.low %v2059, %v2067
    %v2069 = vcombine.high %v2059, %v2067
    %2072 = vrot.lane.b32.xlu0 %v2019, 64
    %v2073 = vpop.permute.xlu0 %2072
    %2074 = vrot.lane.b32.xlu0 %v2069, 64
    %v2075 = vpop.permute.xlu0 %2074
    %v2078 = vsel %vm1409, %v2018, %v2073
    %v2079 = vsel %vm1409, %v2068, %v2075
    %v2080 = vpack.c.bf16 %v2079, %v2078
    %v2081 = vld [vmem:[%s12] sm:$0xf]
    %v2082 = vld [vmem:[%s12 + $0x4] sm:$0xf]
    %v2083 = vld [vmem:[%s12 + $0x8] sm:$0xf]
    %v2084 = vld [vmem:[%s12 + $0xc] sm:$0xf]
    %v2085 = vld [vmem:[%s12 + $0x10] sm:$0xf]
    %v2086 = vld [vmem:[%s12 + $0x14] sm:$0xf]
    %v2087 = vld [vmem:[%s12 + $0x18] sm:$0xf]
    %v2088 = vld [vmem:[%s12 + $0x1c] sm:$0xf]
    %v2089 = vld [vmem:[%s12 + $0x20] sm:$0xf]
    %v2090 = vld [vmem:[%s12 + $0x24] sm:$0xf]
    %v2091 = vld [vmem:[%s12 + $0x28] sm:$0xf]
    %v2092 = vld [vmem:[%s12 + $0x2c] sm:$0xf]
    %v2093 = vld [vmem:[%s12 + $0x30] sm:$0xf]
    %v2094 = vld [vmem:[%s12 + $0x34] sm:$0xf]
    %v2095 = vld [vmem:[%s12 + $0x38] sm:$0xf]
    %v2096 = vld [vmem:[%s12 + $0x3c] sm:$0xf]
    %v2097 = vld [vmem:[%s13] sm:$0x1]
    %v2099 = vlaneseq
    %v2100 = vshrl.u32 %v2099, 7
    %v2101 = vsub.s32 0, %v2100
    %v2102 = vrot.slane %v2097, %v2101
    %v2120 = vunpack.c.l.b16 %v2081
    %v2121 = vunpack.c.l.b16 %v2082
    %v2122 = vunpack.c.l.b16 %v2083
    %v2123 = vunpack.c.l.b16 %v2084
    %v2124 = vunpack.c.l.b16 %v2085
    %v2125 = vunpack.c.l.b16 %v2086
    %v2126 = vunpack.c.l.b16 %v2087
    %v2127 = vunpack.c.l.b16 %v2088
    %v2128 = vunpack.c.l.b16 %v2089
    %v2129 = vunpack.c.l.b16 %v2090
    %v2130 = vunpack.c.l.b16 %v2091
    %v2131 = vunpack.c.l.b16 %v2092
    %v2132 = vunpack.c.l.b16 %v2093
    %v2133 = vunpack.c.l.b16 %v2094
    %v2134 = vunpack.c.l.b16 %v2095
    %v2135 = vunpack.c.l.b16 %v2096
    %v2136 = vpack.c.b16 %v2121, %v2120
    %v2137 = vpack.c.b16 %v2123, %v2122
    %v2138 = vpack.c.b16 %v2125, %v2124
    %v2139 = vpack.c.b16 %v2127, %v2126
    %v2140 = vpack.c.b16 %v2129, %v2128
    %v2141 = vpack.c.b16 %v2131, %v2130
    %v2142 = vpack.c.b16 %v2133, %v2132
    %v2143 = vpack.c.b16 %v2135, %v2134
    %2152 = vmatprep.subr.bf16.mxu0 0
    %2153 = vmatpush1.bf16.msra.mxu0 %v2136
    %2154 = vmatprep.subr.bf16.mxu0 0
    %2155 = vmatpush1.bf16.msra.mxu0 %v2137
    %2156 = vmatprep.subr.bf16.mxu0 0
    %2157 = vmatpush1.bf16.msra.mxu0 %v2138
    %2158 = vmatprep.subr.bf16.mxu0 0
    %2159 = vmatpush1.bf16.msra.mxu0 %v2139
    %2160 = vmatprep.subr.bf16.mxu0 0
    %2161 = vmatpush1.bf16.msra.mxu0 %v2140
    %2162 = vmatprep.subr.bf16.mxu0 0
    %2163 = vmatpush1.bf16.msra.mxu0 %v2141
    %2164 = vmatprep.subr.bf16.mxu0 0
    %2165 = vmatpush1.bf16.msra.mxu0 %v2142
    %2166 = vmatprep.subr.bf16.mxu0 0
    %2167 = vmatpush1.bf16.msra.mxu0 %v2143
    %2168 = vmatprep.subr.bf16.mxu0 0
    %2169 = vmatpush1.bf16.msra.mxu0 0
    %2170 = vmatprep.subr.bf16.mxu0 0
    %2171 = vmatpush1.bf16.msra.mxu0 0
    %2172 = vmatprep.subr.bf16.mxu0 0
    %2173 = vmatpush1.bf16.msra.mxu0 0
    %2174 = vmatprep.subr.bf16.mxu0 0
    %2175 = vmatpush1.bf16.msra.mxu0 0
    %2176 = vmatprep.subr.bf16.mxu0 0
    %2177 = vmatpush1.bf16.msra.mxu0 0
    %2178 = vmatprep.subr.bf16.mxu0 0
    %2179 = vmatpush1.bf16.msra.mxu0 0
    %2180 = vmatprep.subr.bf16.mxu0 0
    %2181 = vmatpush1.bf16.msra.mxu0 0
    %2182 = vmatprep.subr.bf16.mxu0 0
    %2183 = vmatpush1.bf16.msra.mxu0 0
    %2184 = vmatprep.mubr.bf16.mxu0 0
    %2185 = vmatmul.mubr.bf16.gmra.mrb[0].mxu0 %v2080
    %v2186 = vpop.f32.mrb[0].mxu0
    %v2187 = vadd.f32 %v2102, %v2186
    %v2188 = vpop.f32.mrb[0].mxu0
    %v2189 = vpop.f32.mrb[0].mxu0
    %v2190 = vadd.f32 %v2102, %v2189
    %v2191 = vpop.f32.mrb[0].mxu0
    %2192 = vdwg.mxu0
    %v2193 = vadd.f32 %v387, %v2187
    %v2194 = vadd.f32 %v388, %v2190
    %v2195 = vld [vmem:[%s14] sm:$0x1]
    %v2196 = vld [vmem:[%s15] sm:$0x1]
    %2197 = vadd.xlane.f32.xlu0 %v2193
    %v2198 = vpop.xlane.xlu0 %2197
    %2199 = vadd.xlane.f32.xlu0 %v2194
    %v2200 = vpop.xlane.xlu0 %2199
    %v2201 = vmul.f32 %v2198, %v332
    %v2202 = vmul.f32 %v2200, %v332
    %v2203 = vsub.f32 %v2193, %v2201
    %v2204 = vsub.f32 %v2194, %v2202
    %v2205 = vmul.f32 %v2203, %v2203
    %v2206 = vmul.f32 %v2204, %v2204
    %2207 = vadd.xlane.f32.xlu0 %v2205
    %v2208 = vpop.xlane.xlu0 %2207
    %2209 = vadd.xlane.f32.xlu0 %v2206
    %v2210 = vpop.xlane.xlu0 %2209
    %v2211 = vmul.f32 %v2208, %v332
    %v2212 = vmul.f32 %v2210, %v332
    %v2213 = vadd.f32 %v2211, 1e-05
    %v2214 = vadd.f32 %v2212, 1e-05
    %v2215 = vrsqrt.pop %v2213
    %v2216 = vrsqrt.pop %v2214
    %v2217 = vmul.f32 %v2203, %v2215
    %v2218 = vmul.f32 %v2204, %v2216
    %v2220 = vlaneseq
    %v2221 = vshrl.u32 %v2220, 7
    %v2222 = vsub.s32 0, %v2221
    %v2223 = vrot.slane %v2195, %v2222
    %v2225 = vmul.f32 %v2217, %v2223
    %v2226 = vmul.f32 %v2218, %v2223
    %v2228 = vlaneseq
    %v2229 = vshrl.u32 %v2228, 7
    %v2230 = vsub.s32 0, %v2229
    %v2231 = vrot.slane %v2196, %v2230
    %v2233 = vadd.f32 %v2225, %v2231
    %v2234 = vadd.f32 %v2226, %v2231
    %v2235 = vpack.c.bf16 %v2234, %v2233
    %v2236 = vld [vmem:[%s16] sm:$0xff]
    %v2237 = vld [vmem:[%s16 + $0x8] sm:$0xff]
    %v2238 = vld [vmem:[%s16 + $0x10] sm:$0xff]
    %v2239 = vld [vmem:[%s16 + $0x18] sm:$0xff]
    %v2240 = vld [vmem:[%s16 + $0x20] sm:$0xff]
    %v2241 = vld [vmem:[%s16 + $0x28] sm:$0xff]
    %v2242 = vld [vmem:[%s16 + $0x30] sm:$0xff]
    %v2243 = vld [vmem:[%s16 + $0x38] sm:$0xff]
    %v2244 = vld [vmem:[%s16 + $0x40] sm:$0xff]
    %v2245 = vld [vmem:[%s16 + $0x48] sm:$0xff]
    %v2246 = vld [vmem:[%s16 + $0x50] sm:$0xff]
    %v2247 = vld [vmem:[%s16 + $0x58] sm:$0xff]
    %v2248 = vld [vmem:[%s16 + $0x60] sm:$0xff]
    %v2249 = vld [vmem:[%s16 + $0x68] sm:$0xff]
    %v2250 = vld [vmem:[%s16 + $0x70] sm:$0xff]
    %v2251 = vld [vmem:[%s16 + $0x78] sm:$0xff]
    %v2252 = vld [vmem:[%s17] sm:$0x3]
    %v2254 = vlaneseq
    %v2255 = vshrl.u32 %v2254, 7
    %v2256 = vsub.s32 0, %v2255
    %v2257 = vrot.slane %v2252, %v2256
    %v2258 = vlaneseq
    %v2259 = vshrl.u32 %v2258, 7
    %v2260 = vsub.s32 1, %v2259
    %v2261 = vrot.slane %v2252, %v2260
    %v2280 = vunpack.c.l.b16 %v2236
    %v2281 = vunpack.c.h.b16 %v2236
    %v2282 = vunpack.c.l.b16 %v2237
    %v2283 = vunpack.c.h.b16 %v2237
    %v2284 = vunpack.c.l.b16 %v2238
    %v2285 = vunpack.c.h.b16 %v2238
    %v2286 = vunpack.c.l.b16 %v2239
    %v2287 = vunpack.c.h.b16 %v2239
    %v2288 = vunpack.c.l.b16 %v2240
    %v2289 = vunpack.c.h.b16 %v2240
    %v2290 = vunpack.c.l.b16 %v2241
    %v2291 = vunpack.c.h.b16 %v2241
    %v2292 = vunpack.c.l.b16 %v2242
    %v2293 = vunpack.c.h.b16 %v2242
    %v2294 = vunpack.c.l.b16 %v2243
    %v2295 = vunpack.c.h.b16 %v2243
    %v2296 = vunpack.c.l.b16 %v2244
    %v2297 = vunpack.c.h.b16 %v2244
    %v2298 = vunpack.c.l.b16 %v2245
    %v2299 = vunpack.c.h.b16 %v2245
    %v2300 = vunpack.c.l.b16 %v2246
    %v2301 = vunpack.c.h.b16 %v2246
    %v2302 = vunpack.c.l.b16 %v2247
    %v2303 = vunpack.c.h.b16 %v2247
    %v2304 = vunpack.c.l.b16 %v2248
    %v2305 = vunpack.c.h.b16 %v2248
    %v2306 = vunpack.c.l.b16 %v2249
    %v2307 = vunpack.c.h.b16 %v2249
    %v2308 = vunpack.c.l.b16 %v2250
    %v2309 = vunpack.c.h.b16 %v2250
    %v2310 = vunpack.c.l.b16 %v2251
    %v2311 = vunpack.c.h.b16 %v2251
    %v2312 = vpack.c.b16 %v2282, %v2280
    %v2313 = vpack.c.b16 %v2283, %v2281
    %v2314 = vpack.c.b16 %v2286, %v2284
    %v2315 = vpack.c.b16 %v2287, %v2285
    %v2316 = vpack.c.b16 %v2290, %v2288
    %v2317 = vpack.c.b16 %v2291, %v2289
    %v2318 = vpack.c.b16 %v2294, %v2292
    %v2319 = vpack.c.b16 %v2295, %v2293
    %v2320 = vpack.c.b16 %v2298, %v2296
    %v2321 = vpack.c.b16 %v2299, %v2297
    %v2322 = vpack.c.b16 %v2302, %v2300
    %v2323 = vpack.c.b16 %v2303, %v2301
    %v2324 = vpack.c.b16 %v2306, %v2304
    %v2325 = vpack.c.b16 %v2307, %v2305
    %v2326 = vpack.c.b16 %v2310, %v2308
    %v2327 = vpack.c.b16 %v2311, %v2309
    %2344 = vmatprep.subr.bf16.mxu0 %v2313
    %2345 = vmatpush1.bf16.msra.mxu0 %v2312
    %2346 = vmatprep.subr.bf16.mxu0 %v2315
    %2347 = vmatpush1.bf16.msra.mxu0 %v2314
    %2348 = vmatprep.subr.bf16.mxu0 %v2317
    %2349 = vmatpush1.bf16.msra.mxu0 %v2316
    %2350 = vmatprep.subr.bf16.mxu0 %v2319
    %2351 = vmatpush1.bf16.msra.mxu0 %v2318
    %2352 = vmatprep.subr.bf16.mxu0 %v2321
    %2353 = vmatpush1.bf16.msra.mxu0 %v2320
    %2354 = vmatprep.subr.bf16.mxu0 %v2323
    %2355 = vmatpush1.bf16.msra.mxu0 %v2322
    %2356 = vmatprep.subr.bf16.mxu0 %v2325
    %2357 = vmatpush1.bf16.msra.mxu0 %v2324
    %2358 = vmatprep.subr.bf16.mxu0 %v2327
    %2359 = vmatpush1.bf16.msra.mxu0 %v2326
    %2360 = vmatprep.subr.bf16.mxu0 0
    %2361 = vmatpush1.bf16.msra.mxu0 0
    %2362 = vmatprep.subr.bf16.mxu0 0
    %2363 = vmatpush1.bf16.msra.mxu0 0
    %2364 = vmatprep.subr.bf16.mxu0 0
    %2365 = vmatpush1.bf16.msra.mxu0 0
    %2366 = vmatprep.subr.bf16.mxu0 0
    %2367 = vmatpush1.bf16.msra.mxu0 0
    %2368 = vmatprep.subr.bf16.mxu0 0
    %2369 = vmatpush1.bf16.msra.mxu0 0
    %2370 = vmatprep.subr.bf16.mxu0 0
    %2371 = vmatpush1.bf16.msra.mxu0 0
    %2372 = vmatprep.subr.bf16.mxu0 0
    %2373 = vmatpush1.bf16.msra.mxu0 0
    %2374 = vmatprep.subr.bf16.mxu0 0
    %2375 = vmatpush1.bf16.msra.mxu0 0
    %2376 = vmatprep.mubr.bf16.mxu0 0
    %2377 = vmatmul.mubr.bf16.gmra.mrb[0].mxu0 %v2235
    %v2378 = vpop.f32.mrb[0].mxu0
    %v2379 = vadd.f32 %v2257, %v2378
    %v2380 = vpop.f32.mrb[0].mxu0
    %v2381 = vadd.f32 %v2261, %v2380
    %v2382 = vpop.f32.mrb[0].mxu0
    %v2383 = vadd.f32 %v2257, %v2382
    %v2384 = vpop.f32.mrb[0].mxu0
    %v2385 = vadd.f32 %v2261, %v2384
    %2386 = vdwg.mxu0
    %v2387 = vmul.f32 %v2379, 0.5
    %v2388 = vmul.f32 %v2381, 0.5
    %v2389 = vmul.f32 %v2383, 0.5
    %v2390 = vmul.f32 %v2385, 0.5
    %v2391 = vmul.f32 %v2379, 0.70710677
    %v2392 = vmul.f32 %v2381, 0.70710677
    %v2393 = vmul.f32 %v2383, 0.70710677
    %v2394 = vmul.f32 %v2385, 0.70710677
    %v2395 = verf.f32.pop %v2391
    %v2396 = verf.f32.pop %v2392
    %v2397 = verf.f32.pop %v2393
    %v2398 = verf.f32.pop %v2394
    %v2399 = vadd.f32 %v2395, 1.0
    %v2400 = vadd.f32 %v2396, 1.0
    %v2401 = vadd.f32 %v2397, 1.0
    %v2402 = vadd.f32 %v2398, 1.0
    %v2403 = vmul.f32 %v2387, %v2399
    %v2404 = vmul.f32 %v2388, %v2400
    %v2405 = vmul.f32 %v2389, %v2401
    %v2406 = vmul.f32 %v2390, %v2402
    %v2407 = vpack.c.bf16 %v2405, %v2403
    %v2408 = vpack.c.bf16 %v2406, %v2404
    %v2409 = vld [vmem:[%s18] sm:$0xf]
    %v2410 = vld [vmem:[%s18 + $0x4] sm:$0xf]
    %v2411 = vld [vmem:[%s18 + $0x8] sm:$0xf]
    %v2412 = vld [vmem:[%s18 + $0xc] sm:$0xf]
    %v2413 = vld [vmem:[%s18 + $0x10] sm:$0xf]
    %v2414 = vld [vmem:[%s18 + $0x14] sm:$0xf]
    %v2415 = vld [vmem:[%s18 + $0x18] sm:$0xf]
    %v2416 = vld [vmem:[%s18 + $0x1c] sm:$0xf]
    %v2417 = vld [vmem:[%s18 + $0x20] sm:$0xf]
    %v2418 = vld [vmem:[%s18 + $0x24] sm:$0xf]
    %v2419 = vld [vmem:[%s18 + $0x28] sm:$0xf]
    %v2420 = vld [vmem:[%s18 + $0x2c] sm:$0xf]
    %v2421 = vld [vmem:[%s18 + $0x30] sm:$0xf]
    %v2422 = vld [vmem:[%s18 + $0x34] sm:$0xf]
    %v2423 = vld [vmem:[%s18 + $0x38] sm:$0xf]
    %v2424 = vld [vmem:[%s18 + $0x3c] sm:$0xf]
    %v2425 = vld [vmem:[%s18 + $0x40] sm:$0xf]
    %v2426 = vld [vmem:[%s18 + $0x44] sm:$0xf]
    %v2427 = vld [vmem:[%s18 + $0x48] sm:$0xf]
    %v2428 = vld [vmem:[%s18 + $0x4c] sm:$0xf]
    %v2429 = vld [vmem:[%s18 + $0x50] sm:$0xf]
    %v2430 = vld [vmem:[%s18 + $0x54] sm:$0xf]
    %v2431 = vld [vmem:[%s18 + $0x58] sm:$0xf]
    %v2432 = vld [vmem:[%s18 + $0x5c] sm:$0xf]
    %v2433 = vld [vmem:[%s18 + $0x60] sm:$0xf]
    %v2434 = vld [vmem:[%s18 + $0x64] sm:$0xf]
    %v2435 = vld [vmem:[%s18 + $0x68] sm:$0xf]
    %v2436 = vld [vmem:[%s18 + $0x6c] sm:$0xf]
    %v2437 = vld [vmem:[%s18 + $0x70] sm:$0xf]
    %v2438 = vld [vmem:[%s18 + $0x74] sm:$0xf]
    %v2439 = vld [vmem:[%s18 + $0x78] sm:$0xf]
    %v2440 = vld [vmem:[%s18 + $0x7c] sm:$0xf]
    %v2441 = vld [vmem:[%s19] sm:$0x1]
    %v2443 = vlaneseq
    %v2444 = vshrl.u32 %v2443, 7
    %v2445 = vsub.s32 0, %v2444
    %v2446 = vrot.slane %v2441, %v2445
    %v2480 = vunpack.c.l.b16 %v2409
    %v2481 = vunpack.c.l.b16 %v2410
    %v2482 = vunpack.c.l.b16 %v2411
    %v2483 = vunpack.c.l.b16 %v2412
    %v2484 = vunpack.c.l.b16 %v2413
    %v2485 = vunpack.c.l.b16 %v2414
    %v2486 = vunpack.c.l.b16 %v2415
    %v2487 = vunpack.c.l.b16 %v2416
    %v2488 = vunpack.c.l.b16 %v2417
    %v2489 = vunpack.c.l.b16 %v2418
    %v2490 = vunpack.c.l.b16 %v2419
    %v2491 = vunpack.c.l.b16 %v2420
    %v2492 = vunpack.c.l.b16 %v2421
    %v2493 = vunpack.c.l.b16 %v2422
    %v2494 = vunpack.c.l.b16 %v2423
    %v2495 = vunpack.c.l.b16 %v2424
    %v2496 = vunpack.c.l.b16 %v2425
    %v2497 = vunpack.c.l.b16 %v2426
    %v2498 = vunpack.c.l.b16 %v2427
    %v2499 = vunpack.c.l.b16 %v2428
    %v2500 = vunpack.c.l.b16 %v2429
    %v2501 = vunpack.c.l.b16 %v2430
    %v2502 = vunpack.c.l.b16 %v2431
    %v2503 = vunpack.c.l.b16 %v2432
    %v2504 = vunpack.c.l.b16 %v2433
    %v2505 = vunpack.c.l.b16 %v2434
    %v2506 = vunpack.c.l.b16 %v2435
    %v2507 = vunpack.c.l.b16 %v2436
    %v2508 = vunpack.c.l.b16 %v2437
    %v2509 = vunpack.c.l.b16 %v2438
    %v2510 = vunpack.c.l.b16 %v2439
    %v2511 = vunpack.c.l.b16 %v2440
    %v2512 = vpack.c.b16 %v2481, %v2480
    %v2513 = vpack.c.b16 %v2483, %v2482
    %v2514 = vpack.c.b16 %v2485, %v2484
    %v2515 = vpack.c.b16 %v2487, %v2486
    %v2516 = vpack.c.b16 %v2489, %v2488
    %v2517 = vpack.c.b16 %v2491, %v2490
    %v2518 = vpack.c.b16 %v2493, %v2492
    %v2519 = vpack.c.b16 %v2495, %v2494
    %v2520 = vpack.c.b16 %v2497, %v2496
    %v2521 = vpack.c.b16 %v2499, %v2498
    %v2522 = vpack.c.b16 %v2501, %v2500
    %v2523 = vpack.c.b16 %v2503, %v2502
    %v2524 = vpack.c.b16 %v2505, %v2504
    %v2525 = vpack.c.b16 %v2507, %v2506
    %v2526 = vpack.c.b16 %v2509, %v2508
    %v2527 = vpack.c.b16 %v2511, %v2510
    %2544 = vmatprep.subr.bf16.mxu0 0
    %2545 = vmatpush1.bf16.msra.mxu0 %v2512
    %2546 = vmatprep.subr.bf16.mxu0 0
    %2547 = vmatpush1.bf16.msra.mxu0 %v2513
    %2548 = vmatprep.subr.bf16.mxu0 0
    %2549 = vmatpush1.bf16.msra.mxu0 %v2514
    %2550 = vmatprep.subr.bf16.mxu0 0
    %2551 = vmatpush1.bf16.msra.mxu0 %v2515
    %2552 = vmatprep.subr.bf16.mxu0 0
    %2553 = vmatpush1.bf16.msra.mxu0 %v2516
    %2554 = vmatprep.subr.bf16.mxu0 0
    %2555 = vmatpush1.bf16.msra.mxu0 %v2517
    %2556 = vmatprep.subr.bf16.mxu0 0
    %2557 = vmatpush1.bf16.msra.mxu0 %v2518
    %2558 = vmatprep.subr.bf16.mxu0 0
    %2559 = vmatpush1.bf16.msra.mxu0 %v2519
    %2560 = vmatprep.subr.bf16.mxu0 0
    %2561 = vmatpush1.bf16.msra.mxu0 %v2520
    %2562 = vmatprep.subr.bf16.mxu0 0
    %2563 = vmatpush1.bf16.msra.mxu0 %v2521
    %2564 = vmatprep.subr.bf16.mxu0 0
    %2565 = vmatpush1.bf16.msra.mxu0 %v2522
    %2566 = vmatprep.subr.bf16.mxu0 0
    %2567 = vmatpush1.bf16.msra.mxu0 %v2523
    %2568 = vmatprep.subr.bf16.mxu0 0
    %2569 = vmatpush1.bf16.msra.mxu0 %v2524
    %2570 = vmatprep.subr.bf16.mxu0 0
    %2571 = vmatpush1.bf16.msra.mxu0 %v2525
    %2572 = vmatprep.subr.bf16.mxu0 0
    %2573 = vmatpush1.bf16.msra.mxu0 %v2526
    %2574 = vmatprep.subr.bf16.mxu0 0
    %2575 = vmatpush1.bf16.msra.mxu0 %v2527
    %2576 = vmatprep.mubr.bf16.mxu0 %v2408
    %2577 = vmatmul.mubr.bf16.gmra.mrb[0].mxu0 %v2407
    %v2578 = vpop.f32.mrb[0].mxu0
    %v2579 = vadd.f32 %v2446, %v2578
    %v2580 = vpop.f32.mrb[0].mxu0
    %v2581 = vpop.f32.mrb[0].mxu0
    %v2582 = vadd.f32 %v2446, %v2581
    %v2583 = vpop.f32.mrb[0].mxu0
    %2584 = vdwg.mxu0
    %v2585 = vadd.f32 %v2193, %v2579
    %v2586 = vadd.f32 %v2194, %v2582
    %s2587 = scalar_lea.vmem %s9, 1
    %v2588 = vld [vmem:[%s2587] sm:$0x1]
    %s2589 = scalar_lea.vmem %s10, 1
    %v2590 = vld [vmem:[%s2589] sm:$0x1]
    %2591 = vadd.xlane.f32.xlu0 %v2585
    %v2592 = vpop.xlane.xlu0 %2591
    %2593 = vadd.xlane.f32.xlu0 %v2586
    %v2594 = vpop.xlane.xlu0 %2593
    %v2595 = vmul.f32 %v2592, %v332
    %v2596 = vmul.f32 %v2594, %v332
    %v2597 = vsub.f32 %v2585, %v2595
    %v2598 = vsub.f32 %v2586, %v2596
    %v2599 = vmul.f32 %v2597, %v2597
    %v2600 = vmul.f32 %v2598, %v2598
    %2601 = vadd.xlane.f32.xlu0 %v2599
    %v2602 = vpop.xlane.xlu0 %2601
    %2603 = vadd.xlane.f32.xlu0 %v2600
    %v2604 = vpop.xlane.xlu0 %2603
    %v2605 = vmul.f32 %v2602, %v332
    %v2606 = vmul.f32 %v2604, %v332
    %v2607 = vadd.f32 %v2605, 1e-05
    %v2608 = vadd.f32 %v2606, 1e-05
    %v2609 = vrsqrt.pop %v2607
    %v2610 = vrsqrt.pop %v2608
    %v2611 = vmul.f32 %v2597, %v2609
    %v2612 = vmul.f32 %v2598, %v2610
    %v2614 = vlaneseq
    %v2615 = vshrl.u32 %v2614, 7
    %v2616 = vsub.s32 0, %v2615
    %v2617 = vrot.slane %v2588, %v2616
    %v2619 = vmul.f32 %v2611, %v2617
    %v2620 = vmul.f32 %v2612, %v2617
    %v2622 = vlaneseq
    %v2623 = vshrl.u32 %v2622, 7
    %v2624 = vsub.s32 0, %v2623
    %v2625 = vrot.slane %v2590, %v2624
    %v2627 = vadd.f32 %v2619, %v2625
    %v2628 = vadd.f32 %v2620, %v2625
    %v2629 = vpack.c.bf16 %v2628, %v2627
    %s2630 = scalar_lea.vmem %s11, 192
    %v2631 = vld [vmem:[%s2630] sm:$0xff]
    %v2632 = vld [vmem:[%s2630 + $0x8] sm:$0xf]
    %v2633 = vld [vmem:[%s2630 + $0xc] sm:$0xff]
    %v2634 = vld [vmem:[%s2630 + $0x14] sm:$0xf]
    %v2635 = vld [vmem:[%s2630 + $0x18] sm:$0xff]
    %v2636 = vld [vmem:[%s2630 + $0x20] sm:$0xf]
    %v2637 = vld [vmem:[%s2630 + $0x24] sm:$0xff]
    %v2638 = vld [vmem:[%s2630 + $0x2c] sm:$0xf]
    %v2639 = vld [vmem:[%s2630 + $0x30] sm:$0xff]
    %v2640 = vld [vmem:[%s2630 + $0x38] sm:$0xf]
    %v2641 = vld [vmem:[%s2630 + $0x3c] sm:$0xff]
    %v2642 = vld [vmem:[%s2630 + $0x44] sm:$0xf]
    %v2643 = vld [vmem:[%s2630 + $0x48] sm:$0xff]
    %v2644 = vld [vmem:[%s2630 + $0x50] sm:$0xf]
    %v2645 = vld [vmem:[%s2630 + $0x54] sm:$0xff]
    %v2646 = vld [vmem:[%s2630 + $0x5c] sm:$0xf]
    %v2647 = vld [vmem:[%s2630 + $0x60] sm:$0xff]
    %v2648 = vld [vmem:[%s2630 + $0x68] sm:$0xf]
    %v2649 = vld [vmem:[%s2630 + $0x6c] sm:$0xff]
    %v2650 = vld [vmem:[%s2630 + $0x74] sm:$0xf]
    %v2651 = vld [vmem:[%s2630 + $0x78] sm:$0xff]
    %v2652 = vld [vmem:[%s2630 + $0x80] sm:$0xf]
    %v2653 = vld [vmem:[%s2630 + $0x84] sm:$0xff]
    %v2654 = vld [vmem:[%s2630 + $0x8c] sm:$0xf]
    %v2655 = vld [vmem:[%s2630 + $0x90] sm:$0xff]
    %v2656 = vld [vmem:[%s2630 + $0x98] sm:$0xf]
    %v2657 = vld [vmem:[%s2630 + $0x9c] sm:$0xff]
    %v2658 = vld [vmem:[%s2630 + $0xa4] sm:$0xf]
    %v2659 = vld [vmem:[%s2630 + $0xa8] sm:$0xff]
    %v2660 = vld [vmem:[%s2630 + $0xb0] sm:$0xf]
    %v2661 = vld [vmem:[%s2630 + $0xb4] sm:$0xff]
    %v2662 = vld [vmem:[%s2630 + $0xbc] sm:$0xf]
    %v2695 = vunpack.c.l.b16 %v2631
    %v2696 = vunpack.c.h.b16 %v2631
    %v2697 = vunpack.c.l.b16 %v2632
    %v2698 = vunpack.c.l.b16 %v2633
    %v2699 = vunpack.c.h.b16 %v2633
    %v2700 = vunpack.c.l.b16 %v2634
    %v2701 = vunpack.c.l.b16 %v2635
    %v2702 = vunpack.c.h.b16 %v2635
    %v2703 = vunpack.c.l.b16 %v2636
    %v2704 = vunpack.c.l.b16 %v2637
    %v2705 = vunpack.c.h.b16 %v2637
    %v2706 = vunpack.c.l.b16 %v2638
    %v2707 = vunpack.c.l.b16 %v2639
    %v2708 = vunpack.c.h.b16 %v2639
    %v2709 = vunpack.c.l.b16 %v2640
    %v2710 = vunpack.c.l.b16 %v2641
    %v2711 = vunpack.c.h.b16 %v2641
    %v2712 = vunpack.c.l.b16 %v2642
    %v2713 = vunpack.c.l.b16 %v2643
    %v2714 = vunpack.c.h.b16 %v2643
    %v2715 = vunpack.c.l.b16 %v2644
    %v2716 = vunpack.c.l.b16 %v2645
    %v2717 = vunpack.c.h.b16 %v2645
    %v2718 = vunpack.c.l.b16 %v2646
    %v2719 = vunpack.c.l.b16 %v2647
    %v2720 = vunpack.c.h.b16 %v2647
    %v2721 = vunpack.c.l.b16 %v2648
    %v2722 = vunpack.c.l.b16 %v2649
    %v2723 = vunpack.c.h.b16 %v2649
    %v2724 = vunpack.c.l.b16 %v2650
    %v2725 = vunpack.c.l.b16 %v2651
    %v2726 = vunpack.c.h.b16 %v2651
    %v2727 = vunpack.c.l.b16 %v2652
    %v2728 = vunpack.c.l.b16 %v2653
    %v2729 = vunpack.c.h.b16 %v2653
    %v2730 = vunpack.c.l.b16 %v2654
    %v2731 = vunpack.c.l.b16 %v2655
    %v2732 = vunpack.c.h.b16 %v2655
    %v2733 = vunpack.c.l.b16 %v2656
    %v2734 = vunpack.c.l.b16 %v2657
    %v2735 = vunpack.c.h.b16 %v2657
    %v2736 = vunpack.c.l.b16 %v2658
    %v2737 = vunpack.c.l.b16 %v2659
    %v2738 = vunpack.c.h.b16 %v2659
    %v2739 = vunpack.c.l.b16 %v2660
    %v2740 = vunpack.c.l.b16 %v2661
    %v2741 = vunpack.c.h.b16 %v2661
    %v2742 = vunpack.c.l.b16 %v2662
    %v2743 = vpack.c.b16 %v2698, %v2695
    %v2744 = vpack.c.b16 %v2699, %v2696
    %v2745 = vpack.c.b16 %v2700, %v2697
    %v2746 = vpack.c.b16 %v2704, %v2701
    %v2747 = vpack.c.b16 %v2705, %v2702
    %v2748 = vpack.c.b16 %v2706, %v2703
    %v2749 = vpack.c.b16 %v2710, %v2707
    %v2750 = vpack.c.b16 %v2711, %v2708
    %v2751 = vpack.c.b16 %v2712, %v2709
    %v2752 = vpack.c.b16 %v2716, %v2713
    %v2753 = vpack.c.b16 %v2717, %v2714
    %v2754 = vpack.c.b16 %v2718, %v2715
    %v2755 = vpack.c.b16 %v2722, %v2719
    %v2756 = vpack.c.b16 %v2723, %v2720
    %v2757 = vpack.c.b16 %v2724, %v2721
    %v2758 = vpack.c.b16 %v2728, %v2725
    %v2759 = vpack.c.b16 %v2729, %v2726
    %v2760 = vpack.c.b16 %v2730, %v2727
    %v2761 = vpack.c.b16 %v2734, %v2731
    %v2762 = vpack.c.b16 %v2735, %v2732
    %v2763 = vpack.c.b16 %v2736, %v2733
    %v2764 = vpack.c.b16 %v2740, %v2737
    %v2765 = vpack.c.b16 %v2741, %v2738
    %v2766 = vpack.c.b16 %v2742, %v2739
    %2791 = vmatprep.subr.bf16.mxu0 %v2744
    %2792 = vmatpush1.bf16.msra.mxu0 %v2743
    %2793 = vmatprep.subr.bf16.mxu0 %v2747
    %2794 = vmatpush1.bf16.msra.mxu0 %v2746
    %2795 = vmatprep.subr.bf16.mxu0 %v2750
    %2796 = vmatpush1.bf16.msra.mxu0 %v2749
    %2797 = vmatprep.subr.bf16.mxu0 %v2753
    %2798 = vmatpush1.bf16.msra.mxu0 %v2752
    %2799 = vmatprep.subr.bf16.mxu0 %v2756
    %2800 = vmatpush1.bf16.msra.mxu0 %v2755
    %2801 = vmatprep.subr.bf16.mxu0 %v2759
    %2802 = vmatpush1.bf16.msra.mxu0 %v2758
    %2803 = vmatprep.subr.bf16.mxu0 %v2762
    %2804 = vmatpush1.bf16.msra.mxu0 %v2761
    %2805 = vmatprep.subr.bf16.mxu0 %v2765
    %2806 = vmatpush1.bf16.msra.mxu0 %v2764
    %2807 = vmatprep.subr.bf16.mxu0 0
    %2808 = vmatpush1.bf16.msra.mxu0 0
    %2809 = vmatprep.subr.bf16.mxu0 0
    %2810 = vmatpush1.bf16.msra.mxu0 0
    %2811 = vmatprep.subr.bf16.mxu0 0
    %2812 = vmatpush1.bf16.msra.mxu0 0
    %2813 = vmatprep.subr.bf16.mxu0 0
    %2814 = vmatpush1.bf16.msra.mxu0 0
    %2815 = vmatprep.subr.bf16.mxu0 0
    %2816 = vmatpush1.bf16.msra.mxu0 0
    %2817 = vmatprep.subr.bf16.mxu0 0
    %2818 = vmatpush1.bf16.msra.mxu0 0
    %2819 = vmatprep.subr.bf16.mxu0 0
    %2820 = vmatpush1.bf16.msra.mxu0 0
    %2821 = vmatprep.subr.bf16.mxu0 0
    %2822 = vmatpush1.bf16.msra.mxu0 0
    %2823 = vmatprep.mubr.bf16.mxu0 0
    %2824 = vmatmul.mubr.bf16.gmra.mrb[0].mxu0 %v2629
    %v2825 = vpop.f32.mrb[0].mxu0
    %v2826 = vadd.f32 0.0, %v2825
    %v2827 = vpop.f32.mrb[0].mxu0
    %v2828 = vadd.f32 0.0, %v2827
    %v2829 = vpop.f32.mrb[0].mxu0
    %v2830 = vadd.f32 0.0, %v2829
    %v2831 = vpop.f32.mrb[0].mxu0
    %v2832 = vadd.f32 0.0, %v2831
    %2833 = vdwg.mxu0
    %2834 = vmatprep.subr.bf16.mxu0 0
    %2835 = vmatpush1.bf16.msra.mxu0 %v2745
    %2836 = vmatprep.subr.bf16.mxu0 0
    %2837 = vmatpush1.bf16.msra.mxu0 %v2748
    %2838 = vmatprep.subr.bf16.mxu0 0
    %2839 = vmatpush1.bf16.msra.mxu0 %v2751
    %2840 = vmatprep.subr.bf16.mxu0 0
    %2841 = vmatpush1.bf16.msra.mxu0 %v2754
    %2842 = vmatprep.subr.bf16.mxu0 0
    %2843 = vmatpush1.bf16.msra.mxu0 %v2757
    %2844 = vmatprep.subr.bf16.mxu0 0
    %2845 = vmatpush1.bf16.msra.mxu0 %v2760
    %2846 = vmatprep.subr.bf16.mxu0 0
    %2847 = vmatpush1.bf16.msra.mxu0 %v2763
    %2848 = vmatprep.subr.bf16.mxu0 0
    %2849 = vmatpush1.bf16.msra.mxu0 %v2766
    %2850 = vmatprep.subr.bf16.mxu0 0
    %2851 = vmatpush1.bf16.msra.mxu0 0
    %2852 = vmatprep.subr.bf16.mxu0 0
    %2853 = vmatpush1.bf16.msra.mxu0 0
    %2854 = vmatprep.subr.bf16.mxu0 0
    %2855 = vmatpush1.bf16.msra.mxu0 0
    %2856 = vmatprep.subr.bf16.mxu0 0
    %2857 = vmatpush1.bf16.msra.mxu0 0
    %2858 = vmatprep.subr.bf16.mxu0 0
    %2859 = vmatpush1.bf16.msra.mxu0 0
    %2860 = vmatprep.subr.bf16.mxu0 0
    %2861 = vmatpush1.bf16.msra.mxu0 0
    %2862 = vmatprep.subr.bf16.mxu0 0
    %2863 = vmatpush1.bf16.msra.mxu0 0
    %2864 = vmatprep.subr.bf16.mxu0 0
    %2865 = vmatpush1.bf16.msra.mxu0 0
    %2866 = vmatprep.mubr.bf16.mxu0 0
    %2867 = vmatmul.mubr.bf16.gmra.mrb[0].mxu0 %v2629
    %v2868 = vpop.f32.mrb[0].mxu0
    %v2869 = vadd.f32 0.0, %v2868
    %v2870 = vpop.f32.mrb[0].mxu0
    %v2871 = vpop.f32.mrb[0].mxu0
    %v2872 = vadd.f32 0.0, %v2871
    %v2873 = vpop.f32.mrb[0].mxu0
    %2874 = vdwg.mxu0
    %2877 = vrot.lane.b32.xlu0 %v2826, 64
    %v2878 = vpop.permute.xlu0 %2877
    %2879 = vrot.lane.b32.xlu0 %v2830, 64
    %v2880 = vpop.permute.xlu0 %2879
    %v2883 = vcombine.high %v2826, 0.0
    %v2885 = vunpack.c.l.s4 1983009808
    %v2886 = vunpack.c.0.s8 %v2885
    %v2887 = vlaneseq
    %v2888 = vshrl.u32 %v2887, 7
    %v2889 = vsub.s32 %v2886, %v2888
    %v2890 = vrot.slane %v2826, %v2889
    %v2892 = vunpack.c.l.s4 1983009808
    %v2893 = vunpack.c.0.s8 %v2892
    %v2894 = vlaneseq
    %v2895 = vshrl.u32 %v2894, 7
    %v2896 = vsub.s32 %v2893, %v2895
    %v2897 = vrot.slane %v2883, %v2896
    %v2898 = vcombine.high %v2878, 0.0
    %v2900 = vunpack.c.l.s4 1983009808
    %v2901 = vunpack.c.0.s8 %v2900
    %v2902 = vlaneseq
    %v2903 = vshrl.u32 %v2902, 7
    %v2904 = vsub.s32 %v2901, %v2903
    %v2905 = vrot.slane %v2878, %v2904
    %v2907 = vunpack.c.l.s4 1983009808
    %v2908 = vunpack.c.0.s8 %v2907
    %v2909 = vlaneseq
    %v2910 = vshrl.u32 %v2909, 7
    %v2911 = vsub.s32 %v2908, %v2910
    %v2912 = vrot.slane %v2898, %v2911
    %v2913 = vcombine.low %v2890, %v2905
    %v2914 = vcombine.high %v2890, %v2905
    %v2916 = vunpack.c.l.s4 1934713408
    %v2917 = vunpack.c.0.s8 %v2916
    %v2918 = vlaneseq
    %v2919 = vshrl.u32 %v2918, 7
    %v2920 = vsub.s32 %v2917, %v2919
    %v2921 = vrot.slane %v2913, %v2920
    %v2923 = vunpack.c.l.s4 1934713408
    %v2924 = vunpack.c.0.s8 %v2923
    %v2925 = vlaneseq
    %v2926 = vshrl.u32 %v2925, 7
    %v2927 = vsub.s32 %v2924, %v2926
    %v2928 = vrot.slane %v2914, %v2927
    %v2929 = vcombine.low %v2897, %v2912
    %v2930 = vcombine.high %v2897, %v2912
    %v2932 = vunpack.c.l.s4 1934713408
    %v2933 = vunpack.c.0.s8 %v2932
    %v2934 = vlaneseq
    %v2935 = vshrl.u32 %v2934, 7
    %v2936 = vsub.s32 %v2933, %v2935
    %v2937 = vrot.slane %v2929, %v2936
    %v2939 = vunpack.c.l.s4 1934713408
    %v2940 = vunpack.c.0.s8 %v2939
    %v2941 = vlaneseq
    %v2942 = vshrl.u32 %v2941, 7
    %v2943 = vsub.s32 %v2940, %v2942
    %v2944 = vrot.slane %v2930, %v2943
    %v2945 = vcombine.high %v2921, 0.0
    %v2946 = vcombine.high %v2928, 0.0
    %v2947 = vcombine.high %v2937, 0.0
    %v2948 = vcombine.high %v2944, 0.0
    %v2949 = vcombine.high %v2830, 0.0
    %v2951 = vunpack.c.l.s4 1983009808
    %v2952 = vunpack.c.0.s8 %v2951
    %v2953 = vlaneseq
    %v2954 = vshrl.u32 %v2953, 7
    %v2955 = vsub.s32 %v2952, %v2954
    %v2956 = vrot.slane %v2830, %v2955
    %v2958 = vunpack.c.l.s4 1983009808
    %v2959 = vunpack.c.0.s8 %v2958
    %v2960 = vlaneseq
    %v2961 = vshrl.u32 %v2960, 7
    %v2962 = vsub.s32 %v2959, %v2961
    %v2963 = vrot.slane %v2949, %v2962
    %v2964 = vcombine.high %v2880, 0.0
    %v2966 = vunpack.c.l.s4 1983009808
    %v2967 = vunpack.c.0.s8 %v2966
    %v2968 = vlaneseq
    %v2969 = vshrl.u32 %v2968, 7
    %v2970 = vsub.s32 %v2967, %v2969
    %v2971 = vrot.slane %v2880, %v2970
    %v2973 = vunpack.c.l.s4 1983009808
    %v2974 = vunpack.c.0.s8 %v2973
    %v2975 = vlaneseq
    %v2976 = vshrl.u32 %v2975, 7
    %v2977 = vsub.s32 %v2974, %v2976
    %v2978 = vrot.slane %v2964, %v2977
    %v2979 = vcombine.low %v2956, %v2971
    %v2980 = vcombine.high %v2956, %v2971
    %v2982 = vunpack.c.l.s4 1934713408
    %v2983 = vunpack.c.0.s8 %v2982
    %v2984 = vlaneseq
    %v2985 = vshrl.u32 %v2984, 7
    %v2986 = vsub.s32 %v2983, %v2985
    %v2987 = vrot.slane %v2979, %v2986
    %v2989 = vunpack.c.l.s4 1934713408
    %v2990 = vunpack.c.0.s8 %v2989
    %v2991 = vlaneseq
    %v2992 = vshrl.u32 %v2991, 7
    %v2993 = vsub.s32 %v2990, %v2992
    %v2994 = vrot.slane %v2980, %v2993
    %v2995 = vcombine.low %v2963, %v2978
    %v2996 = vcombine.high %v2963, %v2978
    %v2998 = vunpack.c.l.s4 1934713408
    %v2999 = vunpack.c.0.s8 %v2998
    %v3000 = vlaneseq
    %v3001 = vshrl.u32 %v3000, 7
    %v3002 = vsub.s32 %v2999, %v3001
    %v3003 = vrot.slane %v2995, %v3002
    %v3005 = vunpack.c.l.s4 1934713408
    %v3006 = vunpack.c.0.s8 %v3005
    %v3007 = vlaneseq
    %v3008 = vshrl.u32 %v3007, 7
    %v3009 = vsub.s32 %v3006, %v3008
    %v3010 = vrot.slane %v2996, %v3009
    %v3011 = vcombine.high %v2987, 0.0
    %v3012 = vcombine.high %v2994, 0.0
    %v3013 = vcombine.high %v3003, 0.0
    %v3014 = vcombine.high %v3010, 0.0
    %v3015 = vcombine.low %v2921, %v2928
    %v3017 = vunpack.c.l.s4 1983009808
    %v3018 = vunpack.c.0.s8 %v3017
    %v3019 = vlaneseq
    %v3020 = vshrl.u32 %v3019, 7
    %v3021 = vsub.s32 %v3018, %v3020
    %v3022 = vrot.slane %v3015, %v3021
    %v3023 = vcombine.low %v2945, %v2946
    %v3025 = vunpack.c.l.s4 1983009808
    %v3026 = vunpack.c.0.s8 %v3025
    %v3027 = vlaneseq
    %v3028 = vshrl.u32 %v3027, 7
    %v3029 = vsub.s32 %v3026, %v3028
    %v3030 = vrot.slane %v3023, %v3029
    %v3031 = vcombine.low %v2937, %v2944
    %v3033 = vunpack.c.l.s4 1983009808
    %v3034 = vunpack.c.0.s8 %v3033
    %v3035 = vlaneseq
    %v3036 = vshrl.u32 %v3035, 7
    %v3037 = vsub.s32 %v3034, %v3036
    %v3038 = vrot.slane %v3031, %v3037
    %v3039 = vcombine.low %v2947, %v2948
    %v3041 = vunpack.c.l.s4 1983009808
    %v3042 = vunpack.c.0.s8 %v3041
    %v3043 = vlaneseq
    %v3044 = vshrl.u32 %v3043, 7
    %v3045 = vsub.s32 %v3042, %v3044
    %v3046 = vrot.slane %v3039, %v3045
    %v3047 = vcombine.low %v3022, %v3030
    %v3049 = vunpack.c.l.s4 1934713408
    %v3050 = vunpack.c.0.s8 %v3049
    %v3051 = vlaneseq
    %v3052 = vshrl.u32 %v3051, 7
    %v3053 = vsub.s32 %v3050, %v3052
    %v3054 = vrot.slane %v3047, %v3053
    %v3055 = vcombine.low %v3038, %v3046
    %v3057 = vunpack.c.l.s4 1934713408
    %v3058 = vunpack.c.0.s8 %v3057
    %v3059 = vlaneseq
    %v3060 = vshrl.u32 %v3059, 7
    %v3061 = vsub.s32 %v3058, %v3060
    %v3062 = vrot.slane %v3055, %v3061
    %v3063 = vcombine.low %v3054, %v3062
    %v3064 = vcombine.high %v3054, %v3062
    %v3065 = vcombine.low %v2987, %v2994
    %v3067 = vunpack.c.l.s4 1983009808
    %v3068 = vunpack.c.0.s8 %v3067
    %v3069 = vlaneseq
    %v3070 = vshrl.u32 %v3069, 7
    %v3071 = vsub.s32 %v3068, %v3070
    %v3072 = vrot.slane %v3065, %v3071
    %v3073 = vcombine.low %v3011, %v3012
    %v3075 = vunpack.c.l.s4 1983009808
    %v3076 = vunpack.c.0.s8 %v3075
    %v3077 = vlaneseq
    %v3078 = vshrl.u32 %v3077, 7
    %v3079 = vsub.s32 %v3076, %v3078
    %v3080 = vrot.slane %v3073, %v3079
    %v3081 = vcombine.low %v3003, %v3010
    %v3083 = vunpack.c.l.s4 1983009808
    %v3084 = vunpack.c.0.s8 %v3083
    %v3085 = vlaneseq
    %v3086 = vshrl.u32 %v3085, 7
    %v3087 = vsub.s32 %v3084, %v3086
    %v3088 = vrot.slane %v3081, %v3087
    %v3089 = vcombine.low %v3013, %v3014
    %v3091 = vunpack.c.l.s4 1983009808
    %v3092 = vunpack.c.0.s8 %v3091
    %v3093 = vlaneseq
    %v3094 = vshrl.u32 %v3093, 7
    %v3095 = vsub.s32 %v3092, %v3094
    %v3096 = vrot.slane %v3089, %v3095
    %v3097 = vcombine.low %v3072, %v3080
    %v3099 = vunpack.c.l.s4 1934713408
    %v3100 = vunpack.c.0.s8 %v3099
    %v3101 = vlaneseq
    %v3102 = vshrl.u32 %v3101, 7
    %v3103 = vsub.s32 %v3100, %v3102
    %v3104 = vrot.slane %v3097, %v3103
    %v3105 = vcombine.low %v3088, %v3096
    %v3107 = vunpack.c.l.s4 1934713408
    %v3108 = vunpack.c.0.s8 %v3107
    %v3109 = vlaneseq
    %v3110 = vshrl.u32 %v3109, 7
    %v3111 = vsub.s32 %v3108, %v3110
    %v3112 = vrot.slane %v3105, %v3111
    %v3113 = vcombine.low %v3104, %v3112
    %v3114 = vcombine.high %v3104, %v3112
    %v3115 = vmul.f32 %v3063, 0.125
    %v3116 = vmul.f32 %v3064, 0.125
    %v3117 = vmul.f32 %v3113, 0.125
    %v3118 = vmul.f32 %v3114, 0.125
    %3121 = vrot.lane.b32.xlu0 %v2828, 64
    %v3122 = vpop.permute.xlu0 %3121
    %3123 = vrot.lane.b32.xlu0 %v2832, 64
    %v3124 = vpop.permute.xlu0 %3123
    %v3127 = vcombine.high %v2828, 0.0
    %v3129 = vunpack.c.l.s4 1983009808
    %v3130 = vunpack.c.0.s8 %v3129
    %v3131 = vlaneseq
    %v3132 = vshrl.u32 %v3131, 7
    %v3133 = vsub.s32 %v3130, %v3132
    %v3134 = vrot.slane %v2828, %v3133
    %v3136 = vunpack.c.l.s4 1983009808
    %v3137 = vunpack.c.0.s8 %v3136
    %v3138 = vlaneseq
    %v3139 = vshrl.u32 %v3138, 7
    %v3140 = vsub.s32 %v3137, %v3139
    %v3141 = vrot.slane %v3127, %v3140
    %v3142 = vcombine.high %v3122, 0.0
    %v3144 = vunpack.c.l.s4 1983009808
    %v3145 = vunpack.c.0.s8 %v3144
    %v3146 = vlaneseq
    %v3147 = vshrl.u32 %v3146, 7
    %v3148 = vsub.s32 %v3145, %v3147
    %v3149 = vrot.slane %v3122, %v3148
    %v3151 = vunpack.c.l.s4 1983009808
    %v3152 = vunpack.c.0.s8 %v3151
    %v3153 = vlaneseq
    %v3154 = vshrl.u32 %v3153, 7
    %v3155 = vsub.s32 %v3152, %v3154
    %v3156 = vrot.slane %v3142, %v3155
    %v3157 = vcombine.low %v3134, %v3149
    %v3158 = vcombine.high %v3134, %v3149
    %v3160 = vunpack.c.l.s4 1934713408
    %v3161 = vunpack.c.0.s8 %v3160
    %v3162 = vlaneseq
    %v3163 = vshrl.u32 %v3162, 7
    %v3164 = vsub.s32 %v3161, %v3163
    %v3165 = vrot.slane %v3157, %v3164
    %v3167 = vunpack.c.l.s4 1934713408
    %v3168 = vunpack.c.0.s8 %v3167
    %v3169 = vlaneseq
    %v3170 = vshrl.u32 %v3169, 7
    %v3171 = vsub.s32 %v3168, %v3170
    %v3172 = vrot.slane %v3158, %v3171
    %v3173 = vcombine.low %v3141, %v3156
    %v3174 = vcombine.high %v3141, %v3156
    %v3176 = vunpack.c.l.s4 1934713408
    %v3177 = vunpack.c.0.s8 %v3176
    %v3178 = vlaneseq
    %v3179 = vshrl.u32 %v3178, 7
    %v3180 = vsub.s32 %v3177, %v3179
    %v3181 = vrot.slane %v3173, %v3180
    %v3183 = vunpack.c.l.s4 1934713408
    %v3184 = vunpack.c.0.s8 %v3183
    %v3185 = vlaneseq
    %v3186 = vshrl.u32 %v3185, 7
    %v3187 = vsub.s32 %v3184, %v3186
    %v3188 = vrot.slane %v3174, %v3187
    %v3189 = vcombine.high %v3165, 0.0
    %v3190 = vcombine.high %v3172, 0.0
    %v3191 = vcombine.high %v3181, 0.0
    %v3192 = vcombine.high %v3188, 0.0
    %v3193 = vcombine.high %v2832, 0.0
    %v3195 = vunpack.c.l.s4 1983009808
    %v3196 = vunpack.c.0.s8 %v3195
    %v3197 = vlaneseq
    %v3198 = vshrl.u32 %v3197, 7
    %v3199 = vsub.s32 %v3196, %v3198
    %v3200 = vrot.slane %v2832, %v3199
    %v3202 = vunpack.c.l.s4 1983009808
    %v3203 = vunpack.c.0.s8 %v3202
    %v3204 = vlaneseq
    %v3205 = vshrl.u32 %v3204, 7
    %v3206 = vsub.s32 %v3203, %v3205
    %v3207 = vrot.slane %v3193, %v3206
    %v3208 = vcombine.high %v3124, 0.0
    %v3210 = vunpack.c.l.s4 1983009808
    %v3211 = vunpack.c.0.s8 %v3210
    %v3212 = vlaneseq
    %v3213 = vshrl.u32 %v3212, 7
    %v3214 = vsub.s32 %v3211, %v3213
    %v3215 = vrot.slane %v3124, %v3214
    %v3217 = vunpack.c.l.s4 1983009808
    %v3218 = vunpack.c.0.s8 %v3217
    %v3219 = vlaneseq
    %v3220 = vshrl.u32 %v3219, 7
    %v3221 = vsub.s32 %v3218, %v3220
    %v3222 = vrot.slane %v3208, %v3221
    %v3223 = vcombine.low %v3200, %v3215
    %v3224 = vcombine.high %v3200, %v3215
    %v3226 = vunpack.c.l.s4 1934713408
    %v3227 = vunpack.c.0.s8 %v3226
    %v3228 = vlaneseq
    %v3229 = vshrl.u32 %v3228, 7
    %v3230 = vsub.s32 %v3227, %v3229
    %v3231 = vrot.slane %v3223, %v3230
    %v3233 = vunpack.c.l.s4 1934713408
    %v3234 = vunpack.c.0.s8 %v3233
    %v3235 = vlaneseq
    %v3236 = vshrl.u32 %v3235, 7
    %v3237 = vsub.s32 %v3234, %v3236
    %v3238 = vrot.slane %v3224, %v3237
    %v3239 = vcombine.low %v3207, %v3222
    %v3240 = vcombine.high %v3207, %v3222
    %v3242 = vunpack.c.l.s4 1934713408
    %v3243 = vunpack.c.0.s8 %v3242
    %v3244 = vlaneseq
    %v3245 = vshrl.u32 %v3244, 7
    %v3246 = vsub.s32 %v3243, %v3245
    %v3247 = vrot.slane %v3239, %v3246
    %v3249 = vunpack.c.l.s4 1934713408
    %v3250 = vunpack.c.0.s8 %v3249
    %v3251 = vlaneseq
    %v3252 = vshrl.u32 %v3251, 7
    %v3253 = vsub.s32 %v3250, %v3252
    %v3254 = vrot.slane %v3240, %v3253
    %v3255 = vcombine.high %v3231, 0.0
    %v3256 = vcombine.high %v3238, 0.0
    %v3257 = vcombine.high %v3247, 0.0
    %v3258 = vcombine.high %v3254, 0.0
    %v3259 = vcombine.low %v3165, %v3172
    %v3261 = vunpack.c.l.s4 1983009808
    %v3262 = vunpack.c.0.s8 %v3261
    %v3263 = vlaneseq
    %v3264 = vshrl.u32 %v3263, 7
    %v3265 = vsub.s32 %v3262, %v3264
    %v3266 = vrot.slane %v3259, %v3265
    %v3267 = vcombine.low %v3189, %v3190
    %v3269 = vunpack.c.l.s4 1983009808
    %v3270 = vunpack.c.0.s8 %v3269
    %v3271 = vlaneseq
    %v3272 = vshrl.u32 %v3271, 7
    %v3273 = vsub.s32 %v3270, %v3272
    %v3274 = vrot.slane %v3267, %v3273
    %v3275 = vcombine.low %v3181, %v3188
    %v3277 = vunpack.c.l.s4 1983009808
    %v3278 = vunpack.c.0.s8 %v3277
    %v3279 = vlaneseq
    %v3280 = vshrl.u32 %v3279, 7
    %v3281 = vsub.s32 %v3278, %v3280
    %v3282 = vrot.slane %v3275, %v3281
    %v3283 = vcombine.low %v3191, %v3192
    %v3285 = vunpack.c.l.s4 1983009808
    %v3286 = vunpack.c.0.s8 %v3285
    %v3287 = vlaneseq
    %v3288 = vshrl.u32 %v3287, 7
    %v3289 = vsub.s32 %v3286, %v3288
    %v3290 = vrot.slane %v3283, %v3289
    %v3291 = vcombine.low %v3266, %v3274
    %v3293 = vunpack.c.l.s4 1934713408
    %v3294 = vunpack.c.0.s8 %v3293
    %v3295 = vlaneseq
    %v3296 = vshrl.u32 %v3295, 7
    %v3297 = vsub.s32 %v3294, %v3296
    %v3298 = vrot.slane %v3291, %v3297
    %v3299 = vcombine.low %v3282, %v3290
    %v3301 = vunpack.c.l.s4 1934713408
    %v3302 = vunpack.c.0.s8 %v3301
    %v3303 = vlaneseq
    %v3304 = vshrl.u32 %v3303, 7
    %v3305 = vsub.s32 %v3302, %v3304
    %v3306 = vrot.slane %v3299, %v3305
    %v3307 = vcombine.low %v3298, %v3306
    %v3308 = vcombine.high %v3298, %v3306
    %v3309 = vcombine.low %v3231, %v3238
    %v3311 = vunpack.c.l.s4 1983009808
    %v3312 = vunpack.c.0.s8 %v3311
    %v3313 = vlaneseq
    %v3314 = vshrl.u32 %v3313, 7
    %v3315 = vsub.s32 %v3312, %v3314
    %v3316 = vrot.slane %v3309, %v3315
    %v3317 = vcombine.low %v3255, %v3256
    %v3319 = vunpack.c.l.s4 1983009808
    %v3320 = vunpack.c.0.s8 %v3319
    %v3321 = vlaneseq
    %v3322 = vshrl.u32 %v3321, 7
    %v3323 = vsub.s32 %v3320, %v3322
    %v3324 = vrot.slane %v3317, %v3323
    %v3325 = vcombine.low %v3247, %v3254
    %v3327 = vunpack.c.l.s4 1983009808
    %v3328 = vunpack.c.0.s8 %v3327
    %v3329 = vlaneseq
    %v3330 = vshrl.u32 %v3329, 7
    %v3331 = vsub.s32 %v3328, %v3330
    %v3332 = vrot.slane %v3325, %v3331
    %v3333 = vcombine.low %v3257, %v3258
    %v3335 = vunpack.c.l.s4 1983009808
    %v3336 = vunpack.c.0.s8 %v3335
    %v3337 = vlaneseq
    %v3338 = vshrl.u32 %v3337, 7
    %v3339 = vsub.s32 %v3336, %v3338
    %v3340 = vrot.slane %v3333, %v3339
    %v3341 = vcombine.low %v3316, %v3324
    %v3343 = vunpack.c.l.s4 1934713408
    %v3344 = vunpack.c.0.s8 %v3343
    %v3345 = vlaneseq
    %v3346 = vshrl.u32 %v3345, 7
    %v3347 = vsub.s32 %v3344, %v3346
    %v3348 = vrot.slane %v3341, %v3347
    %v3349 = vcombine.low %v3332, %v3340
    %v3351 = vunpack.c.l.s4 1934713408
    %v3352 = vunpack.c.0.s8 %v3351
    %v3353 = vlaneseq
    %v3354 = vshrl.u32 %v3353, 7
    %v3355 = vsub.s32 %v3352, %v3354
    %v3356 = vrot.slane %v3349, %v3355
    %v3357 = vcombine.low %v3348, %v3356
    %v3358 = vcombine.high %v3348, %v3356
    %3361 = vrot.lane.b32.xlu0 %v2869, 64
    %v3362 = vpop.permute.xlu0 %3361
    %3363 = vrot.lane.b32.xlu0 %v2872, 64
    %v3364 = vpop.permute.xlu0 %3363
    %v3367 = vcombine.high %v2869, 0.0
    %v3369 = vunpack.c.l.s4 1983009808
    %v3370 = vunpack.c.0.s8 %v3369
    %v3371 = vlaneseq
    %v3372 = vshrl.u32 %v3371, 7
    %v3373 = vsub.s32 %v3370, %v3372
    %v3374 = vrot.slane %v2869, %v3373
    %v3376 = vunpack.c.l.s4 1983009808
    %v3377 = vunpack.c.0.s8 %v3376
    %v3378 = vlaneseq
    %v3379 = vshrl.u32 %v3378, 7
    %v3380 = vsub.s32 %v3377, %v3379
    %v3381 = vrot.slane %v3367, %v3380
    %v3382 = vcombine.high %v3362, 0.0
    %v3384 = vunpack.c.l.s4 1983009808
    %v3385 = vunpack.c.0.s8 %v3384
    %v3386 = vlaneseq
    %v3387 = vshrl.u32 %v3386, 7
    %v3388 = vsub.s32 %v3385, %v3387
    %v3389 = vrot.slane %v3362, %v3388
    %v3391 = vunpack.c.l.s4 1983009808
    %v3392 = vunpack.c.0.s8 %v3391
    %v3393 = vlaneseq
    %v3394 = vshrl.u32 %v3393, 7
    %v3395 = vsub.s32 %v3392, %v3394
    %v3396 = vrot.slane %v3382, %v3395
    %v3397 = vcombine.low %v3374, %v3389
    %v3398 = vcombine.high %v3374, %v3389
    %v3400 = vunpack.c.l.s4 1934713408
    %v3401 = vunpack.c.0.s8 %v3400
    %v3402 = vlaneseq
    %v3403 = vshrl.u32 %v3402, 7
    %v3404 = vsub.s32 %v3401, %v3403
    %v3405 = vrot.slane %v3397, %v3404
    %v3407 = vunpack.c.l.s4 1934713408
    %v3408 = vunpack.c.0.s8 %v3407
    %v3409 = vlaneseq
    %v3410 = vshrl.u32 %v3409, 7
    %v3411 = vsub.s32 %v3408, %v3410
    %v3412 = vrot.slane %v3398, %v3411
    %v3413 = vcombine.low %v3381, %v3396
    %v3414 = vcombine.high %v3381, %v3396
    %v3416 = vunpack.c.l.s4 1934713408
    %v3417 = vunpack.c.0.s8 %v3416
    %v3418 = vlaneseq
    %v3419 = vshrl.u32 %v3418, 7
    %v3420 = vsub.s32 %v3417, %v3419
    %v3421 = vrot.slane %v3413, %v3420
    %v3423 = vunpack.c.l.s4 1934713408
    %v3424 = vunpack.c.0.s8 %v3423
    %v3425 = vlaneseq
    %v3426 = vshrl.u32 %v3425, 7
    %v3427 = vsub.s32 %v3424, %v3426
    %v3428 = vrot.slane %v3414, %v3427
    %v3429 = vcombine.high %v3405, 0.0
    %v3430 = vcombine.high %v3412, 0.0
    %v3431 = vcombine.high %v3421, 0.0
    %v3432 = vcombine.high %v3428, 0.0
    %v3433 = vcombine.high %v2872, 0.0
    %v3435 = vunpack.c.l.s4 1983009808
    %v3436 = vunpack.c.0.s8 %v3435
    %v3437 = vlaneseq
    %v3438 = vshrl.u32 %v3437, 7
    %v3439 = vsub.s32 %v3436, %v3438
    %v3440 = vrot.slane %v2872, %v3439
    %v3442 = vunpack.c.l.s4 1983009808
    %v3443 = vunpack.c.0.s8 %v3442
    %v3444 = vlaneseq
    %v3445 = vshrl.u32 %v3444, 7
    %v3446 = vsub.s32 %v3443, %v3445
    %v3447 = vrot.slane %v3433, %v3446
    %v3448 = vcombine.high %v3364, 0.0
    %v3450 = vunpack.c.l.s4 1983009808
    %v3451 = vunpack.c.0.s8 %v3450
    %v3452 = vlaneseq
    %v3453 = vshrl.u32 %v3452, 7
    %v3454 = vsub.s32 %v3451, %v3453
    %v3455 = vrot.slane %v3364, %v3454
    %v3457 = vunpack.c.l.s4 1983009808
    %v3458 = vunpack.c.0.s8 %v3457
    %v3459 = vlaneseq
    %v3460 = vshrl.u32 %v3459, 7
    %v3461 = vsub.s32 %v3458, %v3460
    %v3462 = vrot.slane %v3448, %v3461
    %v3463 = vcombine.low %v3440, %v3455
    %v3464 = vcombine.high %v3440, %v3455
    %v3466 = vunpack.c.l.s4 1934713408
    %v3467 = vunpack.c.0.s8 %v3466
    %v3468 = vlaneseq
    %v3469 = vshrl.u32 %v3468, 7
    %v3470 = vsub.s32 %v3467, %v3469
    %v3471 = vrot.slane %v3463, %v3470
    %v3473 = vunpack.c.l.s4 1934713408
    %v3474 = vunpack.c.0.s8 %v3473
    %v3475 = vlaneseq
    %v3476 = vshrl.u32 %v3475, 7
    %v3477 = vsub.s32 %v3474, %v3476
    %v3478 = vrot.slane %v3464, %v3477
    %v3479 = vcombine.low %v3447, %v3462
    %v3480 = vcombine.high %v3447, %v3462
    %v3482 = vunpack.c.l.s4 1934713408
    %v3483 = vunpack.c.0.s8 %v3482
    %v3484 = vlaneseq
    %v3485 = vshrl.u32 %v3484, 7
    %v3486 = vsub.s32 %v3483, %v3485
    %v3487 = vrot.slane %v3479, %v3486
    %v3489 = vunpack.c.l.s4 1934713408
    %v3490 = vunpack.c.0.s8 %v3489
    %v3491 = vlaneseq
    %v3492 = vshrl.u32 %v3491, 7
    %v3493 = vsub.s32 %v3490, %v3492
    %v3494 = vrot.slane %v3480, %v3493
    %v3495 = vcombine.high %v3471, 0.0
    %v3496 = vcombine.high %v3478, 0.0
    %v3497 = vcombine.high %v3487, 0.0
    %v3498 = vcombine.high %v3494, 0.0
    %v3499 = vcombine.low %v3405, %v3412
    %v3501 = vunpack.c.l.s4 1983009808
    %v3502 = vunpack.c.0.s8 %v3501
    %v3503 = vlaneseq
    %v3504 = vshrl.u32 %v3503, 7
    %v3505 = vsub.s32 %v3502, %v3504
    %v3506 = vrot.slane %v3499, %v3505
    %v3507 = vcombine.low %v3429, %v3430
    %v3509 = vunpack.c.l.s4 1983009808
    %v3510 = vunpack.c.0.s8 %v3509
    %v3511 = vlaneseq
    %v3512 = vshrl.u32 %v3511, 7
    %v3513 = vsub.s32 %v3510, %v3512
    %v3514 = vrot.slane %v3507, %v3513
    %v3515 = vcombine.low %v3421, %v3428
    %v3517 = vunpack.c.l.s4 1983009808
    %v3518 = vunpack.c.0.s8 %v3517
    %v3519 = vlaneseq
    %v3520 = vshrl.u32 %v3519, 7
    %v3521 = vsub.s32 %v3518, %v3520
    %v3522 = vrot.slane %v3515, %v3521
    %v3523 = vcombine.low %v3431, %v3432
    %v3525 = vunpack.c.l.s4 1983009808
    %v3526 = vunpack.c.0.s8 %v3525
    %v3527 = vlaneseq
    %v3528 = vshrl.u32 %v3527, 7
    %v3529 = vsub.s32 %v3526, %v3528
    %v3530 = vrot.slane %v3523, %v3529
    %v3531 = vcombine.low %v3506, %v3514
    %v3533 = vunpack.c.l.s4 1934713408
    %v3534 = vunpack.c.0.s8 %v3533
    %v3535 = vlaneseq
    %v3536 = vshrl.u32 %v3535, 7
    %v3537 = vsub.s32 %v3534, %v3536
    %v3538 = vrot.slane %v3531, %v3537
    %v3539 = vcombine.low %v3522, %v3530
    %v3541 = vunpack.c.l.s4 1934713408
    %v3542 = vunpack.c.0.s8 %v3541
    %v3543 = vlaneseq
    %v3544 = vshrl.u32 %v3543, 7
    %v3545 = vsub.s32 %v3542, %v3544
    %v3546 = vrot.slane %v3539, %v3545
    %v3547 = vcombine.low %v3538, %v3546
    %v3548 = vcombine.high %v3538, %v3546
    %v3549 = vcombine.low %v3471, %v3478
    %v3551 = vunpack.c.l.s4 1983009808
    %v3552 = vunpack.c.0.s8 %v3551
    %v3553 = vlaneseq
    %v3554 = vshrl.u32 %v3553, 7
    %v3555 = vsub.s32 %v3552, %v3554
    %v3556 = vrot.slane %v3549, %v3555
    %v3557 = vcombine.low %v3495, %v3496
    %v3559 = vunpack.c.l.s4 1983009808
    %v3560 = vunpack.c.0.s8 %v3559
    %v3561 = vlaneseq
    %v3562 = vshrl.u32 %v3561, 7
    %v3563 = vsub.s32 %v3560, %v3562
    %v3564 = vrot.slane %v3557, %v3563
    %v3565 = vcombine.low %v3487, %v3494
    %v3567 = vunpack.c.l.s4 1983009808
    %v3568 = vunpack.c.0.s8 %v3567
    %v3569 = vlaneseq
    %v3570 = vshrl.u32 %v3569, 7
    %v3571 = vsub.s32 %v3568, %v3570
    %v3572 = vrot.slane %v3565, %v3571
    %v3573 = vcombine.low %v3497, %v3498
    %v3575 = vunpack.c.l.s4 1983009808
    %v3576 = vunpack.c.0.s8 %v3575
    %v3577 = vlaneseq
    %v3578 = vshrl.u32 %v3577, 7
    %v3579 = vsub.s32 %v3576, %v3578
    %v3580 = vrot.slane %v3573, %v3579
    %v3581 = vcombine.low %v3556, %v3564
    %v3583 = vunpack.c.l.s4 1934713408
    %v3584 = vunpack.c.0.s8 %v3583
    %v3585 = vlaneseq
    %v3586 = vshrl.u32 %v3585, 7
    %v3587 = vsub.s32 %v3584, %v3586
    %v3588 = vrot.slane %v3581, %v3587
    %v3589 = vcombine.low %v3572, %v3580
    %v3591 = vunpack.c.l.s4 1934713408
    %v3592 = vunpack.c.0.s8 %v3591
    %v3593 = vlaneseq
    %v3594 = vshrl.u32 %v3593, 7
    %v3595 = vsub.s32 %v3592, %v3594
    %v3596 = vrot.slane %v3589, %v3595
    %v3597 = vcombine.low %v3588, %v3596
    %v3598 = vcombine.high %v3588, %v3596
    %v3599 = vpack.c.bf16 %v3115, %v3115
    %v3600 = vpack.c.bf16 %v3116, %v3116
    %v3601 = vpack.c.bf16 %v3117, %v3117
    %v3602 = vpack.c.bf16 %v3118, %v3118
    %v3603 = vpack.c.bf16 %v3307, %v3307
    %v3604 = vpack.c.bf16 %v3308, %v3308
    %v3605 = vpack.c.bf16 %v3357, %v3357
    %v3606 = vpack.c.bf16 %v3358, %v3358
    %v3608 = vsel %vm1409, %v3599, 0
    %v3611 = vsel %vm1409, %v3603, 0
    %3613 = vmatprep.subr.bf16.mxu0 0
    %3614 = vmatpush1.bf16.xpose.msra.mxu0 %v3611
    %3615 = vmatprep.subr.bf16.mxu0 0
    %3616 = vmatpush1.bf16.xpose.msra.mxu0 0
    %3617 = vmatprep.subr.bf16.mxu0 0
    %3618 = vmatpush1.bf16.xpose.msra.mxu0 0
    %3619 = vmatprep.subr.bf16.mxu0 0
    %3620 = vmatpush1.bf16.xpose.msra.mxu0 0
    %3621 = vmatprep.subr.bf16.mxu0 0
    %3622 = vmatpush1.bf16.xpose.msra.mxu0 0
    %3623 = vmatprep.subr.bf16.mxu0 0
    %3624 = vmatpush1.bf16.xpose.msra.mxu0 0
    %3625 = vmatprep.subr.bf16.mxu0 0
    %3626 = vmatpush1.bf16.xpose.msra.mxu0 0
    %3627 = vmatprep.subr.bf16.mxu0 0
    %3628 = vmatpush1.bf16.xpose.msra.mxu0 0
    %3629 = vmatprep.subr.bf16.mxu0 0
    %3630 = vmatpush1.bf16.xpose.msra.mxu0 0
    %3631 = vmatprep.subr.bf16.mxu0 0
    %3632 = vmatpush1.bf16.xpose.msra.mxu0 0
    %3633 = vmatprep.subr.bf16.mxu0 0
    %3634 = vmatpush1.bf16.xpose.msra.mxu0 0
    %3635 = vmatprep.subr.bf16.mxu0 0
    %3636 = vmatpush1.bf16.xpose.msra.mxu0 0
    %3637 = vmatprep.subr.bf16.mxu0 0
    %3638 = vmatpush1.bf16.xpose.msra.mxu0 0
    %3639 = vmatprep.subr.bf16.mxu0 0
    %3640 = vmatpush1.bf16.xpose.msra.mxu0 0
    %3641 = vmatprep.subr.bf16.mxu0 0
    %3642 = vmatpush1.bf16.xpose.msra.mxu0 0
    %3643 = vmatprep.subr.bf16.mxu0 0
    %3644 = vmatpush1.bf16.xpose.msra.mxu0 0
    %3645 = vmatprep.mubr.bf16.mxu0 0
    %3646 = vmatmul.mubr.bf16.gmra.mrb[0].mxu0 %v3608
    %v3647 = vpop.f32.mrb[0].mxu0
    %v3648 = vadd.f32 0.0, %v3647
    %v3649 = vpop.f32.mrb[0].mxu0
    %v3650 = vpop.f32.mrb[0].mxu0
    %v3651 = vpop.f32.mrb[0].mxu0
    %3652 = vdwg.mxu0
    %v3654 = vsel %vm1409, %v3600, 0
    %v3657 = vsel %vm1409, %v3604, 0
    %3659 = vmatprep.subr.bf16.mxu0 0
    %3660 = vmatpush1.bf16.xpose.msra.mxu0 %v3657
    %3661 = vmatprep.subr.bf16.mxu0 0
    %3662 = vmatpush1.bf16.xpose.msra.mxu0 0
    %3663 = vmatprep.subr.bf16.mxu0 0
    %3664 = vmatpush1.bf16.xpose.msra.mxu0 0
    %3665 = vmatprep.subr.bf16.mxu0 0
    %3666 = vmatpush1.bf16.xpose.msra.mxu0 0
    %3667 = vmatprep.subr.bf16.mxu0 0
    %3668 = vmatpush1.bf16.xpose.msra.mxu0 0
    %3669 = vmatprep.subr.bf16.mxu0 0
    %3670 = vmatpush1.bf16.xpose.msra.mxu0 0
    %3671 = vmatprep.subr.bf16.mxu0 0
    %3672 = vmatpush1.bf16.xpose.msra.mxu0 0
    %3673 = vmatprep.subr.bf16.mxu0 0
    %3674 = vmatpush1.bf16.xpose.msra.mxu0 0
    %3675 = vmatprep.subr.bf16.mxu0 0
    %3676 = vmatpush1.bf16.xpose.msra.mxu0 0
    %3677 = vmatprep.subr.bf16.mxu0 0
    %3678 = vmatpush1.bf16.xpose.msra.mxu0 0
    %3679 = vmatprep.subr.bf16.mxu0 0
    %3680 = vmatpush1.bf16.xpose.msra.mxu0 0
    %3681 = vmatprep.subr.bf16.mxu0 0
    %3682 = vmatpush1.bf16.xpose.msra.mxu0 0
    %3683 = vmatprep.subr.bf16.mxu0 0
    %3684 = vmatpush1.bf16.xpose.msra.mxu0 0
    %3685 = vmatprep.subr.bf16.mxu0 0
    %3686 = vmatpush1.bf16.xpose.msra.mxu0 0
    %3687 = vmatprep.subr.bf16.mxu0 0
    %3688 = vmatpush1.bf16.xpose.msra.mxu0 0
    %3689 = vmatprep.subr.bf16.mxu0 0
    %3690 = vmatpush1.bf16.xpose.msra.mxu0 0
    %3691 = vmatprep.mubr.bf16.mxu0 0
    %3692 = vmatmul.mubr.bf16.gmra.mrb[0].mxu0 %v3654
    %v3693 = vpop.f32.mrb[0].mxu0
    %v3694 = vadd.f32 0.0, %v3693
    %v3695 = vpop.f32.mrb[0].mxu0
    %v3696 = vpop.f32.mrb[0].mxu0
    %v3697 = vpop.f32.mrb[0].mxu0
    %3698 = vdwg.mxu0
    %v3700 = vsel %vm1409, %v3601, 0
    %v3703 = vsel %vm1409, %v3605, 0
    %3705 = vmatprep.subr.bf16.mxu0 0
    %3706 = vmatpush1.bf16.xpose.msra.mxu0 %v3703
    %3707 = vmatprep.subr.bf16.mxu0 0
    %3708 = vmatpush1.bf16.xpose.msra.mxu0 0
    %3709 = vmatprep.subr.bf16.mxu0 0
    %3710 = vmatpush1.bf16.xpose.msra.mxu0 0
    %3711 = vmatprep.subr.bf16.mxu0 0
    %3712 = vmatpush1.bf16.xpose.msra.mxu0 0
    %3713 = vmatprep.subr.bf16.mxu0 0
    %3714 = vmatpush1.bf16.xpose.msra.mxu0 0
    %3715 = vmatprep.subr.bf16.mxu0 0
    %3716 = vmatpush1.bf16.xpose.msra.mxu0 0
    %3717 = vmatprep.subr.bf16.mxu0 0
    %3718 = vmatpush1.bf16.xpose.msra.mxu0 0
    %3719 = vmatprep.subr.bf16.mxu0 0
    %3720 = vmatpush1.bf16.xpose.msra.mxu0 0
    %3721 = vmatprep.subr.bf16.mxu0 0
    %3722 = vmatpush1.bf16.xpose.msra.mxu0 0
    %3723 = vmatprep.subr.bf16.mxu0 0
    %3724 = vmatpush1.bf16.xpose.msra.mxu0 0
    %3725 = vmatprep.subr.bf16.mxu0 0
    %3726 = vmatpush1.bf16.xpose.msra.mxu0 0
    %3727 = vmatprep.subr.bf16.mxu0 0
    %3728 = vmatpush1.bf16.xpose.msra.mxu0 0
    %3729 = vmatprep.subr.bf16.mxu0 0
    %3730 = vmatpush1.bf16.xpose.msra.mxu0 0
    %3731 = vmatprep.subr.bf16.mxu0 0
    %3732 = vmatpush1.bf16.xpose.msra.mxu0 0
    %3733 = vmatprep.subr.bf16.mxu0 0
    %3734 = vmatpush1.bf16.xpose.msra.mxu0 0
    %3735 = vmatprep.subr.bf16.mxu0 0
    %3736 = vmatpush1.bf16.xpose.msra.mxu0 0
    %3737 = vmatprep.mubr.bf16.mxu0 0
    %3738 = vmatmul.mubr.bf16.gmra.mrb[0].mxu0 %v3700
    %v3739 = vpop.f32.mrb[0].mxu0
    %v3740 = vadd.f32 0.0, %v3739
    %v3741 = vpop.f32.mrb[0].mxu0
    %v3742 = vpop.f32.mrb[0].mxu0
    %v3743 = vpop.f32.mrb[0].mxu0
    %3744 = vdwg.mxu0
    %v3746 = vsel %vm1409, %v3602, 0
    %v3749 = vsel %vm1409, %v3606, 0
    %3751 = vmatprep.subr.bf16.mxu0 0
    %3752 = vmatpush1.bf16.xpose.msra.mxu0 %v3749
    %3753 = vmatprep.subr.bf16.mxu0 0
    %3754 = vmatpush1.bf16.xpose.msra.mxu0 0
    %3755 = vmatprep.subr.bf16.mxu0 0
    %3756 = vmatpush1.bf16.xpose.msra.mxu0 0
    %3757 = vmatprep.subr.bf16.mxu0 0
    %3758 = vmatpush1.bf16.xpose.msra.mxu0 0
    %3759 = vmatprep.subr.bf16.mxu0 0
    %3760 = vmatpush1.bf16.xpose.msra.mxu0 0
    %3761 = vmatprep.subr.bf16.mxu0 0
    %3762 = vmatpush1.bf16.xpose.msra.mxu0 0
    %3763 = vmatprep.subr.bf16.mxu0 0
    %3764 = vmatpush1.bf16.xpose.msra.mxu0 0
    %3765 = vmatprep.subr.bf16.mxu0 0
    %3766 = vmatpush1.bf16.xpose.msra.mxu0 0
    %3767 = vmatprep.subr.bf16.mxu0 0
    %3768 = vmatpush1.bf16.xpose.msra.mxu0 0
    %3769 = vmatprep.subr.bf16.mxu0 0
    %3770 = vmatpush1.bf16.xpose.msra.mxu0 0
    %3771 = vmatprep.subr.bf16.mxu0 0
    %3772 = vmatpush1.bf16.xpose.msra.mxu0 0
    %3773 = vmatprep.subr.bf16.mxu0 0
    %3774 = vmatpush1.bf16.xpose.msra.mxu0 0
    %3775 = vmatprep.subr.bf16.mxu0 0
    %3776 = vmatpush1.bf16.xpose.msra.mxu0 0
    %3777 = vmatprep.subr.bf16.mxu0 0
    %3778 = vmatpush1.bf16.xpose.msra.mxu0 0
    %3779 = vmatprep.subr.bf16.mxu0 0
    %3780 = vmatpush1.bf16.xpose.msra.mxu0 0
    %3781 = vmatprep.subr.bf16.mxu0 0
    %3782 = vmatpush1.bf16.xpose.msra.mxu0 0
    %3783 = vmatprep.mubr.bf16.mxu0 0
    %3784 = vmatmul.mubr.bf16.gmra.mrb[0].mxu0 %v3746
    %v3785 = vpop.f32.mrb[0].mxu0
    %v3786 = vadd.f32 0.0, %v3785
    %v3787 = vpop.f32.mrb[0].mxu0
    %v3788 = vpop.f32.mrb[0].mxu0
    %v3789 = vpop.f32.mrb[0].mxu0
    %3790 = vdwg.mxu0
    %v3791 = vsel %vm1595, %v3648, -1e+30
    %v3792 = vsel %vm1595, %v3694, -1e+30
    %v3793 = vsel %vm1595, %v3740, -1e+30
    %v3794 = vsel %vm1595, %v3786, -1e+30
    %v3795 = vsel %vm1600, %v3791, -inf
    %3796 = vmax.xlane.f32.xlu0 %v3795
    %v3797 = vpop.xlane.xlu0 %3796
    %v3798 = vsel %vm1600, %v3792, -inf
    %3799 = vmax.xlane.f32.xlu0 %v3798
    %v3800 = vpop.xlane.xlu0 %3799
    %v3801 = vsel %vm1600, %v3793, -inf
    %3802 = vmax.xlane.f32.xlu0 %v3801
    %v3803 = vpop.xlane.xlu0 %3802
    %v3804 = vsel %vm1600, %v3794, -inf
    %3805 = vmax.xlane.f32.xlu0 %v3804
    %v3806 = vpop.xlane.xlu0 %3805
    %v3807 = vsub.f32 %v3791, %v3797
    %v3808 = vsub.f32 %v3792, %v3800
    %v3809 = vsub.f32 %v3793, %v3803
    %v3810 = vsub.f32 %v3794, %v3806
    %v3811 = vmul.f32 %v3807, 1.442695
    %v3812 = vpow.pop %v3811
    %v3813 = vmul.f32 %v3808, 1.442695
    %v3814 = vpow.pop %v3813
    %v3815 = vmul.f32 %v3809, 1.442695
    %v3816 = vpow.pop %v3815
    %v3817 = vmul.f32 %v3810, 1.442695
    %v3818 = vpow.pop %v3817
    %v3819 = vsel %vm1600, %v3812, 0.0
    %3820 = vadd.xlane.f32.xlu0 %v3819
    %v3821 = vpop.xlane.xlu0 %3820
    %v3822 = vsel %vm1600, %v3814, 0.0
    %3823 = vadd.xlane.f32.xlu0 %v3822
    %v3824 = vpop.xlane.xlu0 %3823
    %v3825 = vsel %vm1600, %v3816, 0.0
    %3826 = vadd.xlane.f32.xlu0 %v3825
    %v3827 = vpop.xlane.xlu0 %3826
    %v3828 = vsel %vm1600, %v3818, 0.0
    %3829 = vadd.xlane.f32.xlu0 %v3828
    %v3830 = vpop.xlane.xlu0 %3829
    %v3831 = vrcp.pop %v3821
    %v3832 = vrcp.pop %v3824
    %v3833 = vrcp.pop %v3827
    %v3834 = vrcp.pop %v3830
    %v3835 = vmul.f32 %v3812, %v3831
    %v3836 = vmul.f32 %v3814, %v3832
    %v3837 = vmul.f32 %v3816, %v3833
    %v3838 = vmul.f32 %v3818, %v3834
    %v3839 = vpack.c.bf16 %v3835, %v3835
    %v3840 = vpack.c.bf16 %v3836, %v3836
    %v3841 = vpack.c.bf16 %v3837, %v3837
    %v3842 = vpack.c.bf16 %v3838, %v3838
    %v3843 = vpack.c.bf16 %v3547, %v3547
    %v3844 = vpack.c.bf16 %v3548, %v3548
    %v3845 = vpack.c.bf16 %v3597, %v3597
    %v3846 = vpack.c.bf16 %v3598, %v3598
    %v3848 = vsel %vm1600, %v3839, 0
    %v3851 = vsel %vm1656, %v3843, 0
    %3853 = vmatprep.subr.bf16.mxu0 0
    %3854 = vmatpush1.bf16.msra.mxu0 %v3851
    %3855 = vmatprep.subr.bf16.mxu0 0
    %3856 = vmatpush1.bf16.msra.mxu0 0
    %3857 = vmatprep.subr.bf16.mxu0 0
    %3858 = vmatpush1.bf16.msra.mxu0 0
    %3859 = vmatprep.subr.bf16.mxu0 0
    %3860 = vmatpush1.bf16.msra.mxu0 0
    %3861 = vmatprep.subr.bf16.mxu0 0
    %3862 = vmatpush1.bf16.msra.mxu0 0
    %3863 = vmatprep.subr.bf16.mxu0 0
    %3864 = vmatpush1.bf16.msra.mxu0 0
    %3865 = vmatprep.subr.bf16.mxu0 0
    %3866 = vmatpush1.bf16.msra.mxu0 0
    %3867 = vmatprep.subr.bf16.mxu0 0
    %3868 = vmatpush1.bf16.msra.mxu0 0
    %3869 = vmatprep.subr.bf16.mxu0 0
    %3870 = vmatpush1.bf16.msra.mxu0 0
    %3871 = vmatprep.subr.bf16.mxu0 0
    %3872 = vmatpush1.bf16.msra.mxu0 0
    %3873 = vmatprep.subr.bf16.mxu0 0
    %3874 = vmatpush1.bf16.msra.mxu0 0
    %3875 = vmatprep.subr.bf16.mxu0 0
    %3876 = vmatpush1.bf16.msra.mxu0 0
    %3877 = vmatprep.subr.bf16.mxu0 0
    %3878 = vmatpush1.bf16.msra.mxu0 0
    %3879 = vmatprep.subr.bf16.mxu0 0
    %3880 = vmatpush1.bf16.msra.mxu0 0
    %3881 = vmatprep.subr.bf16.mxu0 0
    %3882 = vmatpush1.bf16.msra.mxu0 0
    %3883 = vmatprep.subr.bf16.mxu0 0
    %3884 = vmatpush1.bf16.msra.mxu0 0
    %3885 = vmatprep.mubr.bf16.mxu0 0
    %3886 = vmatmul.mubr.bf16.gmra.mrb[0].mxu0 %v3848
    %v3887 = vpop.f32.mrb[0].mxu0
    %v3888 = vadd.f32 0.0, %v3887
    %v3889 = vpop.f32.mrb[0].mxu0
    %v3890 = vpop.f32.mrb[0].mxu0
    %v3891 = vpop.f32.mrb[0].mxu0
    %3892 = vdwg.mxu0
    %v3894 = vsel %vm1600, %v3840, 0
    %v3897 = vsel %vm1656, %v3844, 0
    %3899 = vmatprep.subr.bf16.mxu0 0
    %3900 = vmatpush1.bf16.msra.mxu0 %v3897
    %3901 = vmatprep.subr.bf16.mxu0 0
    %3902 = vmatpush1.bf16.msra.mxu0 0
    %3903 = vmatprep.subr.bf16.mxu0 0
    %3904 = vmatpush1.bf16.msra.mxu0 0
    %3905 = vmatprep.subr.bf16.mxu0 0
    %3906 = vmatpush1.bf16.msra.mxu0 0
    %3907 = vmatprep.subr.bf16.mxu0 0
    %3908 = vmatpush1.bf16.msra.mxu0 0
    %3909 = vmatprep.subr.bf16.mxu0 0
    %3910 = vmatpush1.bf16.msra.mxu0 0
    %3911 = vmatprep.subr.bf16.mxu0 0
    %3912 = vmatpush1.bf16.msra.mxu0 0
    %3913 = vmatprep.subr.bf16.mxu0 0
    %3914 = vmatpush1.bf16.msra.mxu0 0
    %3915 = vmatprep.subr.bf16.mxu0 0
    %3916 = vmatpush1.bf16.msra.mxu0 0
    %3917 = vmatprep.subr.bf16.mxu0 0
    %3918 = vmatpush1.bf16.msra.mxu0 0
    %3919 = vmatprep.subr.bf16.mxu0 0
    %3920 = vmatpush1.bf16.msra.mxu0 0
    %3921 = vmatprep.subr.bf16.mxu0 0
    %3922 = vmatpush1.bf16.msra.mxu0 0
    %3923 = vmatprep.subr.bf16.mxu0 0
    %3924 = vmatpush1.bf16.msra.mxu0 0
    %3925 = vmatprep.subr.bf16.mxu0 0
    %3926 = vmatpush1.bf16.msra.mxu0 0
    %3927 = vmatprep.subr.bf16.mxu0 0
    %3928 = vmatpush1.bf16.msra.mxu0 0
    %3929 = vmatprep.subr.bf16.mxu0 0
    %3930 = vmatpush1.bf16.msra.mxu0 0
    %3931 = vmatprep.mubr.bf16.mxu0 0
    %3932 = vmatmul.mubr.bf16.gmra.mrb[0].mxu0 %v3894
    %v3933 = vpop.f32.mrb[0].mxu0
    %v3934 = vadd.f32 0.0, %v3933
    %v3935 = vpop.f32.mrb[0].mxu0
    %v3936 = vpop.f32.mrb[0].mxu0
    %v3937 = vpop.f32.mrb[0].mxu0
    %3938 = vdwg.mxu0
    %v3940 = vsel %vm1600, %v3841, 0
    %v3943 = vsel %vm1656, %v3845, 0
    %3945 = vmatprep.subr.bf16.mxu0 0
    %3946 = vmatpush1.bf16.msra.mxu0 %v3943
    %3947 = vmatprep.subr.bf16.mxu0 0
    %3948 = vmatpush1.bf16.msra.mxu0 0
    %3949 = vmatprep.subr.bf16.mxu0 0
    %3950 = vmatpush1.bf16.msra.mxu0 0
    %3951 = vmatprep.subr.bf16.mxu0 0
    %3952 = vmatpush1.bf16.msra.mxu0 0
    %3953 = vmatprep.subr.bf16.mxu0 0
    %3954 = vmatpush1.bf16.msra.mxu0 0
    %3955 = vmatprep.subr.bf16.mxu0 0
    %3956 = vmatpush1.bf16.msra.mxu0 0
    %3957 = vmatprep.subr.bf16.mxu0 0
    %3958 = vmatpush1.bf16.msra.mxu0 0
    %3959 = vmatprep.subr.bf16.mxu0 0
    %3960 = vmatpush1.bf16.msra.mxu0 0
    %3961 = vmatprep.subr.bf16.mxu0 0
    %3962 = vmatpush1.bf16.msra.mxu0 0
    %3963 = vmatprep.subr.bf16.mxu0 0
    %3964 = vmatpush1.bf16.msra.mxu0 0
    %3965 = vmatprep.subr.bf16.mxu0 0
    %3966 = vmatpush1.bf16.msra.mxu0 0
    %3967 = vmatprep.subr.bf16.mxu0 0
    %3968 = vmatpush1.bf16.msra.mxu0 0
    %3969 = vmatprep.subr.bf16.mxu0 0
    %3970 = vmatpush1.bf16.msra.mxu0 0
    %3971 = vmatprep.subr.bf16.mxu0 0
    %3972 = vmatpush1.bf16.msra.mxu0 0
    %3973 = vmatprep.subr.bf16.mxu0 0
    %3974 = vmatpush1.bf16.msra.mxu0 0
    %3975 = vmatprep.subr.bf16.mxu0 0
    %3976 = vmatpush1.bf16.msra.mxu0 0
    %3977 = vmatprep.mubr.bf16.mxu0 0
    %3978 = vmatmul.mubr.bf16.gmra.mrb[0].mxu0 %v3940
    %v3979 = vpop.f32.mrb[0].mxu0
    %v3980 = vadd.f32 0.0, %v3979
    %v3981 = vpop.f32.mrb[0].mxu0
    %v3982 = vpop.f32.mrb[0].mxu0
    %v3983 = vpop.f32.mrb[0].mxu0
    %3984 = vdwg.mxu0
    %v3986 = vsel %vm1600, %v3842, 0
    %v3989 = vsel %vm1656, %v3846, 0
    %3991 = vmatprep.subr.bf16.mxu0 0
    %3992 = vmatpush1.bf16.msra.mxu0 %v3989
    %3993 = vmatprep.subr.bf16.mxu0 0
    %3994 = vmatpush1.bf16.msra.mxu0 0
    %3995 = vmatprep.subr.bf16.mxu0 0
    %3996 = vmatpush1.bf16.msra.mxu0 0
    %3997 = vmatprep.subr.bf16.mxu0 0
    %3998 = vmatpush1.bf16.msra.mxu0 0
    %3999 = vmatprep.subr.bf16.mxu0 0
    %4000 = vmatpush1.bf16.msra.mxu0 0
    %4001 = vmatprep.subr.bf16.mxu0 0
    %4002 = vmatpush1.bf16.msra.mxu0 0
    %4003 = vmatprep.subr.bf16.mxu0 0
    %4004 = vmatpush1.bf16.msra.mxu0 0
    %4005 = vmatprep.subr.bf16.mxu0 0
    %4006 = vmatpush1.bf16.msra.mxu0 0
    %4007 = vmatprep.subr.bf16.mxu0 0
    %4008 = vmatpush1.bf16.msra.mxu0 0
    %4009 = vmatprep.subr.bf16.mxu0 0
    %4010 = vmatpush1.bf16.msra.mxu0 0
    %4011 = vmatprep.subr.bf16.mxu0 0
    %4012 = vmatpush1.bf16.msra.mxu0 0
    %4013 = vmatprep.subr.bf16.mxu0 0
    %4014 = vmatpush1.bf16.msra.mxu0 0
    %4015 = vmatprep.subr.bf16.mxu0 0
    %4016 = vmatpush1.bf16.msra.mxu0 0
    %4017 = vmatprep.subr.bf16.mxu0 0
    %4018 = vmatpush1.bf16.msra.mxu0 0
    %4019 = vmatprep.subr.bf16.mxu0 0
    %4020 = vmatpush1.bf16.msra.mxu0 0
    %4021 = vmatprep.subr.bf16.mxu0 0
    %4022 = vmatpush1.bf16.msra.mxu0 0
    %4023 = vmatprep.mubr.bf16.mxu0 0
    %4024 = vmatmul.mubr.bf16.gmra.mrb[0].mxu0 %v3986
    %v4025 = vpop.f32.mrb[0].mxu0
    %v4026 = vadd.f32 0.0, %v4025
    %v4027 = vpop.f32.mrb[0].mxu0
    %v4028 = vpop.f32.mrb[0].mxu0
    %v4029 = vpop.f32.mrb[0].mxu0
    %4030 = vdwg.mxu0
    %v4031 = vcombine.high %v3888, 0.0
    %v4033 = vunpack.c.l.s4 1983009808
    %v4034 = vunpack.c.0.s8 %v4033
    %v4035 = vlaneseq
    %v4036 = vshrl.u32 %v4035, 7
    %v4037 = vsub.s32 %v4034, %v4036
    %v4038 = vrot.slane %v3888, %v4037
    %v4040 = vunpack.c.l.s4 1983009808
    %v4041 = vunpack.c.0.s8 %v4040
    %v4042 = vlaneseq
    %v4043 = vshrl.u32 %v4042, 7
    %v4044 = vsub.s32 %v4041, %v4043
    %v4045 = vrot.slane %v4031, %v4044
    %v4046 = vcombine.high %v3934, 0.0
    %v4048 = vunpack.c.l.s4 1983009808
    %v4049 = vunpack.c.0.s8 %v4048
    %v4050 = vlaneseq
    %v4051 = vshrl.u32 %v4050, 7
    %v4052 = vsub.s32 %v4049, %v4051
    %v4053 = vrot.slane %v3934, %v4052
    %v4055 = vunpack.c.l.s4 1983009808
    %v4056 = vunpack.c.0.s8 %v4055
    %v4057 = vlaneseq
    %v4058 = vshrl.u32 %v4057, 7
    %v4059 = vsub.s32 %v4056, %v4058
    %v4060 = vrot.slane %v4046, %v4059
    %v4061 = vcombine.low %v4038, %v4053
    %v4062 = vcombine.high %v4038, %v4053
    %v4064 = vunpack.c.l.s4 1934713408
    %v4065 = vunpack.c.0.s8 %v4064
    %v4066 = vlaneseq
    %v4067 = vshrl.u32 %v4066, 7
    %v4068 = vsub.s32 %v4065, %v4067
    %v4069 = vrot.slane %v4061, %v4068
    %v4071 = vunpack.c.l.s4 1934713408
    %v4072 = vunpack.c.0.s8 %v4071
    %v4073 = vlaneseq
    %v4074 = vshrl.u32 %v4073, 7
    %v4075 = vsub.s32 %v4072, %v4074
    %v4076 = vrot.slane %v4062, %v4075
    %v4077 = vcombine.low %v4045, %v4060
    %v4078 = vcombine.high %v4045, %v4060
    %v4080 = vunpack.c.l.s4 1934713408
    %v4081 = vunpack.c.0.s8 %v4080
    %v4082 = vlaneseq
    %v4083 = vshrl.u32 %v4082, 7
    %v4084 = vsub.s32 %v4081, %v4083
    %v4085 = vrot.slane %v4077, %v4084
    %v4087 = vunpack.c.l.s4 1934713408
    %v4088 = vunpack.c.0.s8 %v4087
    %v4089 = vlaneseq
    %v4090 = vshrl.u32 %v4089, 7
    %v4091 = vsub.s32 %v4088, %v4090
    %v4092 = vrot.slane %v4078, %v4091
    %v4093 = vcombine.high %v4069, 0.0
    %v4094 = vcombine.high %v4076, 0.0
    %v4095 = vcombine.high %v4085, 0.0
    %v4096 = vcombine.high %v4092, 0.0
    %v4097 = vcombine.high %v3980, 0.0
    %v4099 = vunpack.c.l.s4 1983009808
    %v4100 = vunpack.c.0.s8 %v4099
    %v4101 = vlaneseq
    %v4102 = vshrl.u32 %v4101, 7
    %v4103 = vsub.s32 %v4100, %v4102
    %v4104 = vrot.slane %v3980, %v4103
    %v4106 = vunpack.c.l.s4 1983009808
    %v4107 = vunpack.c.0.s8 %v4106
    %v4108 = vlaneseq
    %v4109 = vshrl.u32 %v4108, 7
    %v4110 = vsub.s32 %v4107, %v4109
    %v4111 = vrot.slane %v4097, %v4110
    %v4112 = vcombine.high %v4026, 0.0
    %v4114 = vunpack.c.l.s4 1983009808
    %v4115 = vunpack.c.0.s8 %v4114
    %v4116 = vlaneseq
    %v4117 = vshrl.u32 %v4116, 7
    %v4118 = vsub.s32 %v4115, %v4117
    %v4119 = vrot.slane %v4026, %v4118
    %v4121 = vunpack.c.l.s4 1983009808
    %v4122 = vunpack.c.0.s8 %v4121
    %v4123 = vlaneseq
    %v4124 = vshrl.u32 %v4123, 7
    %v4125 = vsub.s32 %v4122, %v4124
    %v4126 = vrot.slane %v4112, %v4125
    %v4127 = vcombine.low %v4104, %v4119
    %v4128 = vcombine.high %v4104, %v4119
    %v4130 = vunpack.c.l.s4 1934713408
    %v4131 = vunpack.c.0.s8 %v4130
    %v4132 = vlaneseq
    %v4133 = vshrl.u32 %v4132, 7
    %v4134 = vsub.s32 %v4131, %v4133
    %v4135 = vrot.slane %v4127, %v4134
    %v4137 = vunpack.c.l.s4 1934713408
    %v4138 = vunpack.c.0.s8 %v4137
    %v4139 = vlaneseq
    %v4140 = vshrl.u32 %v4139, 7
    %v4141 = vsub.s32 %v4138, %v4140
    %v4142 = vrot.slane %v4128, %v4141
    %v4143 = vcombine.low %v4111, %v4126
    %v4144 = vcombine.high %v4111, %v4126
    %v4146 = vunpack.c.l.s4 1934713408
    %v4147 = vunpack.c.0.s8 %v4146
    %v4148 = vlaneseq
    %v4149 = vshrl.u32 %v4148, 7
    %v4150 = vsub.s32 %v4147, %v4149
    %v4151 = vrot.slane %v4143, %v4150
    %v4153 = vunpack.c.l.s4 1934713408
    %v4154 = vunpack.c.0.s8 %v4153
    %v4155 = vlaneseq
    %v4156 = vshrl.u32 %v4155, 7
    %v4157 = vsub.s32 %v4154, %v4156
    %v4158 = vrot.slane %v4144, %v4157
    %v4159 = vcombine.high %v4135, 0.0
    %v4160 = vcombine.high %v4142, 0.0
    %v4161 = vcombine.high %v4151, 0.0
    %v4162 = vcombine.high %v4158, 0.0
    %v4163 = vcombine.low %v4069, %v4076
    %v4165 = vunpack.c.l.s4 1983009808
    %v4166 = vunpack.c.0.s8 %v4165
    %v4167 = vlaneseq
    %v4168 = vshrl.u32 %v4167, 7
    %v4169 = vsub.s32 %v4166, %v4168
    %v4170 = vrot.slane %v4163, %v4169
    %v4171 = vcombine.low %v4093, %v4094
    %v4173 = vunpack.c.l.s4 1983009808
    %v4174 = vunpack.c.0.s8 %v4173
    %v4175 = vlaneseq
    %v4176 = vshrl.u32 %v4175, 7
    %v4177 = vsub.s32 %v4174, %v4176
    %v4178 = vrot.slane %v4171, %v4177
    %v4179 = vcombine.low %v4085, %v4092
    %v4181 = vunpack.c.l.s4 1983009808
    %v4182 = vunpack.c.0.s8 %v4181
    %v4183 = vlaneseq
    %v4184 = vshrl.u32 %v4183, 7
    %v4185 = vsub.s32 %v4182, %v4184
    %v4186 = vrot.slane %v4179, %v4185
    %v4187 = vcombine.low %v4095, %v4096
    %v4189 = vunpack.c.l.s4 1983009808
    %v4190 = vunpack.c.0.s8 %v4189
    %v4191 = vlaneseq
    %v4192 = vshrl.u32 %v4191, 7
    %v4193 = vsub.s32 %v4190, %v4192
    %v4194 = vrot.slane %v4187, %v4193
    %v4195 = vcombine.low %v4170, %v4178
    %v4197 = vunpack.c.l.s4 1934713408
    %v4198 = vunpack.c.0.s8 %v4197
    %v4199 = vlaneseq
    %v4200 = vshrl.u32 %v4199, 7
    %v4201 = vsub.s32 %v4198, %v4200
    %v4202 = vrot.slane %v4195, %v4201
    %v4203 = vcombine.low %v4186, %v4194
    %v4205 = vunpack.c.l.s4 1934713408
    %v4206 = vunpack.c.0.s8 %v4205
    %v4207 = vlaneseq
    %v4208 = vshrl.u32 %v4207, 7
    %v4209 = vsub.s32 %v4206, %v4208
    %v4210 = vrot.slane %v4203, %v4209
    %v4211 = vcombine.low %v4202, %v4210
    %v4212 = vcombine.high %v4202, %v4210
    %v4213 = vcombine.low %v4135, %v4142
    %v4215 = vunpack.c.l.s4 1983009808
    %v4216 = vunpack.c.0.s8 %v4215
    %v4217 = vlaneseq
    %v4218 = vshrl.u32 %v4217, 7
    %v4219 = vsub.s32 %v4216, %v4218
    %v4220 = vrot.slane %v4213, %v4219
    %v4221 = vcombine.low %v4159, %v4160
    %v4223 = vunpack.c.l.s4 1983009808
    %v4224 = vunpack.c.0.s8 %v4223
    %v4225 = vlaneseq
    %v4226 = vshrl.u32 %v4225, 7
    %v4227 = vsub.s32 %v4224, %v4226
    %v4228 = vrot.slane %v4221, %v4227
    %v4229 = vcombine.low %v4151, %v4158
    %v4231 = vunpack.c.l.s4 1983009808
    %v4232 = vunpack.c.0.s8 %v4231
    %v4233 = vlaneseq
    %v4234 = vshrl.u32 %v4233, 7
    %v4235 = vsub.s32 %v4232, %v4234
    %v4236 = vrot.slane %v4229, %v4235
    %v4237 = vcombine.low %v4161, %v4162
    %v4239 = vunpack.c.l.s4 1983009808
    %v4240 = vunpack.c.0.s8 %v4239
    %v4241 = vlaneseq
    %v4242 = vshrl.u32 %v4241, 7
    %v4243 = vsub.s32 %v4240, %v4242
    %v4244 = vrot.slane %v4237, %v4243
    %v4245 = vcombine.low %v4220, %v4228
    %v4247 = vunpack.c.l.s4 1934713408
    %v4248 = vunpack.c.0.s8 %v4247
    %v4249 = vlaneseq
    %v4250 = vshrl.u32 %v4249, 7
    %v4251 = vsub.s32 %v4248, %v4250
    %v4252 = vrot.slane %v4245, %v4251
    %v4253 = vcombine.low %v4236, %v4244
    %v4255 = vunpack.c.l.s4 1934713408
    %v4256 = vunpack.c.0.s8 %v4255
    %v4257 = vlaneseq
    %v4258 = vshrl.u32 %v4257, 7
    %v4259 = vsub.s32 %v4256, %v4258
    %v4260 = vrot.slane %v4253, %v4259
    %v4261 = vcombine.low %v4252, %v4260
    %v4262 = vcombine.high %v4252, %v4260
    %4265 = vrot.lane.b32.xlu0 %v4212, 64
    %v4266 = vpop.permute.xlu0 %4265
    %4267 = vrot.lane.b32.xlu0 %v4262, 64
    %v4268 = vpop.permute.xlu0 %4267
    %v4271 = vsel %vm1409, %v4211, %v4266
    %v4272 = vsel %vm1409, %v4261, %v4268
    %v4273 = vpack.c.bf16 %v4272, %v4271
    %s4274 = scalar_lea.vmem %s12, 64
    %v4275 = vld [vmem:[%s4274] sm:$0xf]
    %v4276 = vld [vmem:[%s4274 + $0x4] sm:$0xf]
    %v4277 = vld [vmem:[%s4274 + $0x8] sm:$0xf]
    %v4278 = vld [vmem:[%s4274 + $0xc] sm:$0xf]
    %v4279 = vld [vmem:[%s4274 + $0x10] sm:$0xf]
    %v4280 = vld [vmem:[%s4274 + $0x14] sm:$0xf]
    %v4281 = vld [vmem:[%s4274 + $0x18] sm:$0xf]
    %v4282 = vld [vmem:[%s4274 + $0x1c] sm:$0xf]
    %v4283 = vld [vmem:[%s4274 + $0x20] sm:$0xf]
    %v4284 = vld [vmem:[%s4274 + $0x24] sm:$0xf]
    %v4285 = vld [vmem:[%s4274 + $0x28] sm:$0xf]
    %v4286 = vld [vmem:[%s4274 + $0x2c] sm:$0xf]
    %v4287 = vld [vmem:[%s4274 + $0x30] sm:$0xf]
    %v4288 = vld [vmem:[%s4274 + $0x34] sm:$0xf]
    %v4289 = vld [vmem:[%s4274 + $0x38] sm:$0xf]
    %v4290 = vld [vmem:[%s4274 + $0x3c] sm:$0xf]
    %s4291 = scalar_lea.vmem %s13, 1
    %v4292 = vld [vmem:[%s4291] sm:$0x1]
    %v4294 = vlaneseq
    %v4295 = vshrl.u32 %v4294, 7
    %v4296 = vsub.s32 0, %v4295
    %v4297 = vrot.slane %v4292, %v4296
    %v4315 = vunpack.c.l.b16 %v4275
    %v4316 = vunpack.c.l.b16 %v4276
    %v4317 = vunpack.c.l.b16 %v4277
    %v4318 = vunpack.c.l.b16 %v4278
    %v4319 = vunpack.c.l.b16 %v4279
    %v4320 = vunpack.c.l.b16 %v4280
    %v4321 = vunpack.c.l.b16 %v4281
    %v4322 = vunpack.c.l.b16 %v4282
    %v4323 = vunpack.c.l.b16 %v4283
    %v4324 = vunpack.c.l.b16 %v4284
    %v4325 = vunpack.c.l.b16 %v4285
    %v4326 = vunpack.c.l.b16 %v4286
    %v4327 = vunpack.c.l.b16 %v4287
    %v4328 = vunpack.c.l.b16 %v4288
    %v4329 = vunpack.c.l.b16 %v4289
    %v4330 = vunpack.c.l.b16 %v4290
    %v4331 = vpack.c.b16 %v4316, %v4315
    %v4332 = vpack.c.b16 %v4318, %v4317
    %v4333 = vpack.c.b16 %v4320, %v4319
    %v4334 = vpack.c.b16 %v4322, %v4321
    %v4335 = vpack.c.b16 %v4324, %v4323
    %v4336 = vpack.c.b16 %v4326, %v4325
    %v4337 = vpack.c.b16 %v4328, %v4327
    %v4338 = vpack.c.b16 %v4330, %v4329
    %4347 = vmatprep.subr.bf16.mxu0 0
    %4348 = vmatpush1.bf16.msra.mxu0 %v4331
    %4349 = vmatprep.subr.bf16.mxu0 0
    %4350 = vmatpush1.bf16.msra.mxu0 %v4332
    %4351 = vmatprep.subr.bf16.mxu0 0
    %4352 = vmatpush1.bf16.msra.mxu0 %v4333
    %4353 = vmatprep.subr.bf16.mxu0 0
    %4354 = vmatpush1.bf16.msra.mxu0 %v4334
    %4355 = vmatprep.subr.bf16.mxu0 0
    %4356 = vmatpush1.bf16.msra.mxu0 %v4335
    %4357 = vmatprep.subr.bf16.mxu0 0
    %4358 = vmatpush1.bf16.msra.mxu0 %v4336
    %4359 = vmatprep.subr.bf16.mxu0 0
    %4360 = vmatpush1.bf16.msra.mxu0 %v4337
    %4361 = vmatprep.subr.bf16.mxu0 0
    %4362 = vmatpush1.bf16.msra.mxu0 %v4338
    %4363 = vmatprep.subr.bf16.mxu0 0
    %4364 = vmatpush1.bf16.msra.mxu0 0
    %4365 = vmatprep.subr.bf16.mxu0 0
    %4366 = vmatpush1.bf16.msra.mxu0 0
    %4367 = vmatprep.subr.bf16.mxu0 0
    %4368 = vmatpush1.bf16.msra.mxu0 0
    %4369 = vmatprep.subr.bf16.mxu0 0
    %4370 = vmatpush1.bf16.msra.mxu0 0
    %4371 = vmatprep.subr.bf16.mxu0 0
    %4372 = vmatpush1.bf16.msra.mxu0 0
    %4373 = vmatprep.subr.bf16.mxu0 0
    %4374 = vmatpush1.bf16.msra.mxu0 0
    %4375 = vmatprep.subr.bf16.mxu0 0
    %4376 = vmatpush1.bf16.msra.mxu0 0
    %4377 = vmatprep.subr.bf16.mxu0 0
    %4378 = vmatpush1.bf16.msra.mxu0 0
    %4379 = vmatprep.mubr.bf16.mxu0 0
    %4380 = vmatmul.mubr.bf16.gmra.mrb[0].mxu0 %v4273
    %v4381 = vpop.f32.mrb[0].mxu0
    %v4382 = vadd.f32 %v4297, %v4381
    %v4383 = vpop.f32.mrb[0].mxu0
    %v4384 = vpop.f32.mrb[0].mxu0
    %v4385 = vadd.f32 %v4297, %v4384
    %v4386 = vpop.f32.mrb[0].mxu0
    %4387 = vdwg.mxu0
    %v4388 = vadd.f32 %v2585, %v4382
    %v4389 = vadd.f32 %v2586, %v4385
    %s4390 = scalar_lea.vmem %s14, 1
    %v4391 = vld [vmem:[%s4390] sm:$0x1]
    %s4392 = scalar_lea.vmem %s15, 1
    %v4393 = vld [vmem:[%s4392] sm:$0x1]
    %4394 = vadd.xlane.f32.xlu0 %v4388
    %v4395 = vpop.xlane.xlu0 %4394
    %4396 = vadd.xlane.f32.xlu0 %v4389
    %v4397 = vpop.xlane.xlu0 %4396
    %v4398 = vmul.f32 %v4395, %v332
    %v4399 = vmul.f32 %v4397, %v332
    %v4400 = vsub.f32 %v4388, %v4398
    %v4401 = vsub.f32 %v4389, %v4399
    %v4402 = vmul.f32 %v4400, %v4400
    %v4403 = vmul.f32 %v4401, %v4401
    %4404 = vadd.xlane.f32.xlu0 %v4402
    %v4405 = vpop.xlane.xlu0 %4404
    %4406 = vadd.xlane.f32.xlu0 %v4403
    %v4407 = vpop.xlane.xlu0 %4406
    %v4408 = vmul.f32 %v4405, %v332
    %v4409 = vmul.f32 %v4407, %v332
    %v4410 = vadd.f32 %v4408, 1e-05
    %v4411 = vadd.f32 %v4409, 1e-05
    %v4412 = vrsqrt.pop %v4410
    %v4413 = vrsqrt.pop %v4411
    %v4414 = vmul.f32 %v4400, %v4412
    %v4415 = vmul.f32 %v4401, %v4413
    %v4417 = vlaneseq
    %v4418 = vshrl.u32 %v4417, 7
    %v4419 = vsub.s32 0, %v4418
    %v4420 = vrot.slane %v4391, %v4419
    %v4422 = vmul.f32 %v4414, %v4420
    %v4423 = vmul.f32 %v4415, %v4420
    %v4425 = vlaneseq
    %v4426 = vshrl.u32 %v4425, 7
    %v4427 = vsub.s32 0, %v4426
    %v4428 = vrot.slane %v4393, %v4427
    %v4430 = vadd.f32 %v4422, %v4428
    %v4431 = vadd.f32 %v4423, %v4428
    %v4432 = vpack.c.bf16 %v4431, %v4430
    %s4433 = scalar_lea.vmem %s16, 128
    %v4434 = vld [vmem:[%s4433] sm:$0xff]
    %v4435 = vld [vmem:[%s4433 + $0x8] sm:$0xff]
    %v4436 = vld [vmem:[%s4433 + $0x10] sm:$0xff]
    %v4437 = vld [vmem:[%s4433 + $0x18] sm:$0xff]
    %v4438 = vld [vmem:[%s4433 + $0x20] sm:$0xff]
    %v4439 = vld [vmem:[%s4433 + $0x28] sm:$0xff]
    %v4440 = vld [vmem:[%s4433 + $0x30] sm:$0xff]
    %v4441 = vld [vmem:[%s4433 + $0x38] sm:$0xff]
    %v4442 = vld [vmem:[%s4433 + $0x40] sm:$0xff]
    %v4443 = vld [vmem:[%s4433 + $0x48] sm:$0xff]
    %v4444 = vld [vmem:[%s4433 + $0x50] sm:$0xff]
    %v4445 = vld [vmem:[%s4433 + $0x58] sm:$0xff]
    %v4446 = vld [vmem:[%s4433 + $0x60] sm:$0xff]
    %v4447 = vld [vmem:[%s4433 + $0x68] sm:$0xff]
    %v4448 = vld [vmem:[%s4433 + $0x70] sm:$0xff]
    %v4449 = vld [vmem:[%s4433 + $0x78] sm:$0xff]
    %s4450 = scalar_lea.vmem %s17, 2
    %v4451 = vld [vmem:[%s4450] sm:$0x3]
    %v4453 = vlaneseq
    %v4454 = vshrl.u32 %v4453, 7
    %v4455 = vsub.s32 0, %v4454
    %v4456 = vrot.slane %v4451, %v4455
    %v4457 = vlaneseq
    %v4458 = vshrl.u32 %v4457, 7
    %v4459 = vsub.s32 1, %v4458
    %v4460 = vrot.slane %v4451, %v4459
    %v4479 = vunpack.c.l.b16 %v4434
    %v4480 = vunpack.c.h.b16 %v4434
    %v4481 = vunpack.c.l.b16 %v4435
    %v4482 = vunpack.c.h.b16 %v4435
    %v4483 = vunpack.c.l.b16 %v4436
    %v4484 = vunpack.c.h.b16 %v4436
    %v4485 = vunpack.c.l.b16 %v4437
    %v4486 = vunpack.c.h.b16 %v4437
    %v4487 = vunpack.c.l.b16 %v4438
    %v4488 = vunpack.c.h.b16 %v4438
    %v4489 = vunpack.c.l.b16 %v4439
    %v4490 = vunpack.c.h.b16 %v4439
    %v4491 = vunpack.c.l.b16 %v4440
    %v4492 = vunpack.c.h.b16 %v4440
    %v4493 = vunpack.c.l.b16 %v4441
    %v4494 = vunpack.c.h.b16 %v4441
    %v4495 = vunpack.c.l.b16 %v4442
    %v4496 = vunpack.c.h.b16 %v4442
    %v4497 = vunpack.c.l.b16 %v4443
    %v4498 = vunpack.c.h.b16 %v4443
    %v4499 = vunpack.c.l.b16 %v4444
    %v4500 = vunpack.c.h.b16 %v4444
    %v4501 = vunpack.c.l.b16 %v4445
    %v4502 = vunpack.c.h.b16 %v4445
    %v4503 = vunpack.c.l.b16 %v4446
    %v4504 = vunpack.c.h.b16 %v4446
    %v4505 = vunpack.c.l.b16 %v4447
    %v4506 = vunpack.c.h.b16 %v4447
    %v4507 = vunpack.c.l.b16 %v4448
    %v4508 = vunpack.c.h.b16 %v4448
    %v4509 = vunpack.c.l.b16 %v4449
    %v4510 = vunpack.c.h.b16 %v4449
    %v4511 = vpack.c.b16 %v4481, %v4479
    %v4512 = vpack.c.b16 %v4482, %v4480
    %v4513 = vpack.c.b16 %v4485, %v4483
    %v4514 = vpack.c.b16 %v4486, %v4484
    %v4515 = vpack.c.b16 %v4489, %v4487
    %v4516 = vpack.c.b16 %v4490, %v4488
    %v4517 = vpack.c.b16 %v4493, %v4491
    %v4518 = vpack.c.b16 %v4494, %v4492
    %v4519 = vpack.c.b16 %v4497, %v4495
    %v4520 = vpack.c.b16 %v4498, %v4496
    %v4521 = vpack.c.b16 %v4501, %v4499
    %v4522 = vpack.c.b16 %v4502, %v4500
    %v4523 = vpack.c.b16 %v4505, %v4503
    %v4524 = vpack.c.b16 %v4506, %v4504
    %v4525 = vpack.c.b16 %v4509, %v4507
    %v4526 = vpack.c.b16 %v4510, %v4508
    %4543 = vmatprep.subr.bf16.mxu0 %v4512
    %4544 = vmatpush1.bf16.msra.mxu0 %v4511
    %4545 = vmatprep.subr.bf16.mxu0 %v4514
    %4546 = vmatpush1.bf16.msra.mxu0 %v4513
    %4547 = vmatprep.subr.bf16.mxu0 %v4516
    %4548 = vmatpush1.bf16.msra.mxu0 %v4515
    %4549 = vmatprep.subr.bf16.mxu0 %v4518
    %4550 = vmatpush1.bf16.msra.mxu0 %v4517
    %4551 = vmatprep.subr.bf16.mxu0 %v4520
    %4552 = vmatpush1.bf16.msra.mxu0 %v4519
    %4553 = vmatprep.subr.bf16.mxu0 %v4522
    %4554 = vmatpush1.bf16.msra.mxu0 %v4521
    %4555 = vmatprep.subr.bf16.mxu0 %v4524
    %4556 = vmatpush1.bf16.msra.mxu0 %v4523
    %4557 = vmatprep.subr.bf16.mxu0 %v4526
    %4558 = vmatpush1.bf16.msra.mxu0 %v4525
    %4559 = vmatprep.subr.bf16.mxu0 0
    %4560 = vmatpush1.bf16.msra.mxu0 0
    %4561 = vmatprep.subr.bf16.mxu0 0
    %4562 = vmatpush1.bf16.msra.mxu0 0
    %4563 = vmatprep.subr.bf16.mxu0 0
    %4564 = vmatpush1.bf16.msra.mxu0 0
    %4565 = vmatprep.subr.bf16.mxu0 0
    %4566 = vmatpush1.bf16.msra.mxu0 0
    %4567 = vmatprep.subr.bf16.mxu0 0
    %4568 = vmatpush1.bf16.msra.mxu0 0
    %4569 = vmatprep.subr.bf16.mxu0 0
    %4570 = vmatpush1.bf16.msra.mxu0 0
    %4571 = vmatprep.subr.bf16.mxu0 0
    %4572 = vmatpush1.bf16.msra.mxu0 0
    %4573 = vmatprep.subr.bf16.mxu0 0
    %4574 = vmatpush1.bf16.msra.mxu0 0
    %4575 = vmatprep.mubr.bf16.mxu0 0
    %4576 = vmatmul.mubr.bf16.gmra.mrb[0].mxu0 %v4432
    %v4577 = vpop.f32.mrb[0].mxu0
    %v4578 = vadd.f32 %v4456, %v4577
    %v4579 = vpop.f32.mrb[0].mxu0
    %v4580 = vadd.f32 %v4460, %v4579
    %v4581 = vpop.f32.mrb[0].mxu0
    %v4582 = vadd.f32 %v4456, %v4581
    %v4583 = vpop.f32.mrb[0].mxu0
    %v4584 = vadd.f32 %v4460, %v4583
    %4585 = vdwg.mxu0
    %v4586 = vmul.f32 %v4578, 0.5
    %v4587 = vmul.f32 %v4580, 0.5
    %v4588 = vmul.f32 %v4582, 0.5
    %v4589 = vmul.f32 %v4584, 0.5
    %v4590 = vmul.f32 %v4578, 0.70710677
    %v4591 = vmul.f32 %v4580, 0.70710677
    %v4592 = vmul.f32 %v4582, 0.70710677
    %v4593 = vmul.f32 %v4584, 0.70710677
    %v4594 = verf.f32.pop %v4590
    %v4595 = verf.f32.pop %v4591
    %v4596 = verf.f32.pop %v4592
    %v4597 = verf.f32.pop %v4593
    %v4598 = vadd.f32 %v4594, 1.0
    %v4599 = vadd.f32 %v4595, 1.0
    %v4600 = vadd.f32 %v4596, 1.0
    %v4601 = vadd.f32 %v4597, 1.0
    %v4602 = vmul.f32 %v4586, %v4598
    %v4603 = vmul.f32 %v4587, %v4599
    %v4604 = vmul.f32 %v4588, %v4600
    %v4605 = vmul.f32 %v4589, %v4601
    %v4606 = vpack.c.bf16 %v4604, %v4602
    %v4607 = vpack.c.bf16 %v4605, %v4603
    %s4608 = scalar_lea.vmem %s18, 128
    %v4609 = vld [vmem:[%s4608] sm:$0xf]
    %v4610 = vld [vmem:[%s4608 + $0x4] sm:$0xf]
    %v4611 = vld [vmem:[%s4608 + $0x8] sm:$0xf]
    %v4612 = vld [vmem:[%s4608 + $0xc] sm:$0xf]
    %v4613 = vld [vmem:[%s4608 + $0x10] sm:$0xf]
    %v4614 = vld [vmem:[%s4608 + $0x14] sm:$0xf]
    %v4615 = vld [vmem:[%s4608 + $0x18] sm:$0xf]
    %v4616 = vld [vmem:[%s4608 + $0x1c] sm:$0xf]
    %v4617 = vld [vmem:[%s4608 + $0x20] sm:$0xf]
    %v4618 = vld [vmem:[%s4608 + $0x24] sm:$0xf]
    %v4619 = vld [vmem:[%s4608 + $0x28] sm:$0xf]
    %v4620 = vld [vmem:[%s4608 + $0x2c] sm:$0xf]
    %v4621 = vld [vmem:[%s4608 + $0x30] sm:$0xf]
    %v4622 = vld [vmem:[%s4608 + $0x34] sm:$0xf]
    %v4623 = vld [vmem:[%s4608 + $0x38] sm:$0xf]
    %v4624 = vld [vmem:[%s4608 + $0x3c] sm:$0xf]
    %v4625 = vld [vmem:[%s4608 + $0x40] sm:$0xf]
    %v4626 = vld [vmem:[%s4608 + $0x44] sm:$0xf]
    %v4627 = vld [vmem:[%s4608 + $0x48] sm:$0xf]
    %v4628 = vld [vmem:[%s4608 + $0x4c] sm:$0xf]
    %v4629 = vld [vmem:[%s4608 + $0x50] sm:$0xf]
    %v4630 = vld [vmem:[%s4608 + $0x54] sm:$0xf]
    %v4631 = vld [vmem:[%s4608 + $0x58] sm:$0xf]
    %v4632 = vld [vmem:[%s4608 + $0x5c] sm:$0xf]
    %v4633 = vld [vmem:[%s4608 + $0x60] sm:$0xf]
    %v4634 = vld [vmem:[%s4608 + $0x64] sm:$0xf]
    %v4635 = vld [vmem:[%s4608 + $0x68] sm:$0xf]
    %v4636 = vld [vmem:[%s4608 + $0x6c] sm:$0xf]
    %v4637 = vld [vmem:[%s4608 + $0x70] sm:$0xf]
    %v4638 = vld [vmem:[%s4608 + $0x74] sm:$0xf]
    %v4639 = vld [vmem:[%s4608 + $0x78] sm:$0xf]
    %v4640 = vld [vmem:[%s4608 + $0x7c] sm:$0xf]
    %s4641 = scalar_lea.vmem %s19, 1
    %v4642 = vld [vmem:[%s4641] sm:$0x1]
    %v4644 = vlaneseq
    %v4645 = vshrl.u32 %v4644, 7
    %v4646 = vsub.s32 0, %v4645
    %v4647 = vrot.slane %v4642, %v4646
    %v4681 = vunpack.c.l.b16 %v4609
    %v4682 = vunpack.c.l.b16 %v4610
    %v4683 = vunpack.c.l.b16 %v4611
    %v4684 = vunpack.c.l.b16 %v4612
    %v4685 = vunpack.c.l.b16 %v4613
    %v4686 = vunpack.c.l.b16 %v4614
    %v4687 = vunpack.c.l.b16 %v4615
    %v4688 = vunpack.c.l.b16 %v4616
    %v4689 = vunpack.c.l.b16 %v4617
    %v4690 = vunpack.c.l.b16 %v4618
    %v4691 = vunpack.c.l.b16 %v4619
    %v4692 = vunpack.c.l.b16 %v4620
    %v4693 = vunpack.c.l.b16 %v4621
    %v4694 = vunpack.c.l.b16 %v4622
    %v4695 = vunpack.c.l.b16 %v4623
    %v4696 = vunpack.c.l.b16 %v4624
    %v4697 = vunpack.c.l.b16 %v4625
    %v4698 = vunpack.c.l.b16 %v4626
    %v4699 = vunpack.c.l.b16 %v4627
    %v4700 = vunpack.c.l.b16 %v4628
    %v4701 = vunpack.c.l.b16 %v4629
    %v4702 = vunpack.c.l.b16 %v4630
    %v4703 = vunpack.c.l.b16 %v4631
    %v4704 = vunpack.c.l.b16 %v4632
    %v4705 = vunpack.c.l.b16 %v4633
    %v4706 = vunpack.c.l.b16 %v4634
    %v4707 = vunpack.c.l.b16 %v4635
    %v4708 = vunpack.c.l.b16 %v4636
    %v4709 = vunpack.c.l.b16 %v4637
    %v4710 = vunpack.c.l.b16 %v4638
    %v4711 = vunpack.c.l.b16 %v4639
    %v4712 = vunpack.c.l.b16 %v4640
    %v4713 = vpack.c.b16 %v4682, %v4681
    %v4714 = vpack.c.b16 %v4684, %v4683
    %v4715 = vpack.c.b16 %v4686, %v4685
    %v4716 = vpack.c.b16 %v4688, %v4687
    %v4717 = vpack.c.b16 %v4690, %v4689
    %v4718 = vpack.c.b16 %v4692, %v4691
    %v4719 = vpack.c.b16 %v4694, %v4693
    %v4720 = vpack.c.b16 %v4696, %v4695
    %v4721 = vpack.c.b16 %v4698, %v4697
    %v4722 = vpack.c.b16 %v4700, %v4699
    %v4723 = vpack.c.b16 %v4702, %v4701
    %v4724 = vpack.c.b16 %v4704, %v4703
    %v4725 = vpack.c.b16 %v4706, %v4705
    %v4726 = vpack.c.b16 %v4708, %v4707
    %v4727 = vpack.c.b16 %v4710, %v4709
    %v4728 = vpack.c.b16 %v4712, %v4711
    %4745 = vmatprep.subr.bf16.mxu0 0
    %4746 = vmatpush1.bf16.msra.mxu0 %v4713
    %4747 = vmatprep.subr.bf16.mxu0 0
    %4748 = vmatpush1.bf16.msra.mxu0 %v4714
    %4749 = vmatprep.subr.bf16.mxu0 0
    %4750 = vmatpush1.bf16.msra.mxu0 %v4715
    %4751 = vmatprep.subr.bf16.mxu0 0
    %4752 = vmatpush1.bf16.msra.mxu0 %v4716
    %4753 = vmatprep.subr.bf16.mxu0 0
    %4754 = vmatpush1.bf16.msra.mxu0 %v4717
    %4755 = vmatprep.subr.bf16.mxu0 0
    %4756 = vmatpush1.bf16.msra.mxu0 %v4718
    %4757 = vmatprep.subr.bf16.mxu0 0
    %4758 = vmatpush1.bf16.msra.mxu0 %v4719
    %4759 = vmatprep.subr.bf16.mxu0 0
    %4760 = vmatpush1.bf16.msra.mxu0 %v4720
    %4761 = vmatprep.subr.bf16.mxu0 0
    %4762 = vmatpush1.bf16.msra.mxu0 %v4721
    %4763 = vmatprep.subr.bf16.mxu0 0
    %4764 = vmatpush1.bf16.msra.mxu0 %v4722
    %4765 = vmatprep.subr.bf16.mxu0 0
    %4766 = vmatpush1.bf16.msra.mxu0 %v4723
    %4767 = vmatprep.subr.bf16.mxu0 0
    %4768 = vmatpush1.bf16.msra.mxu0 %v4724
    %4769 = vmatprep.subr.bf16.mxu0 0
    %4770 = vmatpush1.bf16.msra.mxu0 %v4725
    %4771 = vmatprep.subr.bf16.mxu0 0
    %4772 = vmatpush1.bf16.msra.mxu0 %v4726
    %4773 = vmatprep.subr.bf16.mxu0 0
    %4774 = vmatpush1.bf16.msra.mxu0 %v4727
    %4775 = vmatprep.subr.bf16.mxu0 0
    %4776 = vmatpush1.bf16.msra.mxu0 %v4728
    %4777 = vmatprep.mubr.bf16.mxu0 %v4607
    %4778 = vmatmul.mubr.bf16.gmra.mrb[0].mxu0 %v4606
    %v4779 = vpop.f32.mrb[0].mxu0
    %v4780 = vadd.f32 %v4647, %v4779
    %v4781 = vpop.f32.mrb[0].mxu0
    %v4782 = vpop.f32.mrb[0].mxu0
    %v4783 = vadd.f32 %v4647, %v4782
    %v4784 = vpop.f32.mrb[0].mxu0
    %4785 = vdwg.mxu0
    %v4786 = vadd.f32 %v4388, %v4780
    %v4787 = vadd.f32 %v4389, %v4783
    %v4788 = vld [vmem:[%s20] sm:$0x1]
    %v4789 = vld [vmem:[%s21] sm:$0x1]
    %v4792 = vrot.slane %v4787, 7
    %vm4793 = vcmask 1041409
    %v4794 = vsel %vm4793, %v4792, %v4786
    %vm4796 = vcmask 1041408
    %v4797 = vsel %vm4796, %v4794, 0.0
    %4798 = vadd.xlane.f32.xlu0 %v4797
    %v4799 = vpop.xlane.xlu0 %4798
    %v4800 = vmul.f32 %v4799, %v332
    %v4802 = vrot.slane %v4800, 1
    %v4805 = vsub.f32 %v4786, %v4800
    %v4806 = vsub.f32 %v4787, %v4802
    %v4807 = vmul.f32 %v4805, %v4805
    %v4808 = vmul.f32 %v4806, %v4806
    %v4811 = vrot.slane %v4808, 7
    %v4812 = vsel %vm4793, %v4811, %v4807
    %v4814 = vsel %vm4796, %v4812, 0.0
    %4815 = vadd.xlane.f32.xlu0 %v4814
    %v4816 = vpop.xlane.xlu0 %4815
    %v4817 = vmul.f32 %v4816, %v332
    %v4818 = vadd.f32 %v4817, 1e-05
    %v4819 = vrsqrt.pop %v4818
    %v4821 = vrot.slane %v4819, 1
    %v4824 = vmul.f32 %v4805, %v4819
    %v4825 = vmul.f32 %v4806, %v4821
    %v4827 = vlaneseq
    %v4828 = vshrl.u32 %v4827, 7
    %v4829 = vsub.s32 0, %v4828
    %v4830 = vrot.slane %v4788, %v4829
    %v4832 = vmul.f32 %v4824, %v4830
    %v4833 = vmul.f32 %v4825, %v4830
    %v4835 = vlaneseq
    %v4836 = vshrl.u32 %v4835, 7
    %v4837 = vsub.s32 0, %v4836
    %v4838 = vrot.slane %v4789, %v4837
    %v4840 = vadd.f32 %v4832, %v4838
    %v4841 = vadd.f32 %v4833, %v4838
    %v4842 = vpack.c.bf16 %v4840, %v4840
    %v4843 = vpack.c.bf16 %v4841, %v4841
    %v4844 = vld [vmem:[%s22] sm:$0xf]
    %v4845 = vld [vmem:[%s22 + $0x4] sm:$0xf]
    %v4846 = vld [vmem:[%s22 + $0x8] sm:$0xf]
    %v4847 = vld [vmem:[%s22 + $0xc] sm:$0xf]
    %v4848 = vld [vmem:[%s22 + $0x10] sm:$0xf]
    %v4849 = vld [vmem:[%s22 + $0x14] sm:$0xf]
    %v4850 = vld [vmem:[%s22 + $0x18] sm:$0xf]
    %v4851 = vld [vmem:[%s22 + $0x1c] sm:$0xf]
    %v4852 = vld [vmem:[%s22 + $0x20] sm:$0xf]
    %v4853 = vld [vmem:[%s22 + $0x24] sm:$0xf]
    %v4854 = vld [vmem:[%s22 + $0x28] sm:$0xf]
    %v4855 = vld [vmem:[%s22 + $0x2c] sm:$0xf]
    %v4856 = vld [vmem:[%s22 + $0x30] sm:$0xf]
    %v4857 = vld [vmem:[%s22 + $0x34] sm:$0xf]
    %v4858 = vld [vmem:[%s22 + $0x38] sm:$0xf]
    %v4859 = vld [vmem:[%s22 + $0x3c] sm:$0xf]
    %v4860 = vld [vmem:[%s23] sm:$0x1]
    %v4862 = vlaneseq
    %v4863 = vshrl.u32 %v4862, 7
    %v4864 = vsub.s32 0, %v4863
    %v4865 = vrot.slane %v4860, %v4864
    %v4869 = vunpack.c.l.b16 %v4842
    %v4870 = vunpack.c.l.b16 %v4843
    %v4871 = vrot.slane %v4870, 7
    %v4872 = vsel %vm4793, %v4871, %v4869
    %v4873 = vpack.c.b16 %v4872, %v4872
    %v4891 = vunpack.c.l.b16 %v4844
    %v4892 = vunpack.c.l.b16 %v4845
    %v4893 = vunpack.c.l.b16 %v4846
    %v4894 = vunpack.c.l.b16 %v4847
    %v4895 = vunpack.c.l.b16 %v4848
    %v4896 = vunpack.c.l.b16 %v4849
    %v4897 = vunpack.c.l.b16 %v4850
    %v4898 = vunpack.c.l.b16 %v4851
    %v4899 = vunpack.c.l.b16 %v4852
    %v4900 = vunpack.c.l.b16 %v4853
    %v4901 = vunpack.c.l.b16 %v4854
    %v4902 = vunpack.c.l.b16 %v4855
    %v4903 = vunpack.c.l.b16 %v4856
    %v4904 = vunpack.c.l.b16 %v4857
    %v4905 = vunpack.c.l.b16 %v4858
    %v4906 = vunpack.c.l.b16 %v4859
    %v4907 = vpack.c.b16 %v4892, %v4891
    %v4908 = vpack.c.b16 %v4894, %v4893
    %v4909 = vpack.c.b16 %v4896, %v4895
    %v4910 = vpack.c.b16 %v4898, %v4897
    %v4911 = vpack.c.b16 %v4900, %v4899
    %v4912 = vpack.c.b16 %v4902, %v4901
    %v4913 = vpack.c.b16 %v4904, %v4903
    %v4914 = vpack.c.b16 %v4906, %v4905
    %4923 = vmatprep.subr.bf16.mxu0 0
    %4924 = vmatpush1.bf16.msra.mxu0 %v4907
    %4925 = vmatprep.subr.bf16.mxu0 0
    %4926 = vmatpush1.bf16.msra.mxu0 %v4908
    %4927 = vmatprep.subr.bf16.mxu0 0
    %4928 = vmatpush1.bf16.msra.mxu0 %v4909
    %4929 = vmatprep.subr.bf16.mxu0 0
    %4930 = vmatpush1.bf16.msra.mxu0 %v4910
    %4931 = vmatprep.subr.bf16.mxu0 0
    %4932 = vmatpush1.bf16.msra.mxu0 %v4911
    %4933 = vmatprep.subr.bf16.mxu0 0
    %4934 = vmatpush1.bf16.msra.mxu0 %v4912
    %4935 = vmatprep.subr.bf16.mxu0 0
    %4936 = vmatpush1.bf16.msra.mxu0 %v4913
    %4937 = vmatprep.subr.bf16.mxu0 0
    %4938 = vmatpush1.bf16.msra.mxu0 %v4914
    %4939 = vmatprep.subr.bf16.mxu0 0
    %4940 = vmatpush1.bf16.msra.mxu0 0
    %4941 = vmatprep.subr.bf16.mxu0 0
    %4942 = vmatpush1.bf16.msra.mxu0 0
    %4943 = vmatprep.subr.bf16.mxu0 0
    %4944 = vmatpush1.bf16.msra.mxu0 0
    %4945 = vmatprep.subr.bf16.mxu0 0
    %4946 = vmatpush1.bf16.msra.mxu0 0
    %4947 = vmatprep.subr.bf16.mxu0 0
    %4948 = vmatpush1.bf16.msra.mxu0 0
    %4949 = vmatprep.subr.bf16.mxu0 0
    %4950 = vmatpush1.bf16.msra.mxu0 0
    %4951 = vmatprep.subr.bf16.mxu0 0
    %4952 = vmatpush1.bf16.msra.mxu0 0
    %4953 = vmatprep.subr.bf16.mxu0 0
    %4954 = vmatpush1.bf16.msra.mxu0 0
    %4955 = vmatprep.mubr.bf16.mxu0 0
    %4956 = vmatmul.mubr.bf16.gmra.mrb[0].mxu0 %v4873
    %v4957 = vpop.f32.mrb[0].mxu0
    %v4958 = vadd.f32 %v4865, %v4957
    %v4959 = vpop.f32.mrb[0].mxu0
    %v4960 = vpop.f32.mrb[0].mxu0
    %v4961 = vpop.f32.mrb[0].mxu0
    %4962 = vdwg.mxu0
    %v4963 = vmul.f32 %v4958, 0.5
    %v4964 = vtanh.pop %v4963
    %v4965 = vadd.f32 %v4964, 1.0
    %v4966 = vmul.f32 %v4965, 0.5
    %v4967 = vmul.f32 %v4966, 312.0
    %4968 = vst [vmem:[#allocation2] sm:$0x3] %v4967
    // Predicated region
    $region98: #{vitnet_forward.1} parent=1 // pred_check
      _
    $region99: #{vitnet_forward.1} parent=1 // pred_check_branch
      %4970 = sbr.rel (0) target = $region101
    $region100: #{vitnet_forward.1} parent=1 // pred_region
      %s4972 = ssub.s32 32, 32
      %4973 = vsyncadd [#allocation3], %s4972
      %s4975 = sshll.u32 [#allocation2], 4
      %s4976 = int_to_ptr.vmem [resolvable:$true] %s4975
      %4978 = dma.vmem_to_hbm [thread:$0]  %s4976, 32, %s24, [#allocation3]
    $region101: #{vitnet_forward.1} parent=1 // pred_fallthru
      _
    // Predicated region
    $region102: #{vitnet_forward.1} parent=1 // pred_check
      _
    $region103: #{vitnet_forward.1} parent=1 // pred_check_branch
      %4980 = sbr.rel (0) target = $region105
    $region104: #{vitnet_forward.1} parent=1 // pred_region
      %4981 = dma.done [#allocation3], 32
    $region105: #{vitnet_forward.1} parent=1 // pred_fallthru
      _
    %4982 = vsyncpa [#allocation3], 1

</llo_original>
